<compile_context>
chip_gen: v7x
topology: tpu7x:2x2x1
jax: 0.10.0
libtpu: 0.0.40
codegen_flags: <defaults>
</compile_context>

<pallas_src>
from functools import partial

import jax
import jax.numpy as jnp
from jax.experimental import pallas as pl
from jax.experimental.pallas import tpu as pltpu

LN_EPS = 1e-5          # torch.nn.LayerNorm default
_INV_SQRT2 = 0.7071067811865476


def _layernorm(x, g, b):
    mu = jnp.mean(x, axis=-1, keepdims=True)
    xc = x - mu
    var = jnp.mean(xc * xc, axis=-1, keepdims=True)
    return xc * jax.lax.rsqrt(var + LN_EPS) * g + b


def _gelu_exact(x):
    # F.gelu default (approximate='none'): exact erf gelu
    return 0.5 * x * (1.0 + jax.lax.erf(x * _INV_SQRT2))


def cross_attention_kernel(
    data_ref,
    lnkv_g_ref, lnkv_b_ref,
    wkq_ref, bkq_ref, wv_ref, bv_ref, wo_ref, bo_ref,
    ffln_g_ref, ffln_b_ref,
    w1a_ref, b1a_ref, w1b_ref, b1b_ref, w2_ref, b2_ref,
    out_ref,
    *, num_heads,
):
    BT, S, KV = data_ref.shape
    _, N, D = out_ref.shape
    H = num_heads
    hd = D // H
    HN = wkq_ref.shape[1]                               # == H * N
    bf16 = jnp.bfloat16
    f32 = jnp.float32

    # ---- PreNorm of the kv stream (f32), flattened to (BT*S, KV) ----
    xkv = data_ref[...].reshape(BT * S, KV)             # leading-dim merge (free)
    xkv = _layernorm(xkv, lnkv_g_ref[...], lnkv_b_ref[...])
    xkv_bf = xkv.astype(bf16)

    # ---- attention scores for ALL heads in one lane-dense matmul (q pre-folded) ----
    s = jnp.dot(xkv_bf, wkq_ref[...], preferred_element_type=f32) + bkq_ref[...]
    s = jnp.swapaxes(s.reshape(BT, S, HN), 1, 2)        # (BT, H*N, S): keys on lanes

    # softmax over the key axis (minor dim); normalization on the EUP
    m = jnp.max(s, axis=-1, keepdims=True)
    p = jnp.exp(s - m)
    l = jnp.sum(p, axis=-1, keepdims=True)
    p = p * pl.reciprocal(l, approx=True)               # (BT, H*N, S) f32, normalized

    # ---- V projection for ALL heads in one lane-dense matmul ----
    v = jnp.dot(xkv_bf, wv_ref[...], preferred_element_type=f32) + bv_ref[...]
    v_bf = v.reshape(BT, S, D).astype(bf16)             # (BT, S, D)

    # ---- per-head PV (inherently hd-wide) + single concatenate over heads ----
    ctx = []
    for h in range(H):                                  # tiny loop: one small matmul/iter
        p_h = p[:, h * N:(h + 1) * N, :].astype(bf16)   # (BT, N, S)  sublane-aligned slice
        v_h = v_bf[:, :, h * hd:(h + 1) * hd]           # (BT, S, hd)
        ctx.append(jnp.einsum("bns,bsd->bnd", p_h, v_h,
                              preferred_element_type=f32))
    ctx = jnp.concatenate(ctx, axis=-1)                 # (BT, N, D) head-concatenated
    ctx = ctx.reshape(BT * N, D).astype(bf16)           # leading-dim merge (free)

    # ---- output projection: one lane-dense (BT*N, D) @ (D, D) matmul ----
    attn_out = jnp.dot(ctx, wo_ref[...], preferred_element_type=f32) + bo_ref[...]

    # ---- FeedForward (LayerNorm -> Linear -> GEGLU -> Linear) + residual ----
    h0 = _layernorm(attn_out, ffln_g_ref[...], ffln_b_ref[...]).astype(bf16)
    val = jnp.dot(h0, w1a_ref[...], preferred_element_type=f32) + b1a_ref[...]
    gate = jnp.dot(h0, w1b_ref[...], preferred_element_type=f32) + b1b_ref[...]
    z = (val * _gelu_exact(gate)).astype(bf16)          # GEGLU (f32 gate math)
    ff = jnp.dot(z, w2_ref[...], preferred_element_type=f32) + b2_ref[...]

    out_ref[...] = (ff + attn_out).reshape(BT, N, D).astype(out_ref.dtype)


def cross_attention_forward(data, soft_prompt, params, num_heads,
                            block_b=None, single_buffer_weights=False):
    B, S, KV = data.shape
    N, D = soft_prompt.shape
    H = num_heads
    assert D % H == 0
    hd = D // H
    hid2 = params["w1"].shape[1]          # 2 * mult * D
    hid = hid2 // 2
    bf16 = jnp.bfloat16

    if block_b is None:
        # v5e/v6e (single TensorCore): one grid step -> biggest matmul M dims, one DMA
        # round trip, per-step overhead paid once.  On v7x (2 TCs) pass block_b = B // 4
        # so each core gets >= 2 steps and the data/out DMA overlaps compute.
        block_b = B
    assert B % block_b == 0
    BT = block_b

    # ---- hoisted, batch-invariant query path folded into the K weights (f32) ----
    xq = _layernorm(soft_prompt, params["lnq_g"], params["lnq_b"])
    q = (jnp.dot(xq, params["wq"]) + params["bq"]) * (hd ** -0.5)        # (N, D) f32
    qh = q.reshape(N, H, hd)
    wk3 = params["wk"].reshape(KV, H, hd)
    wkq = jnp.einsum("khj,nhj->khn", wk3, qh).reshape(KV, H * N).astype(bf16)
    bkq = jnp.einsum("hj,nhj->hn", params["bk"].reshape(H, hd), qh).reshape(1, H * N)

    # ---- remaining weights: bf16 MXU operands, GEGLU halves pre-split ----
    wv = params["wv"].astype(bf16)                       # (KV, D)
    wo = params["wo"].astype(bf16)                       # (D, D)
    w1a = params["w1"][:, :hid].astype(bf16)             # value half
    w1b = params["w1"][:, hid:].astype(bf16)             # gate half
    b1a = params["b1"][:, :hid]
    b1b = params["b1"][:, hid:]
    w2 = params["w2"].astype(bf16)                       # (hid, D)

    def csp(shape):
        # constant-index (weight) blocks
        if single_buffer_weights:
            # Block index never changes -> one buffer suffices; halves resident weight
            # VMEM (important on v7x's 64 MiB at production latent_dim).
            return pl.BlockSpec(shape, lambda i: (0, 0), pipeline_mode=pl.Buffered(1))
        return pl.BlockSpec(shape, lambda i: (0, 0))

    in_specs = [
        pl.BlockSpec((BT, S, KV), lambda i: (i, 0, 0)),  # data: BT batch elems / step
        csp((1, KV)), csp((1, KV)),                      # lnkv gamma / beta
        csp((KV, H * N)), csp((1, H * N)),               # folded Wk.q / bk.q
        csp((KV, D)), csp((1, D)),                       # Wv^T (all heads) / bv
        csp((D, D)), csp((1, D)),                        # Wo^T / bo
        csp((1, D)), csp((1, D)),                        # ff ln gamma / beta
        csp((D, hid)), csp((1, hid)),                    # W1 value half / b1a
        csp((D, hid)), csp((1, hid)),                    # W1 gate half / b1b
        csp((hid, D)), csp((1, D)),                      # W2^T / b2
    ]

    # advisory cost estimate for XLA scheduling around the custom call
    flops = (2 * B * S * KV * (H * N + D)                # folded scores + V projection
             + 2 * B * H * N * S * hd                    # PV
             + 2 * B * N * D * D                         # output projection
             + 2 * B * N * D * hid2                      # FF in (both GEGLU halves)
             + 2 * B * N * hid * D)                      # FF out
    transcendentals = B * S * H * N + B * N * hid + B * H * N
    bytes_accessed = (4 * (data.size + B * N * D)
                      + 2 * (wkq.size + wv.size + wo.size + w1a.size + w1b.size + w2.size)
                      + 4 * (bkq.size + params["bv"].size + params["bo"].size
                             + b1a.size + b1b.size + params["b2"].size
                             + params["lnkv_g"].size + params["lnkv_b"].size
                             + params["ffln_g"].size + params["ffln_b"].size))

    kernel = partial(cross_attention_kernel, num_heads=H)
    return pl.pallas_call(
        kernel,
        out_shape=jax.ShapeDtypeStruct((B, N, D), jnp.float32),
        grid_spec=pltpu.PrefetchScalarGridSpec(
            num_scalar_prefetch=0,
            grid=(B // BT,),
            in_specs=in_specs,
            out_specs=pl.BlockSpec((BT, N, D), lambda i: (i, 0, 0)),
        ),
        compiler_params=pltpu.CompilerParams(
            dimension_semantics=("parallel",),
            # explicit scoped-VMEM budget: safe on all generations (>= v5e's 16 MiB
            # default, <= v7x's 64 MiB physical); size against weights + 2x(data/out
            # blocks) at production shapes.
            vmem_limit_bytes=32 * 1024 * 1024,
        ),
        cost_estimate=pl.CostEstimate(flops=flops,
                                      transcendentals=transcendentals,
                                      bytes_accessed=bytes_accessed),
    )(
        data,
        params["lnkv_g"], params["lnkv_b"],
        wkq, bkq, wv, params["bv"], wo, params["bo"],
        params["ffln_g"], params["ffln_b"],
        w1a, b1a, w1b, b1b, w2, params["b2"],
    )


# ----------------------- pure-JAX reference (module-structured) -----------------------
def reference_forward(data, soft_prompt, p, num_heads):
    """Follows the PyTorch module structure (unfolded q, per-head K, exact softmax
    division) with the kernel's precision policy (bf16 matmul operands, f32 accum)."""
    bf16, f32 = jnp.bfloat16, jnp.float32
    B, S, KV = data.shape
    N, D = soft_prompt.shape
    H = num_heads
    hd = D // H

    xq = _layernorm(soft_prompt, p["lnq_g"], p["lnq_b"])
    q = (xq @ p["wq"] + p["bq"]) * (hd ** -0.5)                               # (N, D)
    qh = q.reshape(N, H, hd).transpose(1, 0, 2).astype(bf16)                  # (H, N, hd)

    xkv = _layernorm(data, p["lnkv_g"], p["lnkv_b"]).astype(bf16)             # (B, S, KV)
    wk = p["wk"].reshape(KV, H, hd).transpose(1, 0, 2).astype(bf16)
    wv = p["wv"].reshape(KV, H, hd).transpose(1, 0, 2).astype(bf16)
    bk = p["bk"].reshape(H, hd)[None, :, None, :]
    bv = p["bv"].reshape(H, hd)[None, :, None, :]
    wo = p["wo"].astype(bf16)

    k = jnp.einsum("bsk,hkd->bhsd", xkv, wk, preferred_element_type=f32) + bk
    v = jnp.einsum("bsk,hkd->bhsd", xkv, wv, preferred_element_type=f32) + bv
    s = jnp.einsum("hnd,bhsd->bhns", qh, k.astype(bf16), preferred_element_type=f32)
    m = jnp.max(s, axis=-1, keepdims=True)
    pe = jnp.exp(s - m)
    l = jnp.sum(pe, axis=-1, keepdims=True)
    o = jnp.einsum("bhns,bhsd->bhnd", pe.astype(bf16), v.astype(bf16),
                   preferred_element_type=f32) / l
    o = o.transpose(0, 2, 1, 3).reshape(B, N, D)                              # head concat
    attn_out = jnp.einsum("bnd,de->bne", o.astype(bf16), wo,
                          preferred_element_type=f32) + p["bo"]

    h0 = _layernorm(attn_out, p["ffln_g"], p["ffln_b"])
    y = jnp.einsum("bnd,dh->bnh", h0.astype(bf16), p["w1"].astype(bf16),
                   preferred_element_type=f32) + p["b1"]
    hid = y.shape[-1] // 2
    z = y[..., :hid] * _gelu_exact(y[..., hid:])
    ff = jnp.einsum("bnh,hd->bnd", z.astype(bf16), p["w2"].astype(bf16),
                    preferred_element_type=f32) + p["b2"]
    return ff + attn_out


# ----------------------- deterministic parameter construction -----------------------
def make_params(key, latent_dim, kv_dim, mult=4):
    ks = jax.random.split(key, 16)
    n = lambda k, shape, s=0.05: jax.random.normal(k, shape, jnp.float32) * s
    D, KV = latent_dim, kv_dim
    HID2 = D * mult * 2
    return {
        "lnq_g": jnp.ones((1, D), jnp.float32) + n(ks[0], (1, D), 0.01),
        "lnq_b": n(ks[1], (1, D), 0.01),
        "lnkv_g": jnp.ones((1, KV), jnp.float32) + n(ks[2], (1, KV), 0.01),
        "lnkv_b": n(ks[3], (1, KV), 0.01),
        "wq": n(ks[4], (D, D)),   "bq": n(ks[5], (1, D), 0.01),
        "wk": n(ks[6], (KV, D)),  "bk": n(ks[7], (1, D), 0.01),
        "wv": n(ks[8], (KV, D)),  "bv": n(ks[9], (1, D), 0.01),
        "wo": n(ks[10], (D, D)),  "bo": n(ks[11], (1, D), 0.01),
        "ffln_g": jnp.ones((1, D), jnp.float32),
        "ffln_b": jnp.zeros((1, D), jnp.float32),
        "w1": n(ks[12], (D, HID2)),  "b1": n(ks[13], (1, HID2), 0.01),
        "w2": n(ks[14], (HID2 // 2, D)), "b2": n(ks[15], (1, D), 0.01),
    }


if __name__ == "__main__":
    B, S_KV, KV_DIM = 8, 16, 16       # data: (batch, kv seq, kv_dim)
    N, LATENT = 8, 32                 # soft_prompt: (n, latent_dim)
    HEADS = 4

    key = jax.random.PRNGKey(0)
    k_data, k_prompt, k_params = jax.random.split(key, 3)
    data = jax.random.normal(k_data, (B, S_KV, KV_DIM), jnp.float32)
    soft_prompt = jax.random.normal(k_prompt, (N, LATENT), jnp.float32)
    params = make_params(k_params, LATENT, KV_DIM)

    out = cross_attention_forward(data, soft_prompt, params, HEADS)   # grid=(1,)
    out = jax.block_until_ready(out)

    ref = reference_forward(data, soft_prompt, params, HEADS)
    assert out.shape == (B, N, LATENT)
    # tolerance covers bf16 operand rounding, the folded-q single-rounding vs the
    # reference's unfolded double-rounding, and the approx softmax reciprocal.
    assert jnp.allclose(out, ref, rtol=2e-2, atol=5e-3), "mismatch vs JAX reference"

    print("KERNEL_OK")
</pallas_src>

<mosaic_0001>
module attributes {stable_mosaic.version = 11 : i64} {
  func.func @cross_attention_kernel(%arg0: i32, %arg1: memref<8x16x16xf32, #tpu.memory_space<vmem>>, %arg2: memref<1x16xf32, #tpu.memory_space<vmem>>, %arg3: memref<1x16xf32, #tpu.memory_space<vmem>>, %arg4: memref<16x32xbf16, #tpu.memory_space<vmem>>, %arg5: memref<1x32xf32, #tpu.memory_space<vmem>>, %arg6: memref<16x32xbf16, #tpu.memory_space<vmem>>, %arg7: memref<1x32xf32, #tpu.memory_space<vmem>>, %arg8: memref<32x32xbf16, #tpu.memory_space<vmem>>, %arg9: memref<1x32xf32, #tpu.memory_space<vmem>>, %arg10: memref<1x32xf32, #tpu.memory_space<vmem>>, %arg11: memref<1x32xf32, #tpu.memory_space<vmem>>, %arg12: memref<32x128xbf16, #tpu.memory_space<vmem>>, %arg13: memref<1x128xf32, #tpu.memory_space<vmem>>, %arg14: memref<32x128xbf16, #tpu.memory_space<vmem>>, %arg15: memref<1x128xf32, #tpu.memory_space<vmem>>, %arg16: memref<128x32xbf16, #tpu.memory_space<vmem>>, %arg17: memref<1x32xf32, #tpu.memory_space<vmem>>, %arg18: memref<8x8x32xf32, #tpu.memory_space<vmem>>) attributes {dimension_semantics = [#tpu.dimension_semantics<parallel>], iteration_bounds = array<i64: 1>, scalar_prefetch = 0 : i64, scratch_operands = 0 : i64, tpu.core_type = #tpu.core_type<tc>, window_params = [{transform_indices = @transform_0, window_bounds = array<i64: 8, 16, 16>}, {pipeline_mode = #tpu.pipeline_mode<synchronous>, transform_indices = @transform_1, window_bounds = array<i64: 1, 16>}, {pipeline_mode = #tpu.pipeline_mode<synchronous>, transform_indices = @transform_2, window_bounds = array<i64: 1, 16>}, {pipeline_mode = #tpu.pipeline_mode<synchronous>, transform_indices = @transform_3, window_bounds = array<i64: 16, 32>}, {pipeline_mode = #tpu.pipeline_mode<synchronous>, transform_indices = @transform_4, window_bounds = array<i64: 1, 32>}, {pipeline_mode = #tpu.pipeline_mode<synchronous>, transform_indices = @transform_5, window_bounds = array<i64: 16, 32>}, {pipeline_mode = #tpu.pipeline_mode<synchronous>, transform_indices = @transform_6, window_bounds = array<i64: 1, 32>}, {pipeline_mode = #tpu.pipeline_mode<synchronous>, transform_indices = @transform_7, window_bounds = array<i64: 32, 32>}, {pipeline_mode = #tpu.pipeline_mode<synchronous>, transform_indices = @transform_8, window_bounds = array<i64: 1, 32>}, {pipeline_mode = #tpu.pipeline_mode<synchronous>, transform_indices = @transform_9, window_bounds = array<i64: 1, 32>}, {pipeline_mode = #tpu.pipeline_mode<synchronous>, transform_indices = @transform_10, window_bounds = array<i64: 1, 32>}, {pipeline_mode = #tpu.pipeline_mode<synchronous>, transform_indices = @transform_11, window_bounds = array<i64: 32, 128>}, {pipeline_mode = #tpu.pipeline_mode<synchronous>, transform_indices = @transform_12, window_bounds = array<i64: 1, 128>}, {pipeline_mode = #tpu.pipeline_mode<synchronous>, transform_indices = @transform_13, window_bounds = array<i64: 32, 128>}, {pipeline_mode = #tpu.pipeline_mode<synchronous>, transform_indices = @transform_14, window_bounds = array<i64: 1, 128>}, {pipeline_mode = #tpu.pipeline_mode<synchronous>, transform_indices = @transform_15, window_bounds = array<i64: 128, 32>}, {pipeline_mode = #tpu.pipeline_mode<synchronous>, transform_indices = @transform_16, window_bounds = array<i64: 1, 32>}, {transform_indices = @transform_17, window_bounds = array<i64: 8, 8, 32>}]} {
    %c0 = arith.constant 0 : index
    %c0_0 = arith.constant 0 : index
    %c0_1 = arith.constant 0 : index
    %0 = vector.load %arg1[%c0, %c0_0, %c0_1] : memref<8x16x16xf32, #tpu.memory_space<vmem>>, vector<8x16x16xf32>
    %1 = vector.shape_cast %0 : vector<8x16x16xf32> to vector<128x16xf32>
    %c0_2 = arith.constant 0 : index
    %c0_3 = arith.constant 0 : index
    %2 = vector.load %arg2[%c0_2, %c0_3] : memref<1x16xf32, #tpu.memory_space<vmem>>, vector<1x16xf32>
    %c0_4 = arith.constant 0 : index
    %c0_5 = arith.constant 0 : index
    %3 = vector.load %arg3[%c0_4, %c0_5] : memref<1x16xf32, #tpu.memory_space<vmem>>, vector<1x16xf32>
    %cst = arith.constant dense<0.000000e+00> : vector<128xf32>
    %4 = vector.multi_reduction <add>, %1, %cst [1] : vector<128x16xf32> to vector<128xf32>
    %5 = vector.shape_cast %4 : vector<128xf32> to vector<128x1xf32>
    %cst_6 = arith.constant 1.600000e+01 : f32
    %6 = vector.broadcast %cst_6 : f32 to vector<128x1xf32>
    %7 = arith.divf %5, %6 : vector<128x1xf32>
    %8 = vector.broadcast %7 : vector<128x1xf32> to vector<128x16xf32>
    %9 = arith.subf %1, %8 : vector<128x16xf32>
    %10 = arith.mulf %9, %9 : vector<128x16xf32>
    %cst_7 = arith.constant dense<0.000000e+00> : vector<128xf32>
    %11 = vector.multi_reduction <add>, %10, %cst_7 [1] : vector<128x16xf32> to vector<128xf32>
    %12 = vector.shape_cast %11 : vector<128xf32> to vector<128x1xf32>
    %cst_8 = arith.constant 1.600000e+01 : f32
    %13 = vector.broadcast %cst_8 : f32 to vector<128x1xf32>
    %14 = arith.divf %12, %13 : vector<128x1xf32>
    %cst_9 = arith.constant 9.99999974E-6 : f32
    %15 = vector.broadcast %cst_9 : f32 to vector<128x1xf32>
    %16 = arith.addf %14, %15 : vector<128x1xf32>
    %17 = math.rsqrt %16 : vector<128x1xf32>
    %18 = vector.broadcast %17 : vector<128x1xf32> to vector<128x16xf32>
    %19 = arith.mulf %9, %18 : vector<128x16xf32>
    %20 = vector.broadcast %2 : vector<1x16xf32> to vector<128x16xf32>
    %21 = arith.mulf %19, %20 : vector<128x16xf32>
    %22 = vector.broadcast %3 : vector<1x16xf32> to vector<128x16xf32>
    %23 = arith.addf %21, %22 : vector<128x16xf32>
    %24 = arith.truncf %23 : vector<128x16xf32> to vector<128x16xbf16>
    %c0_10 = arith.constant 0 : index
    %c0_11 = arith.constant 0 : index
    %25 = vector.load %arg4[%c0_10, %c0_11] : memref<16x32xbf16, #tpu.memory_space<vmem>>, vector<16x32xbf16>
    %cst_12 = arith.constant dense<0.000000e+00> : vector<128x32xf32>
    %26 = tpu.matmul %24, %25, %cst_12 {dimension_numbers = #tpu.dot_dimension_numbers<[1], [0], [0], [1], [0, 0, 1, 1], [], []>} : vector<128x16xbf16>, vector<16x32xbf16>, vector<128x32xf32> -> vector<128x32xf32>
    %c0_13 = arith.constant 0 : index
    %c0_14 = arith.constant 0 : index
    %27 = vector.load %arg5[%c0_13, %c0_14] : memref<1x32xf32, #tpu.memory_space<vmem>>, vector<1x32xf32>
    %28 = vector.broadcast %27 : vector<1x32xf32> to vector<128x32xf32>
    %29 = arith.addf %26, %28 : vector<128x32xf32>
    %30 = vector.shape_cast %29 : vector<128x32xf32> to vector<8x16x32xf32>
    %31 = tpu.transpose %30, [0, 2, 1] : vector<8x16x32xf32> -> vector<8x32x16xf32>
    %cst_15 = arith.constant dense<0xFF800000> : vector<8x32xf32>
    %32 = vector.multi_reduction <maximumf>, %31, %cst_15 [2] : vector<8x32x16xf32> to vector<8x32xf32>
    %33 = vector.shape_cast %32 : vector<8x32xf32> to vector<8x32x1xf32>
    %34 = vector.broadcast %33 : vector<8x32x1xf32> to vector<8x32x16xf32>
    %35 = arith.subf %31, %34 : vector<8x32x16xf32>
    %36 = math.exp %35 : vector<8x32x16xf32>
    %cst_16 = arith.constant dense<0.000000e+00> : vector<8x32xf32>
    %37 = vector.multi_reduction <add>, %36, %cst_16 [2] : vector<8x32x16xf32> to vector<8x32xf32>
    %38 = vector.shape_cast %37 : vector<8x32xf32> to vector<8x32x1xf32>
    %39 = tpu.reciprocal %38 {approx = true} : vector<8x32x1xf32> -> vector<8x32x1xf32>
    %40 = vector.broadcast %39 : vector<8x32x1xf32> to vector<8x32x16xf32>
    %41 = arith.mulf %36, %40 : vector<8x32x16xf32>
    %c0_17 = arith.constant 0 : index
    %c0_18 = arith.constant 0 : index
    %42 = vector.load %arg6[%c0_17, %c0_18] : memref<16x32xbf16, #tpu.memory_space<vmem>>, vector<16x32xbf16>
    %cst_19 = arith.constant dense<0.000000e+00> : vector<128x32xf32>
    %43 = tpu.matmul %24, %42, %cst_19 {dimension_numbers = #tpu.dot_dimension_numbers<[1], [0], [0], [1], [0, 0, 1, 1], [], []>} : vector<128x16xbf16>, vector<16x32xbf16>, vector<128x32xf32> -> vector<128x32xf32>
    %c0_20 = arith.constant 0 : index
    %c0_21 = arith.constant 0 : index
    %44 = vector.load %arg7[%c0_20, %c0_21] : memref<1x32xf32, #tpu.memory_space<vmem>>, vector<1x32xf32>
    %45 = vector.broadcast %44 : vector<1x32xf32> to vector<128x32xf32>
    %46 = arith.addf %43, %45 : vector<128x32xf32>
    %47 = vector.shape_cast %46 : vector<128x32xf32> to vector<8x16x32xf32>
    %48 = arith.truncf %47 : vector<8x16x32xf32> to vector<8x16x32xbf16>
    %49 = vector.extract_strided_slice %41 {offsets = [0, 0, 0], sizes = [8, 8, 16], strides = [1, 1, 1]} : vector<8x32x16xf32> to vector<8x8x16xf32>
    %50 = arith.truncf %49 : vector<8x8x16xf32> to vector<8x8x16xbf16>
    %51 = vector.extract_strided_slice %48 {offsets = [0, 0, 0], sizes = [8, 16, 8], strides = [1, 1, 1]} : vector<8x16x32xbf16> to vector<8x16x8xbf16>
    "tpu.trace_start"() <{level = 10 : i32, message = "bns,bsd->bnd"}> : () -> ()
    %cst_22 = arith.constant dense<0.000000e+00> : vector<8x8x8xf32>
    %52 = tpu.matmul %50, %51, %cst_22 {dimension_numbers = #tpu.dot_dimension_numbers<[2], [1], [1], [2], [0, 0, 0, 1, 1, 2], [0], [0]>} : vector<8x8x16xbf16>, vector<8x16x8xbf16>, vector<8x8x8xf32> -> vector<8x8x8xf32>
    "tpu.trace_stop"() : () -> ()
    %53 = vector.extract_strided_slice %41 {offsets = [0, 8, 0], sizes = [8, 8, 16], strides = [1, 1, 1]} : vector<8x32x16xf32> to vector<8x8x16xf32>
    %54 = arith.truncf %53 : vector<8x8x16xf32> to vector<8x8x16xbf16>
    %55 = vector.extract_strided_slice %48 {offsets = [0, 0, 8], sizes = [8, 16, 8], strides = [1, 1, 1]} : vector<8x16x32xbf16> to vector<8x16x8xbf16>
    "tpu.trace_start"() <{level = 10 : i32, message = "bns,bsd->bnd"}> : () -> ()
    %cst_23 = arith.constant dense<0.000000e+00> : vector<8x8x8xf32>
    %56 = tpu.matmul %54, %55, %cst_23 {dimension_numbers = #tpu.dot_dimension_numbers<[2], [1], [1], [2], [0, 0, 0, 1, 1, 2], [0], [0]>} : vector<8x8x16xbf16>, vector<8x16x8xbf16>, vector<8x8x8xf32> -> vector<8x8x8xf32>
    "tpu.trace_stop"() : () -> ()
    %57 = vector.extract_strided_slice %41 {offsets = [0, 16, 0], sizes = [8, 8, 16], strides = [1, 1, 1]} : vector<8x32x16xf32> to vector<8x8x16xf32>
    %58 = arith.truncf %57 : vector<8x8x16xf32> to vector<8x8x16xbf16>
    %59 = vector.extract_strided_slice %48 {offsets = [0, 0, 16], sizes = [8, 16, 8], strides = [1, 1, 1]} : vector<8x16x32xbf16> to vector<8x16x8xbf16>
    "tpu.trace_start"() <{level = 10 : i32, message = "bns,bsd->bnd"}> : () -> ()
    %cst_24 = arith.constant dense<0.000000e+00> : vector<8x8x8xf32>
    %60 = tpu.matmul %58, %59, %cst_24 {dimension_numbers = #tpu.dot_dimension_numbers<[2], [1], [1], [2], [0, 0, 0, 1, 1, 2], [0], [0]>} : vector<8x8x16xbf16>, vector<8x16x8xbf16>, vector<8x8x8xf32> -> vector<8x8x8xf32>
    "tpu.trace_stop"() : () -> ()
    %61 = vector.extract_strided_slice %41 {offsets = [0, 24, 0], sizes = [8, 8, 16], strides = [1, 1, 1]} : vector<8x32x16xf32> to vector<8x8x16xf32>
    %62 = arith.truncf %61 : vector<8x8x16xf32> to vector<8x8x16xbf16>
    %63 = vector.extract_strided_slice %48 {offsets = [0, 0, 24], sizes = [8, 16, 8], strides = [1, 1, 1]} : vector<8x16x32xbf16> to vector<8x16x8xbf16>
    "tpu.trace_start"() <{level = 10 : i32, message = "bns,bsd->bnd"}> : () -> ()
    %cst_25 = arith.constant dense<0.000000e+00> : vector<8x8x8xf32>
    %64 = tpu.matmul %62, %63, %cst_25 {dimension_numbers = #tpu.dot_dimension_numbers<[2], [1], [1], [2], [0, 0, 0, 1, 1, 2], [0], [0]>} : vector<8x8x16xbf16>, vector<8x16x8xbf16>, vector<8x8x8xf32> -> vector<8x8x8xf32>
    "tpu.trace_stop"() : () -> ()
    %65 = tpu.concatenate %52, %56, %60, %64 in 2 : vector<8x8x8xf32>, vector<8x8x8xf32>, vector<8x8x8xf32>, vector<8x8x8xf32> -> vector<8x8x32xf32>
    %66 = vector.shape_cast %65 : vector<8x8x32xf32> to vector<64x32xf32>
    %67 = arith.truncf %66 : vector<64x32xf32> to vector<64x32xbf16>
    %c0_26 = arith.constant 0 : index
    %c0_27 = arith.constant 0 : index
    %68 = vector.load %arg8[%c0_26, %c0_27] : memref<32x32xbf16, #tpu.memory_space<vmem>>, vector<32x32xbf16>
    %cst_28 = arith.constant dense<0.000000e+00> : vector<64x32xf32>
    %69 = tpu.matmul %67, %68, %cst_28 {dimension_numbers = #tpu.dot_dimension_numbers<[1], [0], [0], [1], [0, 0, 1, 1], [], []>} : vector<64x32xbf16>, vector<32x32xbf16>, vector<64x32xf32> -> vector<64x32xf32>
    %c0_29 = arith.constant 0 : index
    %c0_30 = arith.constant 0 : index
    %70 = vector.load %arg9[%c0_29, %c0_30] : memref<1x32xf32, #tpu.memory_space<vmem>>, vector<1x32xf32>
    %71 = vector.broadcast %70 : vector<1x32xf32> to vector<64x32xf32>
    %72 = arith.addf %69, %71 : vector<64x32xf32>
    %c0_31 = arith.constant 0 : index
    %c0_32 = arith.constant 0 : index
    %73 = vector.load %arg10[%c0_31, %c0_32] : memref<1x32xf32, #tpu.memory_space<vmem>>, vector<1x32xf32>
    %c0_33 = arith.constant 0 : index
    %c0_34 = arith.constant 0 : index
    %74 = vector.load %arg11[%c0_33, %c0_34] : memref<1x32xf32, #tpu.memory_space<vmem>>, vector<1x32xf32>
    %cst_35 = arith.constant dense<0.000000e+00> : vector<64xf32>
    %75 = vector.multi_reduction <add>, %72, %cst_35 [1] : vector<64x32xf32> to vector<64xf32>
    %76 = vector.shape_cast %75 : vector<64xf32> to vector<64x1xf32>
    %cst_36 = arith.constant 3.200000e+01 : f32
    %77 = vector.broadcast %cst_36 : f32 to vector<64x1xf32>
    %78 = arith.divf %76, %77 : vector<64x1xf32>
    %79 = vector.broadcast %78 : vector<64x1xf32> to vector<64x32xf32>
    %80 = arith.subf %72, %79 : vector<64x32xf32>
    %81 = arith.mulf %80, %80 : vector<64x32xf32>
    %cst_37 = arith.constant dense<0.000000e+00> : vector<64xf32>
    %82 = vector.multi_reduction <add>, %81, %cst_37 [1] : vector<64x32xf32> to vector<64xf32>
    %83 = vector.shape_cast %82 : vector<64xf32> to vector<64x1xf32>
    %cst_38 = arith.constant 3.200000e+01 : f32
    %84 = vector.broadcast %cst_38 : f32 to vector<64x1xf32>
    %85 = arith.divf %83, %84 : vector<64x1xf32>
    %cst_39 = arith.constant 9.99999974E-6 : f32
    %86 = vector.broadcast %cst_39 : f32 to vector<64x1xf32>
    %87 = arith.addf %85, %86 : vector<64x1xf32>
    %88 = math.rsqrt %87 : vector<64x1xf32>
    %89 = vector.broadcast %88 : vector<64x1xf32> to vector<64x32xf32>
    %90 = arith.mulf %80, %89 : vector<64x32xf32>
    %91 = vector.broadcast %73 : vector<1x32xf32> to vector<64x32xf32>
    %92 = arith.mulf %90, %91 : vector<64x32xf32>
    %93 = vector.broadcast %74 : vector<1x32xf32> to vector<64x32xf32>
    %94 = arith.addf %92, %93 : vector<64x32xf32>
    %95 = arith.truncf %94 : vector<64x32xf32> to vector<64x32xbf16>
    %c0_40 = arith.constant 0 : index
    %c0_41 = arith.constant 0 : index
    %96 = vector.load %arg12[%c0_40, %c0_41] : memref<32x128xbf16, #tpu.memory_space<vmem>>, vector<32x128xbf16>
    %cst_42 = arith.constant dense<0.000000e+00> : vector<64x128xf32>
    %97 = tpu.matmul %95, %96, %cst_42 {dimension_numbers = #tpu.dot_dimension_numbers<[1], [0], [0], [1], [0, 0, 1, 1], [], []>} : vector<64x32xbf16>, vector<32x128xbf16>, vector<64x128xf32> -> vector<64x128xf32>
    %c0_43 = arith.constant 0 : index
    %c0_44 = arith.constant 0 : index
    %98 = vector.load %arg13[%c0_43, %c0_44] : memref<1x128xf32, #tpu.memory_space<vmem>>, vector<1x128xf32>
    %99 = vector.broadcast %98 : vector<1x128xf32> to vector<64x128xf32>
    %100 = arith.addf %97, %99 : vector<64x128xf32>
    %c0_45 = arith.constant 0 : index
    %c0_46 = arith.constant 0 : index
    %101 = vector.load %arg14[%c0_45, %c0_46] : memref<32x128xbf16, #tpu.memory_space<vmem>>, vector<32x128xbf16>
    %cst_47 = arith.constant dense<0.000000e+00> : vector<64x128xf32>
    %102 = tpu.matmul %95, %101, %cst_47 {dimension_numbers = #tpu.dot_dimension_numbers<[1], [0], [0], [1], [0, 0, 1, 1], [], []>} : vector<64x32xbf16>, vector<32x128xbf16>, vector<64x128xf32> -> vector<64x128xf32>
    %c0_48 = arith.constant 0 : index
    %c0_49 = arith.constant 0 : index
    %103 = vector.load %arg15[%c0_48, %c0_49] : memref<1x128xf32, #tpu.memory_space<vmem>>, vector<1x128xf32>
    %104 = vector.broadcast %103 : vector<1x128xf32> to vector<64x128xf32>
    %105 = arith.addf %102, %104 : vector<64x128xf32>
    %cst_50 = arith.constant 5.000000e-01 : f32
    %106 = vector.broadcast %cst_50 : f32 to vector<64x128xf32>
    %107 = arith.mulf %106, %105 : vector<64x128xf32>
    %cst_51 = arith.constant 0.707106769 : f32
    %108 = vector.broadcast %cst_51 : f32 to vector<64x128xf32>
    %109 = arith.mulf %105, %108 : vector<64x128xf32>
    %110 = math.erf %109 : vector<64x128xf32>
    %cst_52 = arith.constant 1.000000e+00 : f32
    %111 = vector.broadcast %cst_52 : f32 to vector<64x128xf32>
    %112 = arith.addf %111, %110 : vector<64x128xf32>
    %113 = arith.mulf %107, %112 : vector<64x128xf32>
    %114 = arith.mulf %100, %113 : vector<64x128xf32>
    %115 = arith.truncf %114 : vector<64x128xf32> to vector<64x128xbf16>
    %c0_53 = arith.constant 0 : index
    %c0_54 = arith.constant 0 : index
    %116 = vector.load %arg16[%c0_53, %c0_54] : memref<128x32xbf16, #tpu.memory_space<vmem>>, vector<128x32xbf16>
    %cst_55 = arith.constant dense<0.000000e+00> : vector<64x32xf32>
    %117 = tpu.matmul %115, %116, %cst_55 {dimension_numbers = #tpu.dot_dimension_numbers<[1], [0], [0], [1], [0, 0, 1, 1], [], []>} : vector<64x128xbf16>, vector<128x32xbf16>, vector<64x32xf32> -> vector<64x32xf32>
    %c0_56 = arith.constant 0 : index
    %c0_57 = arith.constant 0 : index
    %118 = vector.load %arg17[%c0_56, %c0_57] : memref<1x32xf32, #tpu.memory_space<vmem>>, vector<1x32xf32>
    %119 = vector.broadcast %118 : vector<1x32xf32> to vector<64x32xf32>
    %120 = arith.addf %117, %119 : vector<64x32xf32>
    %121 = arith.addf %120, %72 : vector<64x32xf32>
    %122 = vector.shape_cast %121 : vector<64x32xf32> to vector<8x8x32xf32>
    %c0_58 = arith.constant 0 : index
    %c0_59 = arith.constant 0 : index
    %c0_60 = arith.constant 0 : index
    %123 = vector.load %arg18[%c0_58, %c0_59, %c0_60] : memref<8x8x32xf32, #tpu.memory_space<vmem>>, vector<8x8x32xf32>
    tpu.vector_store %arg18[%c0_58, %c0_59, %c0_60], %122 {strides = array<i32>} : memref<8x8x32xf32, #tpu.memory_space<vmem>>, vector<8x8x32xf32>,
    return
  }
  func.func @transform_0(%arg0: i32) -> (i32, i32, i32) {
    %c0_i32 = arith.constant 0 : i32
    %c0_i32_0 = arith.constant 0 : i32
    %c0_i32_1 = arith.constant 0 : i32
    return %arg0, %c0_i32, %c0_i32_0 : i32, i32, i32
  }
  func.func @transform_1(%arg0: i32) -> (i32, i32) {
    %c0_i32 = arith.constant 0 : i32
    %c0_i32_0 = arith.constant 0 : i32
    %c0_i32_1 = arith.constant 0 : i32
    return %c0_i32, %c0_i32_0 : i32, i32
  }
  func.func @transform_2(%arg0: i32) -> (i32, i32) {
    %c0_i32 = arith.constant 0 : i32
    %c0_i32_0 = arith.constant 0 : i32
    %c0_i32_1 = arith.constant 0 : i32
    return %c0_i32, %c0_i32_0 : i32, i32
  }
  func.func @transform_3(%arg0: i32) -> (i32, i32) {
    %c0_i32 = arith.constant 0 : i32
    %c0_i32_0 = arith.constant 0 : i32
    %c0_i32_1 = arith.constant 0 : i32
    return %c0_i32, %c0_i32_0 : i32, i32
  }
  func.func @transform_4(%arg0: i32) -> (i32, i32) {
    %c0_i32 = arith.constant 0 : i32
    %c0_i32_0 = arith.constant 0 : i32
    %c0_i32_1 = arith.constant 0 : i32
    return %c0_i32, %c0_i32_0 : i32, i32
  }
  func.func @transform_5(%arg0: i32) -> (i32, i32) {
    %c0_i32 = arith.constant 0 : i32
    %c0_i32_0 = arith.constant 0 : i32
    %c0_i32_1 = arith.constant 0 : i32
    return %c0_i32, %c0_i32_0 : i32, i32
  }
  func.func @transform_6(%arg0: i32) -> (i32, i32) {
    %c0_i32 = arith.constant 0 : i32
    %c0_i32_0 = arith.constant 0 : i32
    %c0_i32_1 = arith.constant 0 : i32
    return %c0_i32, %c0_i32_0 : i32, i32
  }
  func.func @transform_7(%arg0: i32) -> (i32, i32) {
    %c0_i32 = arith.constant 0 : i32
    %c0_i32_0 = arith.constant 0 : i32
    %c0_i32_1 = arith.constant 0 : i32
    return %c0_i32, %c0_i32_0 : i32, i32
  }
  func.func @transform_8(%arg0: i32) -> (i32, i32) {
    %c0_i32 = arith.constant 0 : i32
    %c0_i32_0 = arith.constant 0 : i32
    %c0_i32_1 = arith.constant 0 : i32
    return %c0_i32, %c0_i32_0 : i32, i32
  }
  func.func @transform_9(%arg0: i32) -> (i32, i32) {
    %c0_i32 = arith.constant 0 : i32
    %c0_i32_0 = arith.constant 0 : i32
    %c0_i32_1 = arith.constant 0 : i32
    return %c0_i32, %c0_i32_0 : i32, i32
  }
  func.func @transform_10(%arg0: i32) -> (i32, i32) {
    %c0_i32 = arith.constant 0 : i32
    %c0_i32_0 = arith.constant 0 : i32
    %c0_i32_1 = arith.constant 0 : i32
    return %c0_i32, %c0_i32_0 : i32, i32
  }
  func.func @transform_11(%arg0: i32) -> (i32, i32) {
    %c0_i32 = arith.constant 0 : i32
    %c0_i32_0 = arith.constant 0 : i32
    %c0_i32_1 = arith.constant 0 : i32
    return %c0_i32, %c0_i32_0 : i32, i32
  }
  func.func @transform_12(%arg0: i32) -> (i32, i32) {
    %c0_i32 = arith.constant 0 : i32
    %c0_i32_0 = arith.constant 0 : i32
    %c0_i32_1 = arith.constant 0 : i32
    return %c0_i32, %c0_i32_0 : i32, i32
  }
  func.func @transform_13(%arg0: i32) -> (i32, i32) {
    %c0_i32 = arith.constant 0 : i32
    %c0_i32_0 = arith.constant 0 : i32
    %c0_i32_1 = arith.constant 0 : i32
    return %c0_i32, %c0_i32_0 : i32, i32
  }
  func.func @transform_14(%arg0: i32) -> (i32, i32) {
    %c0_i32 = arith.constant 0 : i32
    %c0_i32_0 = arith.constant 0 : i32
    %c0_i32_1 = arith.constant 0 : i32
    return %c0_i32, %c0_i32_0 : i32, i32
  }
  func.func @transform_15(%arg0: i32) -> (i32, i32) {
    %c0_i32 = arith.constant 0 : i32
    %c0_i32_0 = arith.constant 0 : i32
    %c0_i32_1 = arith.constant 0 : i32
    return %c0_i32, %c0_i32_0 : i32, i32
  }
  func.func @transform_16(%arg0: i32) -> (i32, i32) {
    %c0_i32 = arith.constant 0 : i32
    %c0_i32_0 = arith.constant 0 : i32
    %c0_i32_1 = arith.constant 0 : i32
    return %c0_i32, %c0_i32_0 : i32, i32
  }
  func.func @transform_17(%arg0: i32) -> (i32, i32, i32) {
    %c0_i32 = arith.constant 0 : i32
    %c0_i32_0 = arith.constant 0 : i32
    %c0_i32_1 = arith.constant 0 : i32
    return %arg0, %c0_i32, %c0_i32_0 : i32, i32, i32
  }
}

</mosaic_0001>

<llo_original>
// kernel: tpu_custom_call.1
$region0: #{tpu_custom_call.1}
  #allocation0 [shape = 'u32[]', space=smem, size = 0x4, offset = 0x4, fixed_abs, tag = 'smem constant byte address 0x4 - core index']
  #allocation1 [shape = 'u32[144,128]{1,0:T(1,128)}', space=vmem, size = 0x12000, scoped, tag = 'internal scratch']
  %s0 = inlined_call_operand.hbm [shape: f32[8,16,16], index: 0, kind: input, shape index: {}]
  %s1 = inlined_call_operand.vmem [shape: f32[1,16], index: 1, kind: input, shape index: {}]
  %s2 = inlined_call_operand.vmem [shape: f32[1,16], index: 2, kind: input, shape index: {}]
  %s3 = inlined_call_operand.vmem [shape: bf16[16,32], index: 3, kind: input, shape index: {}]
  %s4 = inlined_call_operand.vmem [shape: f32[1,32], index: 4, kind: input, shape index: {}]
  %s5 = inlined_call_operand.vmem [shape: bf16[16,32], index: 5, kind: input, shape index: {}]
  %s6 = inlined_call_operand.vmem [shape: f32[1,32], index: 6, kind: input, shape index: {}]
  %s7 = inlined_call_operand.vmem [shape: bf16[32,32], index: 7, kind: input, shape index: {}]
  %s8 = inlined_call_operand.vmem [shape: f32[1,32], index: 8, kind: input, shape index: {}]
  %s9 = inlined_call_operand.vmem [shape: f32[1,32], index: 9, kind: input, shape index: {}]
  %s10 = inlined_call_operand.vmem [shape: f32[1,32], index: 10, kind: input, shape index: {}]
  %s11 = inlined_call_operand.vmem [shape: bf16[32,128], index: 11, kind: input, shape index: {}]
  %s12 = inlined_call_operand.vmem [shape: f32[1,128], index: 12, kind: input, shape index: {}]
  %s13 = inlined_call_operand.vmem [shape: bf16[32,128], index: 13, kind: input, shape index: {}]
  %s14 = inlined_call_operand.vmem [shape: f32[1,128], index: 14, kind: input, shape index: {}]
  %s15 = inlined_call_operand.vmem [shape: bf16[128,32], index: 15, kind: input, shape index: {}]
  %s16 = inlined_call_operand.vmem [shape: f32[1,32], index: 16, kind: input, shape index: {}]
  %s17 = inlined_call_operand.hbm [shape: f32[8,8,32], index: 17, kind: output, shape index: {}]
  %s18 = sld [smem:[#allocation0]]
  $region82: #{tpu_custom_call.1} parent=0
    _
  %s20 = ssub.s32 1, %s18
  %s21 = scalar_select 0, %s20, %s18
  $region1: #{tpu_custom_call.1} parent=0
    #allocation2 [shape = 'u8[65536]{0}', space=vmem, size = 0x10000, scoped, tag = 'input window, operand 0, single buffered']
    #allocation3 [shape = 's32[1]{0}', space=sflag, size = 0x4, scoped, tag = 'scoped memory for tpu_custom_call.1']
    #allocation4 [shape = 's32[1]{0}', space=sflag, size = 0x4, scoped, tag = 'scoped memory for tpu_custom_call.1']
    #allocation5 [shape = 'u8[32768]{0}', space=vmem, size = 0x8000, scoped, tag = 'output window, operand 0, single buffered']
    %22 = vsyncpa [#allocation3], 0
    %23 = vsyncpa [#allocation4], 0
    // Predicated region
    $region2: #{tpu_custom_call.1} parent=1 // pred_check
      _
    $region3: #{tpu_custom_call.1} parent=1 // pred_check_branch
      %25 = sbr.rel (0) target = $region5
    $region4: #{tpu_custom_call.1} parent=1 // pred_region
      %s27 = ssub.s32 2048, 2048
      %28 = vsyncadd [#allocation3], %s27
      %s29 = sshll.u32 [#allocation2], 4
      %s30 = int_to_ptr.vmem [resolvable:$true] %s29
      %35 = dma.hbm_to_vmem [thread:$0]  %s0, 2048, %s30, [#allocation3], 128, 128, 8
    $region5: #{tpu_custom_call.1} parent=1 // pred_fallthru
      _
    // Predicated region
    $region6: #{tpu_custom_call.1} parent=1 // pred_check
      _
    $region7: #{tpu_custom_call.1} parent=1 // pred_check_branch
      %37 = sbr.rel (0) target = $region9
    $region8: #{tpu_custom_call.1} parent=1 // pred_region
      _
    $region9: #{tpu_custom_call.1} parent=1 // pred_fallthru
      _
    // Predicated region
    $region10: #{tpu_custom_call.1} parent=1 // pred_check
      _
    $region11: #{tpu_custom_call.1} parent=1 // pred_check_branch
      %39 = sbr.rel (0) target = $region13
    $region12: #{tpu_custom_call.1} parent=1 // pred_region
      _
    $region13: #{tpu_custom_call.1} parent=1 // pred_fallthru
      _
    // Predicated region
    $region14: #{tpu_custom_call.1} parent=1 // pred_check
      _
    $region15: #{tpu_custom_call.1} parent=1 // pred_check_branch
      %41 = sbr.rel (0) target = $region17
    $region16: #{tpu_custom_call.1} parent=1 // pred_region
      _
    $region17: #{tpu_custom_call.1} parent=1 // pred_fallthru
      _
    // Predicated region
    $region18: #{tpu_custom_call.1} parent=1 // pred_check
      _
    $region19: #{tpu_custom_call.1} parent=1 // pred_check_branch
      %43 = sbr.rel (0) target = $region21
    $region20: #{tpu_custom_call.1} parent=1 // pred_region
      _
    $region21: #{tpu_custom_call.1} parent=1 // pred_fallthru
      _
    // Predicated region
    $region22: #{tpu_custom_call.1} parent=1 // pred_check
      _
    $region23: #{tpu_custom_call.1} parent=1 // pred_check_branch
      %45 = sbr.rel (0) target = $region25
    $region24: #{tpu_custom_call.1} parent=1 // pred_region
      _
    $region25: #{tpu_custom_call.1} parent=1 // pred_fallthru
      _
    // Predicated region
    $region26: #{tpu_custom_call.1} parent=1 // pred_check
      _
    $region27: #{tpu_custom_call.1} parent=1 // pred_check_branch
      %47 = sbr.rel (0) target = $region29
    $region28: #{tpu_custom_call.1} parent=1 // pred_region
      _
    $region29: #{tpu_custom_call.1} parent=1 // pred_fallthru
      _
    // Predicated region
    $region30: #{tpu_custom_call.1} parent=1 // pred_check
      _
    $region31: #{tpu_custom_call.1} parent=1 // pred_check_branch
      %49 = sbr.rel (0) target = $region33
    $region32: #{tpu_custom_call.1} parent=1 // pred_region
      _
    $region33: #{tpu_custom_call.1} parent=1 // pred_fallthru
      _
    // Predicated region
    $region34: #{tpu_custom_call.1} parent=1 // pred_check
      _
    $region35: #{tpu_custom_call.1} parent=1 // pred_check_branch
      %51 = sbr.rel (0) target = $region37
    $region36: #{tpu_custom_call.1} parent=1 // pred_region
      _
    $region37: #{tpu_custom_call.1} parent=1 // pred_fallthru
      _
    // Predicated region
    $region38: #{tpu_custom_call.1} parent=1 // pred_check
      _
    $region39: #{tpu_custom_call.1} parent=1 // pred_check_branch
      %53 = sbr.rel (0) target = $region41
    $region40: #{tpu_custom_call.1} parent=1 // pred_region
      _
    $region41: #{tpu_custom_call.1} parent=1 // pred_fallthru
      _
    // Predicated region
    $region42: #{tpu_custom_call.1} parent=1 // pred_check
      _
    $region43: #{tpu_custom_call.1} parent=1 // pred_check_branch
      %55 = sbr.rel (0) target = $region45
    $region44: #{tpu_custom_call.1} parent=1 // pred_region
      _
    $region45: #{tpu_custom_call.1} parent=1 // pred_fallthru
      _
    // Predicated region
    $region46: #{tpu_custom_call.1} parent=1 // pred_check
      _
    $region47: #{tpu_custom_call.1} parent=1 // pred_check_branch
      %57 = sbr.rel (0) target = $region49
    $region48: #{tpu_custom_call.1} parent=1 // pred_region
      _
    $region49: #{tpu_custom_call.1} parent=1 // pred_fallthru
      _
    // Predicated region
    $region50: #{tpu_custom_call.1} parent=1 // pred_check
      _
    $region51: #{tpu_custom_call.1} parent=1 // pred_check_branch
      %59 = sbr.rel (0) target = $region53
    $region52: #{tpu_custom_call.1} parent=1 // pred_region
      _
    $region53: #{tpu_custom_call.1} parent=1 // pred_fallthru
      _
    // Predicated region
    $region54: #{tpu_custom_call.1} parent=1 // pred_check
      _
    $region55: #{tpu_custom_call.1} parent=1 // pred_check_branch
      %61 = sbr.rel (0) target = $region57
    $region56: #{tpu_custom_call.1} parent=1 // pred_region
      _
    $region57: #{tpu_custom_call.1} parent=1 // pred_fallthru
      _
    // Predicated region
    $region58: #{tpu_custom_call.1} parent=1 // pred_check
      _
    $region59: #{tpu_custom_call.1} parent=1 // pred_check_branch
      %63 = sbr.rel (0) target = $region61
    $region60: #{tpu_custom_call.1} parent=1 // pred_region
      _
    $region61: #{tpu_custom_call.1} parent=1 // pred_fallthru
      _
    // Predicated region
    $region62: #{tpu_custom_call.1} parent=1 // pred_check
      _
    $region63: #{tpu_custom_call.1} parent=1 // pred_check_branch
      %65 = sbr.rel (0) target = $region65
    $region64: #{tpu_custom_call.1} parent=1 // pred_region
      _
    $region65: #{tpu_custom_call.1} parent=1 // pred_fallthru
      _
    // Predicated region
    $region66: #{tpu_custom_call.1} parent=1 // pred_check
      _
    $region67: #{tpu_custom_call.1} parent=1 // pred_check_branch
      %67 = sbr.rel (0) target = $region69
    $region68: #{tpu_custom_call.1} parent=1 // pred_region
      _
    $region69: #{tpu_custom_call.1} parent=1 // pred_fallthru
      _
    // Predicated region
    $region70: #{tpu_custom_call.1} parent=1 // pred_check
      _
    $region71: #{tpu_custom_call.1} parent=1 // pred_check_branch
      %69 = sbr.rel (0) target = $region73
    $region72: #{tpu_custom_call.1} parent=1 // pred_region
      %70 = dma.done [#allocation3], 2048
    $region73: #{tpu_custom_call.1} parent=1 // pred_fallthru
      _
    %v72 = vld [vmem:[#allocation2] sm:$0xff]
    %v73 = vld [vmem:[#allocation2 + $0x8] sm:$0xff]
    %v74 = vld [vmem:[#allocation2 + $0x10] sm:$0xff]
    %v75 = vld [vmem:[#allocation2 + $0x18] sm:$0xff]
    %v76 = vld [vmem:[#allocation2 + $0x20] sm:$0xff]
    %v77 = vld [vmem:[#allocation2 + $0x28] sm:$0xff]
    %v78 = vld [vmem:[#allocation2 + $0x30] sm:$0xff]
    %v79 = vld [vmem:[#allocation2 + $0x38] sm:$0xff]
    %v80 = vld [vmem:[#allocation2 + $0x40] sm:$0xff]
    %v81 = vld [vmem:[#allocation2 + $0x48] sm:$0xff]
    %v82 = vld [vmem:[#allocation2 + $0x50] sm:$0xff]
    %v83 = vld [vmem:[#allocation2 + $0x58] sm:$0xff]
    %v84 = vld [vmem:[#allocation2 + $0x60] sm:$0xff]
    %v85 = vld [vmem:[#allocation2 + $0x68] sm:$0xff]
    %v86 = vld [vmem:[#allocation2 + $0x70] sm:$0xff]
    %v87 = vld [vmem:[#allocation2 + $0x78] sm:$0xff]
    %v88 = vld [vmem:[%s1] sm:$0x1]
    %v89 = vld [vmem:[%s2] sm:$0x1]
    %vm90 = vcmask 130048
    %v91 = vsel %vm90, %v72, 0.0
    %92 = vadd.xlane.f32.xlu0 %v91
    %v93 = vpop.xlane.xlu0 %92
    %v94 = vsel %vm90, %v73, 0.0
    %95 = vadd.xlane.f32.xlu0 %v94
    %v96 = vpop.xlane.xlu0 %95
    %v97 = vsel %vm90, %v74, 0.0
    %98 = vadd.xlane.f32.xlu0 %v97
    %v99 = vpop.xlane.xlu0 %98
    %v100 = vsel %vm90, %v75, 0.0
    %101 = vadd.xlane.f32.xlu0 %v100
    %v102 = vpop.xlane.xlu0 %101
    %v103 = vsel %vm90, %v76, 0.0
    %104 = vadd.xlane.f32.xlu0 %v103
    %v105 = vpop.xlane.xlu0 %104
    %v106 = vsel %vm90, %v77, 0.0
    %107 = vadd.xlane.f32.xlu0 %v106
    %v108 = vpop.xlane.xlu0 %107
    %v109 = vsel %vm90, %v78, 0.0
    %110 = vadd.xlane.f32.xlu0 %v109
    %v111 = vpop.xlane.xlu0 %110
    %v112 = vsel %vm90, %v79, 0.0
    %113 = vadd.xlane.f32.xlu0 %v112
    %v114 = vpop.xlane.xlu0 %113
    %v115 = vsel %vm90, %v80, 0.0
    %116 = vadd.xlane.f32.xlu0 %v115
    %v117 = vpop.xlane.xlu0 %116
    %v118 = vsel %vm90, %v81, 0.0
    %119 = vadd.xlane.f32.xlu0 %v118
    %v120 = vpop.xlane.xlu0 %119
    %v121 = vsel %vm90, %v82, 0.0
    %122 = vadd.xlane.f32.xlu0 %v121
    %v123 = vpop.xlane.xlu0 %122
    %v124 = vsel %vm90, %v83, 0.0
    %125 = vadd.xlane.f32.xlu0 %v124
    %v126 = vpop.xlane.xlu0 %125
    %v127 = vsel %vm90, %v84, 0.0
    %128 = vadd.xlane.f32.xlu0 %v127
    %v129 = vpop.xlane.xlu0 %128
    %v130 = vsel %vm90, %v85, 0.0
    %131 = vadd.xlane.f32.xlu0 %v130
    %v132 = vpop.xlane.xlu0 %131
    %v133 = vsel %vm90, %v86, 0.0
    %134 = vadd.xlane.f32.xlu0 %v133
    %v135 = vpop.xlane.xlu0 %134
    %v136 = vsel %vm90, %v87, 0.0
    %137 = vadd.xlane.f32.xlu0 %v136
    %v138 = vpop.xlane.xlu0 %137
    %v139 = vrcp.pop 16.0
    %v140 = vmul.f32 %v93, %v139
    %v141 = vmul.f32 %v96, %v139
    %v142 = vmul.f32 %v99, %v139
    %v143 = vmul.f32 %v102, %v139
    %v144 = vmul.f32 %v105, %v139
    %v145 = vmul.f32 %v108, %v139
    %v146 = vmul.f32 %v111, %v139
    %v147 = vmul.f32 %v114, %v139
    %v148 = vmul.f32 %v117, %v139
    %v149 = vmul.f32 %v120, %v139
    %v150 = vmul.f32 %v123, %v139
    %v151 = vmul.f32 %v126, %v139
    %v152 = vmul.f32 %v129, %v139
    %v153 = vmul.f32 %v132, %v139
    %v154 = vmul.f32 %v135, %v139
    %v155 = vmul.f32 %v138, %v139
    %v156 = vsub.f32 %v72, %v140
    %v157 = vsub.f32 %v73, %v141
    %v158 = vsub.f32 %v74, %v142
    %v159 = vsub.f32 %v75, %v143
    %v160 = vsub.f32 %v76, %v144
    %v161 = vsub.f32 %v77, %v145
    %v162 = vsub.f32 %v78, %v146
    %v163 = vsub.f32 %v79, %v147
    %v164 = vsub.f32 %v80, %v148
    %v165 = vsub.f32 %v81, %v149
    %v166 = vsub.f32 %v82, %v150
    %v167 = vsub.f32 %v83, %v151
    %v168 = vsub.f32 %v84, %v152
    %v169 = vsub.f32 %v85, %v153
    %v170 = vsub.f32 %v86, %v154
    %v171 = vsub.f32 %v87, %v155
    %v172 = vmul.f32 %v156, %v156
    %v173 = vmul.f32 %v157, %v157
    %v174 = vmul.f32 %v158, %v158
    %v175 = vmul.f32 %v159, %v159
    %v176 = vmul.f32 %v160, %v160
    %v177 = vmul.f32 %v161, %v161
    %v178 = vmul.f32 %v162, %v162
    %v179 = vmul.f32 %v163, %v163
    %v180 = vmul.f32 %v164, %v164
    %v181 = vmul.f32 %v165, %v165
    %v182 = vmul.f32 %v166, %v166
    %v183 = vmul.f32 %v167, %v167
    %v184 = vmul.f32 %v168, %v168
    %v185 = vmul.f32 %v169, %v169
    %v186 = vmul.f32 %v170, %v170
    %v187 = vmul.f32 %v171, %v171
    %v188 = vsel %vm90, %v172, 0.0
    %189 = vadd.xlane.f32.xlu0 %v188
    %v190 = vpop.xlane.xlu0 %189
    %v191 = vsel %vm90, %v173, 0.0
    %192 = vadd.xlane.f32.xlu0 %v191
    %v193 = vpop.xlane.xlu0 %192
    %v194 = vsel %vm90, %v174, 0.0
    %195 = vadd.xlane.f32.xlu0 %v194
    %v196 = vpop.xlane.xlu0 %195
    %v197 = vsel %vm90, %v175, 0.0
    %198 = vadd.xlane.f32.xlu0 %v197
    %v199 = vpop.xlane.xlu0 %198
    %v200 = vsel %vm90, %v176, 0.0
    %201 = vadd.xlane.f32.xlu0 %v200
    %v202 = vpop.xlane.xlu0 %201
    %v203 = vsel %vm90, %v177, 0.0
    %204 = vadd.xlane.f32.xlu0 %v203
    %v205 = vpop.xlane.xlu0 %204
    %v206 = vsel %vm90, %v178, 0.0
    %207 = vadd.xlane.f32.xlu0 %v206
    %v208 = vpop.xlane.xlu0 %207
    %v209 = vsel %vm90, %v179, 0.0
    %210 = vadd.xlane.f32.xlu0 %v209
    %v211 = vpop.xlane.xlu0 %210
    %v212 = vsel %vm90, %v180, 0.0
    %213 = vadd.xlane.f32.xlu0 %v212
    %v214 = vpop.xlane.xlu0 %213
    %v215 = vsel %vm90, %v181, 0.0
    %216 = vadd.xlane.f32.xlu0 %v215
    %v217 = vpop.xlane.xlu0 %216
    %v218 = vsel %vm90, %v182, 0.0
    %219 = vadd.xlane.f32.xlu0 %v218
    %v220 = vpop.xlane.xlu0 %219
    %v221 = vsel %vm90, %v183, 0.0
    %222 = vadd.xlane.f32.xlu0 %v221
    %v223 = vpop.xlane.xlu0 %222
    %v224 = vsel %vm90, %v184, 0.0
    %225 = vadd.xlane.f32.xlu0 %v224
    %v226 = vpop.xlane.xlu0 %225
    %v227 = vsel %vm90, %v185, 0.0
    %228 = vadd.xlane.f32.xlu0 %v227
    %v229 = vpop.xlane.xlu0 %228
    %v230 = vsel %vm90, %v186, 0.0
    %231 = vadd.xlane.f32.xlu0 %v230
    %v232 = vpop.xlane.xlu0 %231
    %v233 = vsel %vm90, %v187, 0.0
    %234 = vadd.xlane.f32.xlu0 %v233
    %v235 = vpop.xlane.xlu0 %234
    %v236 = vmul.f32 %v190, %v139
    %v237 = vmul.f32 %v193, %v139
    %v238 = vmul.f32 %v196, %v139
    %v239 = vmul.f32 %v199, %v139
    %v240 = vmul.f32 %v202, %v139
    %v241 = vmul.f32 %v205, %v139
    %v242 = vmul.f32 %v208, %v139
    %v243 = vmul.f32 %v211, %v139
    %v244 = vmul.f32 %v214, %v139
    %v245 = vmul.f32 %v217, %v139
    %v246 = vmul.f32 %v220, %v139
    %v247 = vmul.f32 %v223, %v139
    %v248 = vmul.f32 %v226, %v139
    %v249 = vmul.f32 %v229, %v139
    %v250 = vmul.f32 %v232, %v139
    %v251 = vmul.f32 %v235, %v139
    %v252 = vadd.f32 %v236, 1e-05
    %v253 = vadd.f32 %v237, 1e-05
    %v254 = vadd.f32 %v238, 1e-05
    %v255 = vadd.f32 %v239, 1e-05
    %v256 = vadd.f32 %v240, 1e-05
    %v257 = vadd.f32 %v241, 1e-05
    %v258 = vadd.f32 %v242, 1e-05
    %v259 = vadd.f32 %v243, 1e-05
    %v260 = vadd.f32 %v244, 1e-05
    %v261 = vadd.f32 %v245, 1e-05
    %v262 = vadd.f32 %v246, 1e-05
    %v263 = vadd.f32 %v247, 1e-05
    %v264 = vadd.f32 %v248, 1e-05
    %v265 = vadd.f32 %v249, 1e-05
    %v266 = vadd.f32 %v250, 1e-05
    %v267 = vadd.f32 %v251, 1e-05
    %v268 = vrsqrt.pop %v252
    %v269 = vrsqrt.pop %v253
    %v270 = vrsqrt.pop %v254
    %v271 = vrsqrt.pop %v255
    %v272 = vrsqrt.pop %v256
    %v273 = vrsqrt.pop %v257
    %v274 = vrsqrt.pop %v258
    %v275 = vrsqrt.pop %v259
    %v276 = vrsqrt.pop %v260
    %v277 = vrsqrt.pop %v261
    %v278 = vrsqrt.pop %v262
    %v279 = vrsqrt.pop %v263
    %v280 = vrsqrt.pop %v264
    %v281 = vrsqrt.pop %v265
    %v282 = vrsqrt.pop %v266
    %v283 = vrsqrt.pop %v267
    %v284 = vmul.f32 %v156, %v268
    %v285 = vmul.f32 %v157, %v269
    %v286 = vmul.f32 %v158, %v270
    %v287 = vmul.f32 %v159, %v271
    %v288 = vmul.f32 %v160, %v272
    %v289 = vmul.f32 %v161, %v273
    %v290 = vmul.f32 %v162, %v274
    %v291 = vmul.f32 %v163, %v275
    %v292 = vmul.f32 %v164, %v276
    %v293 = vmul.f32 %v165, %v277
    %v294 = vmul.f32 %v166, %v278
    %v295 = vmul.f32 %v167, %v279
    %v296 = vmul.f32 %v168, %v280
    %v297 = vmul.f32 %v169, %v281
    %v298 = vmul.f32 %v170, %v282
    %v299 = vmul.f32 %v171, %v283
    %v301 = vlaneseq
    %v302 = vshrl.u32 %v301, 7
    %v303 = vsub.s32 0, %v302
    %v304 = vrot.slane %v88, %v303
    %v306 = vmul.f32 %v284, %v304
    %v307 = vmul.f32 %v285, %v304
    %v308 = vmul.f32 %v286, %v304
    %v309 = vmul.f32 %v287, %v304
    %v310 = vmul.f32 %v288, %v304
    %v311 = vmul.f32 %v289, %v304
    %v312 = vmul.f32 %v290, %v304
    %v313 = vmul.f32 %v291, %v304
    %v314 = vmul.f32 %v292, %v304
    %v315 = vmul.f32 %v293, %v304
    %v316 = vmul.f32 %v294, %v304
    %v317 = vmul.f32 %v295, %v304
    %v318 = vmul.f32 %v296, %v304
    %v319 = vmul.f32 %v297, %v304
    %v320 = vmul.f32 %v298, %v304
    %v321 = vmul.f32 %v299, %v304
    %v323 = vlaneseq
    %v324 = vshrl.u32 %v323, 7
    %v325 = vsub.s32 0, %v324
    %v326 = vrot.slane %v89, %v325
    %v328 = vadd.f32 %v306, %v326
    %v329 = vadd.f32 %v307, %v326
    %v330 = vadd.f32 %v308, %v326
    %v331 = vadd.f32 %v309, %v326
    %v332 = vadd.f32 %v310, %v326
    %v333 = vadd.f32 %v311, %v326
    %v334 = vadd.f32 %v312, %v326
    %v335 = vadd.f32 %v313, %v326
    %v336 = vadd.f32 %v314, %v326
    %v337 = vadd.f32 %v315, %v326
    %v338 = vadd.f32 %v316, %v326
    %v339 = vadd.f32 %v317, %v326
    %v340 = vadd.f32 %v318, %v326
    %v341 = vadd.f32 %v319, %v326
    %v342 = vadd.f32 %v320, %v326
    %v343 = vadd.f32 %v321, %v326
    %v344 = vpack.c.bf16 %v329, %v328
    %v345 = vpack.c.bf16 %v331, %v330
    %v346 = vpack.c.bf16 %v333, %v332
    %v347 = vpack.c.bf16 %v335, %v334
    %v348 = vpack.c.bf16 %v337, %v336
    %v349 = vpack.c.bf16 %v339, %v338
    %v350 = vpack.c.bf16 %v341, %v340
    %v351 = vpack.c.bf16 %v343, %v342
    %v352 = vld [vmem:[%s3] sm:$0xf]
    %v353 = vld [vmem:[%s3 + $0x4] sm:$0xf]
    %v354 = vld [vmem:[%s4] sm:$0x1]
    %v356 = vlaneseq
    %v357 = vshrl.u32 %v356, 7
    %v358 = vsub.s32 0, %v357
    %v359 = vrot.slane %v354, %v358
    %v363 = vunpack.c.l.b16 %v352
    %v364 = vunpack.c.l.b16 %v353
    %v365 = vpack.c.b16 %v364, %v363
    %v368 = vsel %vm90, %v344, 0
    %v371 = vsel %vm90, %v345, 0
    %v374 = vsel %vm90, %v346, 0
    %v377 = vsel %vm90, %v347, 0
    %v380 = vsel %vm90, %v348, 0
    %v383 = vsel %vm90, %v349, 0
    %v386 = vsel %vm90, %v350, 0
    %v389 = vsel %vm90, %v351, 0
    %391 = vmatprep.subr.bf16.mxu0 0
    %392 = vmatpush1.bf16.msra.mxu0 %v365
    %393 = vmatprep.subr.bf16.mxu0 0
    %394 = vmatpush1.bf16.msra.mxu0 0
    %395 = vmatprep.subr.bf16.mxu0 0
    %396 = vmatpush1.bf16.msra.mxu0 0
    %397 = vmatprep.subr.bf16.mxu0 0
    %398 = vmatpush1.bf16.msra.mxu0 0
    %399 = vmatprep.subr.bf16.mxu0 0
    %400 = vmatpush1.bf16.msra.mxu0 0
    %401 = vmatprep.subr.bf16.mxu0 0
    %402 = vmatpush1.bf16.msra.mxu0 0
    %403 = vmatprep.subr.bf16.mxu0 0
    %404 = vmatpush1.bf16.msra.mxu0 0
    %405 = vmatprep.subr.bf16.mxu0 0
    %406 = vmatpush1.bf16.msra.mxu0 0
    %407 = vmatprep.subr.bf16.mxu0 0
    %408 = vmatpush1.bf16.msra.mxu0 0
    %409 = vmatprep.subr.bf16.mxu0 0
    %410 = vmatpush1.bf16.msra.mxu0 0
    %411 = vmatprep.subr.bf16.mxu0 0
    %412 = vmatpush1.bf16.msra.mxu0 0
    %413 = vmatprep.subr.bf16.mxu0 0
    %414 = vmatpush1.bf16.msra.mxu0 0
    %415 = vmatprep.subr.bf16.mxu0 0
    %416 = vmatpush1.bf16.msra.mxu0 0
    %417 = vmatprep.subr.bf16.mxu0 0
    %418 = vmatpush1.bf16.msra.mxu0 0
    %419 = vmatprep.subr.bf16.mxu0 0
    %420 = vmatpush1.bf16.msra.mxu0 0
    %421 = vmatprep.subr.bf16.mxu0 0
    %422 = vmatpush1.bf16.msra.mxu0 0
    %423 = vmatprep.mubr.bf16.mxu0 0
    %424 = vmatmul.mubr.bf16.gmra.mrb[0].mxu0 %v368
    %v425 = vpop.f32.mrb[0].mxu0
    %v426 = vadd.f32 %v359, %v425
    %v427 = vpop.f32.mrb[0].mxu0
    %v428 = vpop.f32.mrb[0].mxu0
    %v429 = vadd.f32 %v359, %v428
    %v430 = vpop.f32.mrb[0].mxu0
    %431 = vmatprep.mubr.bf16.mxu0 0
    %432 = vmatmul.mubr.bf16.gmra.mrb[0].mxu0 %v371
    %v433 = vpop.f32.mrb[0].mxu0
    %v434 = vadd.f32 %v359, %v433
    %v435 = vpop.f32.mrb[0].mxu0
    %v436 = vpop.f32.mrb[0].mxu0
    %v437 = vadd.f32 %v359, %v436
    %v438 = vpop.f32.mrb[0].mxu0
    %439 = vmatprep.mubr.bf16.mxu0 0
    %440 = vmatmul.mubr.bf16.gmra.mrb[0].mxu0 %v374
    %v441 = vpop.f32.mrb[0].mxu0
    %v442 = vadd.f32 %v359, %v441
    %v443 = vpop.f32.mrb[0].mxu0
    %v444 = vpop.f32.mrb[0].mxu0
    %v445 = vadd.f32 %v359, %v444
    %v446 = vpop.f32.mrb[0].mxu0
    %447 = vmatprep.mubr.bf16.mxu0 0
    %448 = vmatmul.mubr.bf16.gmra.mrb[0].mxu0 %v377
    %v449 = vpop.f32.mrb[0].mxu0
    %v450 = vadd.f32 %v359, %v449
    %v451 = vpop.f32.mrb[0].mxu0
    %v452 = vpop.f32.mrb[0].mxu0
    %v453 = vadd.f32 %v359, %v452
    %v454 = vpop.f32.mrb[0].mxu0
    %455 = vmatprep.mubr.bf16.mxu0 0
    %456 = vmatmul.mubr.bf16.gmra.mrb[0].mxu0 %v380
    %v457 = vpop.f32.mrb[0].mxu0
    %v458 = vadd.f32 %v359, %v457
    %v459 = vpop.f32.mrb[0].mxu0
    %v460 = vpop.f32.mrb[0].mxu0
    %v461 = vadd.f32 %v359, %v460
    %v462 = vpop.f32.mrb[0].mxu0
    %463 = vmatprep.mubr.bf16.mxu0 0
    %464 = vmatmul.mubr.bf16.gmra.mrb[0].mxu0 %v383
    %v465 = vpop.f32.mrb[0].mxu0
    %v466 = vadd.f32 %v359, %v465
    %v467 = vpop.f32.mrb[0].mxu0
    %v468 = vpop.f32.mrb[0].mxu0
    %v469 = vadd.f32 %v359, %v468
    %v470 = vpop.f32.mrb[0].mxu0
    %471 = vmatprep.mubr.bf16.mxu0 0
    %472 = vmatmul.mubr.bf16.gmra.mrb[0].mxu0 %v386
    %v473 = vpop.f32.mrb[0].mxu0
    %v474 = vadd.f32 %v359, %v473
    %v475 = vpop.f32.mrb[0].mxu0
    %v476 = vpop.f32.mrb[0].mxu0
    %v477 = vadd.f32 %v359, %v476
    %v478 = vpop.f32.mrb[0].mxu0
    %479 = vmatprep.mubr.bf16.mxu0 0
    %480 = vmatmul.mubr.bf16.gmra.mrb[0].mxu0 %v389
    %v481 = vpop.f32.mrb[0].mxu0
    %v482 = vadd.f32 %v359, %v481
    %v483 = vpop.f32.mrb[0].mxu0
    %v484 = vpop.f32.mrb[0].mxu0
    %v485 = vadd.f32 %v359, %v484
    %v486 = vpop.f32.mrb[0].mxu0
    %487 = vdwg.mxu0
    %488 = vxpose.xlu0.b32.start [1/16] %v426, 128
    %489 = vxpose.xlu0.b32.cont [2/16] %v429, 128
    %490 = vxpose.xlu0.b32.cont [3/16] 0.0, 128
    %491 = vxpose.xlu0.b32.cont [4/16] 0.0, 128
    %492 = vxpose.xlu0.b32.cont [5/16] 0.0, 128
    %493 = vxpose.xlu0.b32.cont [6/16] 0.0, 128
    %494 = vxpose.xlu0.b32.cont [7/16] 0.0, 128
    %495 = vxpose.xlu0.b32.cont [8/16] 0.0, 128
    %496 = vxpose.xlu0.b32.cont [9/16] 0.0, 128
    %497 = vxpose.xlu0.b32.cont [10/16] 0.0, 128
    %498 = vxpose.xlu0.b32.cont [11/16] 0.0, 128
    %499 = vxpose.xlu0.b32.cont [12/16] 0.0, 128
    %500 = vxpose.xlu0.b32.cont [13/16] 0.0, 128
    %501 = vxpose.xlu0.b32.cont [14/16] 0.0, 128
    %502 = vxpose.xlu0.b32.cont [15/16] 0.0, 128
    %503 = vxpose.xlu0.b32.end [16/16] 0.0, 128
    %v504 = vpop.trf.xlu0
    %v505 = vpop.trf.xlu0
    %v506 = vpop.trf.xlu0
    %v507 = vpop.trf.xlu0
    %v508 = vpop.trf.xlu0
    %v509 = vpop.trf.xlu0
    %v510 = vpop.trf.xlu0
    %v511 = vpop.trf.xlu0
    %v512 = vpop.trf.xlu0
    %v513 = vpop.trf.xlu0
    %v514 = vpop.trf.xlu0
    %v515 = vpop.trf.xlu0
    %v516 = vpop.trf.xlu0
    %v517 = vpop.trf.xlu0
    %v518 = vpop.trf.xlu0
    %v519 = vpop.trf.xlu0
    %520 = vxpose.xlu0.b32.start [1/16] %v434, 128
    %521 = vxpose.xlu0.b32.cont [2/16] %v437, 128
    %522 = vxpose.xlu0.b32.cont [3/16] 0.0, 128
    %523 = vxpose.xlu0.b32.cont [4/16] 0.0, 128
    %524 = vxpose.xlu0.b32.cont [5/16] 0.0, 128
    %525 = vxpose.xlu0.b32.cont [6/16] 0.0, 128
    %526 = vxpose.xlu0.b32.cont [7/16] 0.0, 128
    %527 = vxpose.xlu0.b32.cont [8/16] 0.0, 128
    %528 = vxpose.xlu0.b32.cont [9/16] 0.0, 128
    %529 = vxpose.xlu0.b32.cont [10/16] 0.0, 128
    %530 = vxpose.xlu0.b32.cont [11/16] 0.0, 128
    %531 = vxpose.xlu0.b32.cont [12/16] 0.0, 128
    %532 = vxpose.xlu0.b32.cont [13/16] 0.0, 128
    %533 = vxpose.xlu0.b32.cont [14/16] 0.0, 128
    %534 = vxpose.xlu0.b32.cont [15/16] 0.0, 128
    %535 = vxpose.xlu0.b32.end [16/16] 0.0, 128
    %v536 = vpop.trf.xlu0
    %v537 = vpop.trf.xlu0
    %v538 = vpop.trf.xlu0
    %v539 = vpop.trf.xlu0
    %v540 = vpop.trf.xlu0
    %v541 = vpop.trf.xlu0
    %v542 = vpop.trf.xlu0
    %v543 = vpop.trf.xlu0
    %v544 = vpop.trf.xlu0
    %v545 = vpop.trf.xlu0
    %v546 = vpop.trf.xlu0
    %v547 = vpop.trf.xlu0
    %v548 = vpop.trf.xlu0
    %v549 = vpop.trf.xlu0
    %v550 = vpop.trf.xlu0
    %v551 = vpop.trf.xlu0
    %552 = vxpose.xlu0.b32.start [1/16] %v442, 128
    %553 = vxpose.xlu0.b32.cont [2/16] %v445, 128
    %554 = vxpose.xlu0.b32.cont [3/16] 0.0, 128
    %555 = vxpose.xlu0.b32.cont [4/16] 0.0, 128
    %556 = vxpose.xlu0.b32.cont [5/16] 0.0, 128
    %557 = vxpose.xlu0.b32.cont [6/16] 0.0, 128
    %558 = vxpose.xlu0.b32.cont [7/16] 0.0, 128
    %559 = vxpose.xlu0.b32.cont [8/16] 0.0, 128
    %560 = vxpose.xlu0.b32.cont [9/16] 0.0, 128
    %561 = vxpose.xlu0.b32.cont [10/16] 0.0, 128
    %562 = vxpose.xlu0.b32.cont [11/16] 0.0, 128
    %563 = vxpose.xlu0.b32.cont [12/16] 0.0, 128
    %564 = vxpose.xlu0.b32.cont [13/16] 0.0, 128
    %565 = vxpose.xlu0.b32.cont [14/16] 0.0, 128
    %566 = vxpose.xlu0.b32.cont [15/16] 0.0, 128
    %567 = vxpose.xlu0.b32.end [16/16] 0.0, 128
    %v568 = vpop.trf.xlu0
    %v569 = vpop.trf.xlu0
    %v570 = vpop.trf.xlu0
    %v571 = vpop.trf.xlu0
    %v572 = vpop.trf.xlu0
    %v573 = vpop.trf.xlu0
    %v574 = vpop.trf.xlu0
    %v575 = vpop.trf.xlu0
    %v576 = vpop.trf.xlu0
    %v577 = vpop.trf.xlu0
    %v578 = vpop.trf.xlu0
    %v579 = vpop.trf.xlu0
    %v580 = vpop.trf.xlu0
    %v581 = vpop.trf.xlu0
    %v582 = vpop.trf.xlu0
    %v583 = vpop.trf.xlu0
    %584 = vxpose.xlu0.b32.start [1/16] %v450, 128
    %585 = vxpose.xlu0.b32.cont [2/16] %v453, 128
    %586 = vxpose.xlu0.b32.cont [3/16] 0.0, 128
    %587 = vxpose.xlu0.b32.cont [4/16] 0.0, 128
    %588 = vxpose.xlu0.b32.cont [5/16] 0.0, 128
    %589 = vxpose.xlu0.b32.cont [6/16] 0.0, 128
    %590 = vxpose.xlu0.b32.cont [7/16] 0.0, 128
    %591 = vxpose.xlu0.b32.cont [8/16] 0.0, 128
    %592 = vxpose.xlu0.b32.cont [9/16] 0.0, 128
    %593 = vxpose.xlu0.b32.cont [10/16] 0.0, 128
    %594 = vxpose.xlu0.b32.cont [11/16] 0.0, 128
    %595 = vxpose.xlu0.b32.cont [12/16] 0.0, 128
    %596 = vxpose.xlu0.b32.cont [13/16] 0.0, 128
    %597 = vxpose.xlu0.b32.cont [14/16] 0.0, 128
    %598 = vxpose.xlu0.b32.cont [15/16] 0.0, 128
    %599 = vxpose.xlu0.b32.end [16/16] 0.0, 128
    %v600 = vpop.trf.xlu0
    %v601 = vpop.trf.xlu0
    %v602 = vpop.trf.xlu0
    %v603 = vpop.trf.xlu0
    %v604 = vpop.trf.xlu0
    %v605 = vpop.trf.xlu0
    %v606 = vpop.trf.xlu0
    %v607 = vpop.trf.xlu0
    %v608 = vpop.trf.xlu0
    %v609 = vpop.trf.xlu0
    %v610 = vpop.trf.xlu0
    %v611 = vpop.trf.xlu0
    %v612 = vpop.trf.xlu0
    %v613 = vpop.trf.xlu0
    %v614 = vpop.trf.xlu0
    %v615 = vpop.trf.xlu0
    %616 = vxpose.xlu0.b32.start [1/16] %v458, 128
    %617 = vxpose.xlu0.b32.cont [2/16] %v461, 128
    %618 = vxpose.xlu0.b32.cont [3/16] 0.0, 128
    %619 = vxpose.xlu0.b32.cont [4/16] 0.0, 128
    %620 = vxpose.xlu0.b32.cont [5/16] 0.0, 128
    %621 = vxpose.xlu0.b32.cont [6/16] 0.0, 128
    %622 = vxpose.xlu0.b32.cont [7/16] 0.0, 128
    %623 = vxpose.xlu0.b32.cont [8/16] 0.0, 128
    %624 = vxpose.xlu0.b32.cont [9/16] 0.0, 128
    %625 = vxpose.xlu0.b32.cont [10/16] 0.0, 128
    %626 = vxpose.xlu0.b32.cont [11/16] 0.0, 128
    %627 = vxpose.xlu0.b32.cont [12/16] 0.0, 128
    %628 = vxpose.xlu0.b32.cont [13/16] 0.0, 128
    %629 = vxpose.xlu0.b32.cont [14/16] 0.0, 128
    %630 = vxpose.xlu0.b32.cont [15/16] 0.0, 128
    %631 = vxpose.xlu0.b32.end [16/16] 0.0, 128
    %v632 = vpop.trf.xlu0
    %v633 = vpop.trf.xlu0
    %v634 = vpop.trf.xlu0
    %v635 = vpop.trf.xlu0
    %v636 = vpop.trf.xlu0
    %v637 = vpop.trf.xlu0
    %v638 = vpop.trf.xlu0
    %v639 = vpop.trf.xlu0
    %v640 = vpop.trf.xlu0
    %v641 = vpop.trf.xlu0
    %v642 = vpop.trf.xlu0
    %v643 = vpop.trf.xlu0
    %v644 = vpop.trf.xlu0
    %v645 = vpop.trf.xlu0
    %v646 = vpop.trf.xlu0
    %v647 = vpop.trf.xlu0
    %648 = vxpose.xlu0.b32.start [1/16] %v466, 128
    %649 = vxpose.xlu0.b32.cont [2/16] %v469, 128
    %650 = vxpose.xlu0.b32.cont [3/16] 0.0, 128
    %651 = vxpose.xlu0.b32.cont [4/16] 0.0, 128
    %652 = vxpose.xlu0.b32.cont [5/16] 0.0, 128
    %653 = vxpose.xlu0.b32.cont [6/16] 0.0, 128
    %654 = vxpose.xlu0.b32.cont [7/16] 0.0, 128
    %655 = vxpose.xlu0.b32.cont [8/16] 0.0, 128
    %656 = vxpose.xlu0.b32.cont [9/16] 0.0, 128
    %657 = vxpose.xlu0.b32.cont [10/16] 0.0, 128
    %658 = vxpose.xlu0.b32.cont [11/16] 0.0, 128
    %659 = vxpose.xlu0.b32.cont [12/16] 0.0, 128
    %660 = vxpose.xlu0.b32.cont [13/16] 0.0, 128
    %661 = vxpose.xlu0.b32.cont [14/16] 0.0, 128
    %662 = vxpose.xlu0.b32.cont [15/16] 0.0, 128
    %663 = vxpose.xlu0.b32.end [16/16] 0.0, 128
    %v664 = vpop.trf.xlu0
    %v665 = vpop.trf.xlu0
    %v666 = vpop.trf.xlu0
    %v667 = vpop.trf.xlu0
    %v668 = vpop.trf.xlu0
    %v669 = vpop.trf.xlu0
    %v670 = vpop.trf.xlu0
    %v671 = vpop.trf.xlu0
    %v672 = vpop.trf.xlu0
    %v673 = vpop.trf.xlu0
    %v674 = vpop.trf.xlu0
    %v675 = vpop.trf.xlu0
    %v676 = vpop.trf.xlu0
    %v677 = vpop.trf.xlu0
    %v678 = vpop.trf.xlu0
    %v679 = vpop.trf.xlu0
    %680 = vxpose.xlu0.b32.start [1/16] %v474, 128
    %681 = vxpose.xlu0.b32.cont [2/16] %v477, 128
    %682 = vxpose.xlu0.b32.cont [3/16] 0.0, 128
    %683 = vxpose.xlu0.b32.cont [4/16] 0.0, 128
    %684 = vxpose.xlu0.b32.cont [5/16] 0.0, 128
    %685 = vxpose.xlu0.b32.cont [6/16] 0.0, 128
    %686 = vxpose.xlu0.b32.cont [7/16] 0.0, 128
    %687 = vxpose.xlu0.b32.cont [8/16] 0.0, 128
    %688 = vxpose.xlu0.b32.cont [9/16] 0.0, 128
    %689 = vxpose.xlu0.b32.cont [10/16] 0.0, 128
    %690 = vxpose.xlu0.b32.cont [11/16] 0.0, 128
    %691 = vxpose.xlu0.b32.cont [12/16] 0.0, 128
    %692 = vxpose.xlu0.b32.cont [13/16] 0.0, 128
    %693 = vxpose.xlu0.b32.cont [14/16] 0.0, 128
    %694 = vxpose.xlu0.b32.cont [15/16] 0.0, 128
    %695 = vxpose.xlu0.b32.end [16/16] 0.0, 128
    %v696 = vpop.trf.xlu0
    %v697 = vpop.trf.xlu0
    %v698 = vpop.trf.xlu0
    %v699 = vpop.trf.xlu0
    %v700 = vpop.trf.xlu0
    %v701 = vpop.trf.xlu0
    %v702 = vpop.trf.xlu0
    %v703 = vpop.trf.xlu0
    %v704 = vpop.trf.xlu0
    %v705 = vpop.trf.xlu0
    %v706 = vpop.trf.xlu0
    %v707 = vpop.trf.xlu0
    %v708 = vpop.trf.xlu0
    %v709 = vpop.trf.xlu0
    %v710 = vpop.trf.xlu0
    %v711 = vpop.trf.xlu0
    %712 = vxpose.xlu0.b32.start [1/16] %v482, 128
    %713 = vxpose.xlu0.b32.cont [2/16] %v485, 128
    %714 = vxpose.xlu0.b32.cont [3/16] 0.0, 128
    %715 = vxpose.xlu0.b32.cont [4/16] 0.0, 128
    %716 = vxpose.xlu0.b32.cont [5/16] 0.0, 128
    %717 = vxpose.xlu0.b32.cont [6/16] 0.0, 128
    %718 = vxpose.xlu0.b32.cont [7/16] 0.0, 128
    %719 = vxpose.xlu0.b32.cont [8/16] 0.0, 128
    %720 = vxpose.xlu0.b32.cont [9/16] 0.0, 128
    %721 = vxpose.xlu0.b32.cont [10/16] 0.0, 128
    %722 = vxpose.xlu0.b32.cont [11/16] 0.0, 128
    %723 = vxpose.xlu0.b32.cont [12/16] 0.0, 128
    %724 = vxpose.xlu0.b32.cont [13/16] 0.0, 128
    %725 = vxpose.xlu0.b32.cont [14/16] 0.0, 128
    %726 = vxpose.xlu0.b32.cont [15/16] 0.0, 128
    %727 = vxpose.xlu0.b32.end [16/16] 0.0, 128
    %v728 = vpop.trf.xlu0
    %v729 = vpop.trf.xlu0
    %v730 = vpop.trf.xlu0
    %v731 = vpop.trf.xlu0
    %v732 = vpop.trf.xlu0
    %v733 = vpop.trf.xlu0
    %v734 = vpop.trf.xlu0
    %v735 = vpop.trf.xlu0
    %v736 = vpop.trf.xlu0
    %v737 = vpop.trf.xlu0
    %v738 = vpop.trf.xlu0
    %v739 = vpop.trf.xlu0
    %v740 = vpop.trf.xlu0
    %v741 = vpop.trf.xlu0
    %v742 = vpop.trf.xlu0
    %v743 = vpop.trf.xlu0
    %v744 = vsel %vm90, %v504, -inf
    %745 = vmax.xlane.f32.xlu0 %v744
    %v746 = vpop.xlane.xlu0 %745
    %v747 = vsel %vm90, %v505, -inf
    %748 = vmax.xlane.f32.xlu0 %v747
    %v749 = vpop.xlane.xlu0 %748
    %v750 = vsel %vm90, %v506, -inf
    %751 = vmax.xlane.f32.xlu0 %v750
    %v752 = vpop.xlane.xlu0 %751
    %v753 = vsel %vm90, %v507, -inf
    %754 = vmax.xlane.f32.xlu0 %v753
    %v755 = vpop.xlane.xlu0 %754
    %v756 = vsel %vm90, %v536, -inf
    %757 = vmax.xlane.f32.xlu0 %v756
    %v758 = vpop.xlane.xlu0 %757
    %v759 = vsel %vm90, %v537, -inf
    %760 = vmax.xlane.f32.xlu0 %v759
    %v761 = vpop.xlane.xlu0 %760
    %v762 = vsel %vm90, %v538, -inf
    %763 = vmax.xlane.f32.xlu0 %v762
    %v764 = vpop.xlane.xlu0 %763
    %v765 = vsel %vm90, %v539, -inf
    %766 = vmax.xlane.f32.xlu0 %v765
    %v767 = vpop.xlane.xlu0 %766
    %v768 = vsel %vm90, %v568, -inf
    %769 = vmax.xlane.f32.xlu0 %v768
    %v770 = vpop.xlane.xlu0 %769
    %v771 = vsel %vm90, %v569, -inf
    %772 = vmax.xlane.f32.xlu0 %v771
    %v773 = vpop.xlane.xlu0 %772
    %v774 = vsel %vm90, %v570, -inf
    %775 = vmax.xlane.f32.xlu0 %v774
    %v776 = vpop.xlane.xlu0 %775
    %v777 = vsel %vm90, %v571, -inf
    %778 = vmax.xlane.f32.xlu0 %v777
    %v779 = vpop.xlane.xlu0 %778
    %v780 = vsel %vm90, %v600, -inf
    %781 = vmax.xlane.f32.xlu0 %v780
    %v782 = vpop.xlane.xlu0 %781
    %v783 = vsel %vm90, %v601, -inf
    %784 = vmax.xlane.f32.xlu0 %v783
    %v785 = vpop.xlane.xlu0 %784
    %v786 = vsel %vm90, %v602, -inf
    %787 = vmax.xlane.f32.xlu0 %v786
    %v788 = vpop.xlane.xlu0 %787
    %v789 = vsel %vm90, %v603, -inf
    %790 = vmax.xlane.f32.xlu0 %v789
    %v791 = vpop.xlane.xlu0 %790
    %v792 = vsel %vm90, %v632, -inf
    %793 = vmax.xlane.f32.xlu0 %v792
    %v794 = vpop.xlane.xlu0 %793
    %v795 = vsel %vm90, %v633, -inf
    %796 = vmax.xlane.f32.xlu0 %v795
    %v797 = vpop.xlane.xlu0 %796
    %v798 = vsel %vm90, %v634, -inf
    %799 = vmax.xlane.f32.xlu0 %v798
    %v800 = vpop.xlane.xlu0 %799
    %v801 = vsel %vm90, %v635, -inf
    %802 = vmax.xlane.f32.xlu0 %v801
    %v803 = vpop.xlane.xlu0 %802
    %v804 = vsel %vm90, %v664, -inf
    %805 = vmax.xlane.f32.xlu0 %v804
    %v806 = vpop.xlane.xlu0 %805
    %v807 = vsel %vm90, %v665, -inf
    %808 = vmax.xlane.f32.xlu0 %v807
    %v809 = vpop.xlane.xlu0 %808
    %v810 = vsel %vm90, %v666, -inf
    %811 = vmax.xlane.f32.xlu0 %v810
    %v812 = vpop.xlane.xlu0 %811
    %v813 = vsel %vm90, %v667, -inf
    %814 = vmax.xlane.f32.xlu0 %v813
    %v815 = vpop.xlane.xlu0 %814
    %v816 = vsel %vm90, %v696, -inf
    %817 = vmax.xlane.f32.xlu0 %v816
    %v818 = vpop.xlane.xlu0 %817
    %v819 = vsel %vm90, %v697, -inf
    %820 = vmax.xlane.f32.xlu0 %v819
    %v821 = vpop.xlane.xlu0 %820
    %v822 = vsel %vm90, %v698, -inf
    %823 = vmax.xlane.f32.xlu0 %v822
    %v824 = vpop.xlane.xlu0 %823
    %v825 = vsel %vm90, %v699, -inf
    %826 = vmax.xlane.f32.xlu0 %v825
    %v827 = vpop.xlane.xlu0 %826
    %v828 = vsel %vm90, %v728, -inf
    %829 = vmax.xlane.f32.xlu0 %v828
    %v830 = vpop.xlane.xlu0 %829
    %v831 = vsel %vm90, %v729, -inf
    %832 = vmax.xlane.f32.xlu0 %v831
    %v833 = vpop.xlane.xlu0 %832
    %v834 = vsel %vm90, %v730, -inf
    %835 = vmax.xlane.f32.xlu0 %v834
    %v836 = vpop.xlane.xlu0 %835
    %v837 = vsel %vm90, %v731, -inf
    %838 = vmax.xlane.f32.xlu0 %v837
    %v839 = vpop.xlane.xlu0 %838
    %v840 = vsub.f32 %v504, %v746
    %v841 = vsub.f32 %v505, %v749
    %v842 = vsub.f32 %v506, %v752
    %v843 = vsub.f32 %v507, %v755
    %v844 = vsub.f32 %v536, %v758
    %v845 = vsub.f32 %v537, %v761
    %v846 = vsub.f32 %v538, %v764
    %v847 = vsub.f32 %v539, %v767
    %v848 = vsub.f32 %v568, %v770
    %v849 = vsub.f32 %v569, %v773
    %v850 = vsub.f32 %v570, %v776
    %v851 = vsub.f32 %v571, %v779
    %v852 = vsub.f32 %v600, %v782
    %v853 = vsub.f32 %v601, %v785
    %v854 = vsub.f32 %v602, %v788
    %v855 = vsub.f32 %v603, %v791
    %v856 = vsub.f32 %v632, %v794
    %v857 = vsub.f32 %v633, %v797
    %v858 = vsub.f32 %v634, %v800
    %v859 = vsub.f32 %v635, %v803
    %v860 = vsub.f32 %v664, %v806
    %v861 = vsub.f32 %v665, %v809
    %v862 = vsub.f32 %v666, %v812
    %v863 = vsub.f32 %v667, %v815
    %v864 = vsub.f32 %v696, %v818
    %v865 = vsub.f32 %v697, %v821
    %v866 = vsub.f32 %v698, %v824
    %v867 = vsub.f32 %v699, %v827
    %v868 = vsub.f32 %v728, %v830
    %v869 = vsub.f32 %v729, %v833
    %v870 = vsub.f32 %v730, %v836
    %v871 = vsub.f32 %v731, %v839
    %v872 = vmul.f32 %v840, 1.442695
    %v873 = vpow.pop %v872
    %v874 = vmul.f32 %v841, 1.442695
    %v875 = vpow.pop %v874
    %v876 = vmul.f32 %v842, 1.442695
    %v877 = vpow.pop %v876
    %v878 = vmul.f32 %v843, 1.442695
    %v879 = vpow.pop %v878
    %v880 = vmul.f32 %v844, 1.442695
    %v881 = vpow.pop %v880
    %v882 = vmul.f32 %v845, 1.442695
    %v883 = vpow.pop %v882
    %v884 = vmul.f32 %v846, 1.442695
    %v885 = vpow.pop %v884
    %v886 = vmul.f32 %v847, 1.442695
    %v887 = vpow.pop %v886
    %v888 = vmul.f32 %v848, 1.442695
    %v889 = vpow.pop %v888
    %v890 = vmul.f32 %v849, 1.442695
    %v891 = vpow.pop %v890
    %v892 = vmul.f32 %v850, 1.442695
    %v893 = vpow.pop %v892
    %v894 = vmul.f32 %v851, 1.442695
    %v895 = vpow.pop %v894
    %v896 = vmul.f32 %v852, 1.442695
    %v897 = vpow.pop %v896
    %v898 = vmul.f32 %v853, 1.442695
    %v899 = vpow.pop %v898
    %v900 = vmul.f32 %v854, 1.442695
    %v901 = vpow.pop %v900
    %v902 = vmul.f32 %v855, 1.442695
    %v903 = vpow.pop %v902
    %v904 = vmul.f32 %v856, 1.442695
    %v905 = vpow.pop %v904
    %v906 = vmul.f32 %v857, 1.442695
    %v907 = vpow.pop %v906
    %v908 = vmul.f32 %v858, 1.442695
    %v909 = vpow.pop %v908
    %v910 = vmul.f32 %v859, 1.442695
    %v911 = vpow.pop %v910
    %v912 = vmul.f32 %v860, 1.442695
    %v913 = vpow.pop %v912
    %v914 = vmul.f32 %v861, 1.442695
    %v915 = vpow.pop %v914
    %v916 = vmul.f32 %v862, 1.442695
    %v917 = vpow.pop %v916
    %v918 = vmul.f32 %v863, 1.442695
    %v919 = vpow.pop %v918
    %v920 = vmul.f32 %v864, 1.442695
    %v921 = vpow.pop %v920
    %v922 = vmul.f32 %v865, 1.442695
    %v923 = vpow.pop %v922
    %v924 = vmul.f32 %v866, 1.442695
    %v925 = vpow.pop %v924
    %v926 = vmul.f32 %v867, 1.442695
    %v927 = vpow.pop %v926
    %v928 = vmul.f32 %v868, 1.442695
    %v929 = vpow.pop %v928
    %v930 = vmul.f32 %v869, 1.442695
    %v931 = vpow.pop %v930
    %v932 = vmul.f32 %v870, 1.442695
    %v933 = vpow.pop %v932
    %v934 = vmul.f32 %v871, 1.442695
    %v935 = vpow.pop %v934
    %v936 = vsel %vm90, %v873, 0.0
    %937 = vadd.xlane.f32.xlu0 %v936
    %v938 = vpop.xlane.xlu0 %937
    %v939 = vsel %vm90, %v875, 0.0
    %940 = vadd.xlane.f32.xlu0 %v939
    %v941 = vpop.xlane.xlu0 %940
    %v942 = vsel %vm90, %v877, 0.0
    %943 = vadd.xlane.f32.xlu0 %v942
    %v944 = vpop.xlane.xlu0 %943
    %v945 = vsel %vm90, %v879, 0.0
    %946 = vadd.xlane.f32.xlu0 %v945
    %v947 = vpop.xlane.xlu0 %946
    %v948 = vsel %vm90, %v881, 0.0
    %949 = vadd.xlane.f32.xlu0 %v948
    %v950 = vpop.xlane.xlu0 %949
    %v951 = vsel %vm90, %v883, 0.0
    %952 = vadd.xlane.f32.xlu0 %v951
    %v953 = vpop.xlane.xlu0 %952
    %v954 = vsel %vm90, %v885, 0.0
    %955 = vadd.xlane.f32.xlu0 %v954
    %v956 = vpop.xlane.xlu0 %955
    %v957 = vsel %vm90, %v887, 0.0
    %958 = vadd.xlane.f32.xlu0 %v957
    %v959 = vpop.xlane.xlu0 %958
    %v960 = vsel %vm90, %v889, 0.0
    %961 = vadd.xlane.f32.xlu0 %v960
    %v962 = vpop.xlane.xlu0 %961
    %v963 = vsel %vm90, %v891, 0.0
    %964 = vadd.xlane.f32.xlu0 %v963
    %v965 = vpop.xlane.xlu0 %964
    %v966 = vsel %vm90, %v893, 0.0
    %967 = vadd.xlane.f32.xlu0 %v966
    %v968 = vpop.xlane.xlu0 %967
    %v969 = vsel %vm90, %v895, 0.0
    %970 = vadd.xlane.f32.xlu0 %v969
    %v971 = vpop.xlane.xlu0 %970
    %v972 = vsel %vm90, %v897, 0.0
    %973 = vadd.xlane.f32.xlu0 %v972
    %v974 = vpop.xlane.xlu0 %973
    %v975 = vsel %vm90, %v899, 0.0
    %976 = vadd.xlane.f32.xlu0 %v975
    %v977 = vpop.xlane.xlu0 %976
    %v978 = vsel %vm90, %v901, 0.0
    %979 = vadd.xlane.f32.xlu0 %v978
    %v980 = vpop.xlane.xlu0 %979
    %v981 = vsel %vm90, %v903, 0.0
    %982 = vadd.xlane.f32.xlu0 %v981
    %v983 = vpop.xlane.xlu0 %982
    %v984 = vsel %vm90, %v905, 0.0
    %985 = vadd.xlane.f32.xlu0 %v984
    %v986 = vpop.xlane.xlu0 %985
    %v987 = vsel %vm90, %v907, 0.0
    %988 = vadd.xlane.f32.xlu0 %v987
    %v989 = vpop.xlane.xlu0 %988
    %v990 = vsel %vm90, %v909, 0.0
    %991 = vadd.xlane.f32.xlu0 %v990
    %v992 = vpop.xlane.xlu0 %991
    %v993 = vsel %vm90, %v911, 0.0
    %994 = vadd.xlane.f32.xlu0 %v993
    %v995 = vpop.xlane.xlu0 %994
    %v996 = vsel %vm90, %v913, 0.0
    %997 = vadd.xlane.f32.xlu0 %v996
    %v998 = vpop.xlane.xlu0 %997
    %v999 = vsel %vm90, %v915, 0.0
    %1000 = vadd.xlane.f32.xlu0 %v999
    %v1001 = vpop.xlane.xlu0 %1000
    %v1002 = vsel %vm90, %v917, 0.0
    %1003 = vadd.xlane.f32.xlu0 %v1002
    %v1004 = vpop.xlane.xlu0 %1003
    %v1005 = vsel %vm90, %v919, 0.0
    %1006 = vadd.xlane.f32.xlu0 %v1005
    %v1007 = vpop.xlane.xlu0 %1006
    %v1008 = vsel %vm90, %v921, 0.0
    %1009 = vadd.xlane.f32.xlu0 %v1008
    %v1010 = vpop.xlane.xlu0 %1009
    %v1011 = vsel %vm90, %v923, 0.0
    %1012 = vadd.xlane.f32.xlu0 %v1011
    %v1013 = vpop.xlane.xlu0 %1012
    %v1014 = vsel %vm90, %v925, 0.0
    %1015 = vadd.xlane.f32.xlu0 %v1014
    %v1016 = vpop.xlane.xlu0 %1015
    %v1017 = vsel %vm90, %v927, 0.0
    %1018 = vadd.xlane.f32.xlu0 %v1017
    %v1019 = vpop.xlane.xlu0 %1018
    %v1020 = vsel %vm90, %v929, 0.0
    %1021 = vadd.xlane.f32.xlu0 %v1020
    %v1022 = vpop.xlane.xlu0 %1021
    %v1023 = vsel %vm90, %v931, 0.0
    %1024 = vadd.xlane.f32.xlu0 %v1023
    %v1025 = vpop.xlane.xlu0 %1024
    %v1026 = vsel %vm90, %v933, 0.0
    %1027 = vadd.xlane.f32.xlu0 %v1026
    %v1028 = vpop.xlane.xlu0 %1027
    %v1029 = vsel %vm90, %v935, 0.0
    %1030 = vadd.xlane.f32.xlu0 %v1029
    %v1031 = vpop.xlane.xlu0 %1030
    %v1032 = vrcp.pop %v938
    %v1033 = vrcp.pop %v941
    %v1034 = vrcp.pop %v944
    %v1035 = vrcp.pop %v947
    %v1036 = vrcp.pop %v950
    %v1037 = vrcp.pop %v953
    %v1038 = vrcp.pop %v956
    %v1039 = vrcp.pop %v959
    %v1040 = vrcp.pop %v962
    %v1041 = vrcp.pop %v965
    %v1042 = vrcp.pop %v968
    %v1043 = vrcp.pop %v971
    %v1044 = vrcp.pop %v974
    %v1045 = vrcp.pop %v977
    %v1046 = vrcp.pop %v980
    %v1047 = vrcp.pop %v983
    %v1048 = vrcp.pop %v986
    %v1049 = vrcp.pop %v989
    %v1050 = vrcp.pop %v992
    %v1051 = vrcp.pop %v995
    %v1052 = vrcp.pop %v998
    %v1053 = vrcp.pop %v1001
    %v1054 = vrcp.pop %v1004
    %v1055 = vrcp.pop %v1007
    %v1056 = vrcp.pop %v1010
    %v1057 = vrcp.pop %v1013
    %v1058 = vrcp.pop %v1016
    %v1059 = vrcp.pop %v1019
    %v1060 = vrcp.pop %v1022
    %v1061 = vrcp.pop %v1025
    %v1062 = vrcp.pop %v1028
    %v1063 = vrcp.pop %v1031
    %v1064 = vmul.f32 %v873, %v1032
    %v1065 = vmul.f32 %v875, %v1033
    %v1066 = vmul.f32 %v877, %v1034
    %v1067 = vmul.f32 %v879, %v1035
    %v1068 = vmul.f32 %v881, %v1036
    %v1069 = vmul.f32 %v883, %v1037
    %v1070 = vmul.f32 %v885, %v1038
    %v1071 = vmul.f32 %v887, %v1039
    %v1072 = vmul.f32 %v889, %v1040
    %v1073 = vmul.f32 %v891, %v1041
    %v1074 = vmul.f32 %v893, %v1042
    %v1075 = vmul.f32 %v895, %v1043
    %v1076 = vmul.f32 %v897, %v1044
    %v1077 = vmul.f32 %v899, %v1045
    %v1078 = vmul.f32 %v901, %v1046
    %v1079 = vmul.f32 %v903, %v1047
    %v1080 = vmul.f32 %v905, %v1048
    %v1081 = vmul.f32 %v907, %v1049
    %v1082 = vmul.f32 %v909, %v1050
    %v1083 = vmul.f32 %v911, %v1051
    %v1084 = vmul.f32 %v913, %v1052
    %v1085 = vmul.f32 %v915, %v1053
    %v1086 = vmul.f32 %v917, %v1054
    %v1087 = vmul.f32 %v919, %v1055
    %v1088 = vmul.f32 %v921, %v1056
    %v1089 = vmul.f32 %v923, %v1057
    %v1090 = vmul.f32 %v925, %v1058
    %v1091 = vmul.f32 %v927, %v1059
    %v1092 = vmul.f32 %v929, %v1060
    %v1093 = vmul.f32 %v931, %v1061
    %v1094 = vmul.f32 %v933, %v1062
    %v1095 = vmul.f32 %v935, %v1063
    %v1096 = vld [vmem:[%s5] sm:$0xf]
    %v1097 = vld [vmem:[%s5 + $0x4] sm:$0xf]
    %v1098 = vld [vmem:[%s6] sm:$0x1]
    %v1100 = vlaneseq
    %v1101 = vshrl.u32 %v1100, 7
    %v1102 = vsub.s32 0, %v1101
    %v1103 = vrot.slane %v1098, %v1102
    %v1107 = vunpack.c.l.b16 %v1096
    %v1108 = vunpack.c.l.b16 %v1097
    %v1109 = vpack.c.b16 %v1108, %v1107
    %1111 = vmatprep.subr.bf16.mxu0 0
    %1112 = vmatpush1.bf16.msra.mxu0 %v1109
    %1113 = vmatprep.subr.bf16.mxu0 0
    %1114 = vmatpush1.bf16.msra.mxu0 0
    %1115 = vmatprep.subr.bf16.mxu0 0
    %1116 = vmatpush1.bf16.msra.mxu0 0
    %1117 = vmatprep.subr.bf16.mxu0 0
    %1118 = vmatpush1.bf16.msra.mxu0 0
    %1119 = vmatprep.subr.bf16.mxu0 0
    %1120 = vmatpush1.bf16.msra.mxu0 0
    %1121 = vmatprep.subr.bf16.mxu0 0
    %1122 = vmatpush1.bf16.msra.mxu0 0
    %1123 = vmatprep.subr.bf16.mxu0 0
    %1124 = vmatpush1.bf16.msra.mxu0 0
    %1125 = vmatprep.subr.bf16.mxu0 0
    %1126 = vmatpush1.bf16.msra.mxu0 0
    %1127 = vmatprep.subr.bf16.mxu0 0
    %1128 = vmatpush1.bf16.msra.mxu0 0
    %1129 = vmatprep.subr.bf16.mxu0 0
    %1130 = vmatpush1.bf16.msra.mxu0 0
    %1131 = vmatprep.subr.bf16.mxu0 0
    %1132 = vmatpush1.bf16.msra.mxu0 0
    %1133 = vmatprep.subr.bf16.mxu0 0
    %1134 = vmatpush1.bf16.msra.mxu0 0
    %1135 = vmatprep.subr.bf16.mxu0 0
    %1136 = vmatpush1.bf16.msra.mxu0 0
    %1137 = vmatprep.subr.bf16.mxu0 0
    %1138 = vmatpush1.bf16.msra.mxu0 0
    %1139 = vmatprep.subr.bf16.mxu0 0
    %1140 = vmatpush1.bf16.msra.mxu0 0
    %1141 = vmatprep.subr.bf16.mxu0 0
    %1142 = vmatpush1.bf16.msra.mxu0 0
    %1143 = vmatprep.mubr.bf16.mxu0 0
    %1144 = vmatmul.mubr.bf16.gmra.mrb[0].mxu0 %v368
    %v1145 = vpop.f32.mrb[0].mxu0
    %v1146 = vadd.f32 %v1103, %v1145
    %v1147 = vpop.f32.mrb[0].mxu0
    %v1148 = vpop.f32.mrb[0].mxu0
    %v1149 = vadd.f32 %v1103, %v1148
    %v1150 = vpop.f32.mrb[0].mxu0
    %1151 = vmatprep.mubr.bf16.mxu0 0
    %1152 = vmatmul.mubr.bf16.gmra.mrb[0].mxu0 %v371
    %v1153 = vpop.f32.mrb[0].mxu0
    %v1154 = vadd.f32 %v1103, %v1153
    %v1155 = vpop.f32.mrb[0].mxu0
    %v1156 = vpop.f32.mrb[0].mxu0
    %v1157 = vadd.f32 %v1103, %v1156
    %v1158 = vpop.f32.mrb[0].mxu0
    %1159 = vmatprep.mubr.bf16.mxu0 0
    %1160 = vmatmul.mubr.bf16.gmra.mrb[0].mxu0 %v374
    %v1161 = vpop.f32.mrb[0].mxu0
    %v1162 = vadd.f32 %v1103, %v1161
    %v1163 = vpop.f32.mrb[0].mxu0
    %v1164 = vpop.f32.mrb[0].mxu0
    %v1165 = vadd.f32 %v1103, %v1164
    %v1166 = vpop.f32.mrb[0].mxu0
    %1167 = vmatprep.mubr.bf16.mxu0 0
    %1168 = vmatmul.mubr.bf16.gmra.mrb[0].mxu0 %v377
    %v1169 = vpop.f32.mrb[0].mxu0
    %v1170 = vadd.f32 %v1103, %v1169
    %v1171 = vpop.f32.mrb[0].mxu0
    %v1172 = vpop.f32.mrb[0].mxu0
    %v1173 = vadd.f32 %v1103, %v1172
    %v1174 = vpop.f32.mrb[0].mxu0
    %1175 = vmatprep.mubr.bf16.mxu0 0
    %1176 = vmatmul.mubr.bf16.gmra.mrb[0].mxu0 %v380
    %v1177 = vpop.f32.mrb[0].mxu0
    %v1178 = vadd.f32 %v1103, %v1177
    %v1179 = vpop.f32.mrb[0].mxu0
    %v1180 = vpop.f32.mrb[0].mxu0
    %v1181 = vadd.f32 %v1103, %v1180
    %v1182 = vpop.f32.mrb[0].mxu0
    %1183 = vmatprep.mubr.bf16.mxu0 0
    %1184 = vmatmul.mubr.bf16.gmra.mrb[0].mxu0 %v383
    %v1185 = vpop.f32.mrb[0].mxu0
    %v1186 = vadd.f32 %v1103, %v1185
    %v1187 = vpop.f32.mrb[0].mxu0
    %v1188 = vpop.f32.mrb[0].mxu0
    %v1189 = vadd.f32 %v1103, %v1188
    %v1190 = vpop.f32.mrb[0].mxu0
    %1191 = vmatprep.mubr.bf16.mxu0 0
    %1192 = vmatmul.mubr.bf16.gmra.mrb[0].mxu0 %v386
    %v1193 = vpop.f32.mrb[0].mxu0
    %v1194 = vadd.f32 %v1103, %v1193
    %v1195 = vpop.f32.mrb[0].mxu0
    %v1196 = vpop.f32.mrb[0].mxu0
    %v1197 = vadd.f32 %v1103, %v1196
    %v1198 = vpop.f32.mrb[0].mxu0
    %1199 = vmatprep.mubr.bf16.mxu0 0
    %1200 = vmatmul.mubr.bf16.gmra.mrb[0].mxu0 %v389
    %v1201 = vpop.f32.mrb[0].mxu0
    %v1202 = vadd.f32 %v1103, %v1201
    %v1203 = vpop.f32.mrb[0].mxu0
    %v1204 = vpop.f32.mrb[0].mxu0
    %v1205 = vadd.f32 %v1103, %v1204
    %v1206 = vpop.f32.mrb[0].mxu0
    %1207 = vdwg.mxu0
    %v1208 = vpack.c.bf16 %v1149, %v1146
    %v1209 = vpack.c.bf16 %v1157, %v1154
    %v1210 = vpack.c.bf16 %v1165, %v1162
    %v1211 = vpack.c.bf16 %v1173, %v1170
    %v1212 = vpack.c.bf16 %v1181, %v1178
    %v1213 = vpack.c.bf16 %v1189, %v1186
    %v1214 = vpack.c.bf16 %v1197, %v1194
    %v1215 = vpack.c.bf16 %v1205, %v1202
    %v1216 = vpack.c.bf16 %v1064, %v1064
    %v1217 = vpack.c.bf16 %v1068, %v1068
    %v1218 = vpack.c.bf16 %v1072, %v1072
    %v1219 = vpack.c.bf16 %v1076, %v1076
    %v1220 = vpack.c.bf16 %v1080, %v1080
    %v1221 = vpack.c.bf16 %v1084, %v1084
    %v1222 = vpack.c.bf16 %v1088, %v1088
    %v1223 = vpack.c.bf16 %v1092, %v1092
    %v1225 = vsel %vm90, %v1216, 0
    %1227 = vmatprep.subr.bf16.mxu0 0
    %1228 = vmatpush1.bf16.msra.mxu0 %v1208
    %1229 = vmatprep.subr.bf16.mxu0 0
    %1230 = vmatpush1.bf16.msra.mxu0 0
    %1231 = vmatprep.subr.bf16.mxu0 0
    %1232 = vmatpush1.bf16.msra.mxu0 0
    %1233 = vmatprep.subr.bf16.mxu0 0
    %1234 = vmatpush1.bf16.msra.mxu0 0
    %1235 = vmatprep.subr.bf16.mxu0 0
    %1236 = vmatpush1.bf16.msra.mxu0 0
    %1237 = vmatprep.subr.bf16.mxu0 0
    %1238 = vmatpush1.bf16.msra.mxu0 0
    %1239 = vmatprep.subr.bf16.mxu0 0
    %1240 = vmatpush1.bf16.msra.mxu0 0
    %1241 = vmatprep.subr.bf16.mxu0 0
    %1242 = vmatpush1.bf16.msra.mxu0 0
    %1243 = vmatprep.subr.bf16.mxu0 0
    %1244 = vmatpush1.bf16.msra.mxu0 0
    %1245 = vmatprep.subr.bf16.mxu0 0
    %1246 = vmatpush1.bf16.msra.mxu0 0
    %1247 = vmatprep.subr.bf16.mxu0 0
    %1248 = vmatpush1.bf16.msra.mxu0 0
    %1249 = vmatprep.subr.bf16.mxu0 0
    %1250 = vmatpush1.bf16.msra.mxu0 0
    %1251 = vmatprep.subr.bf16.mxu0 0
    %1252 = vmatpush1.bf16.msra.mxu0 0
    %1253 = vmatprep.subr.bf16.mxu0 0
    %1254 = vmatpush1.bf16.msra.mxu0 0
    %1255 = vmatprep.subr.bf16.mxu0 0
    %1256 = vmatpush1.bf16.msra.mxu0 0
    %1257 = vmatprep.subr.bf16.mxu0 0
    %1258 = vmatpush1.bf16.msra.mxu0 0
    %1259 = vmatprep.mubr.bf16.mxu0 0
    %1260 = vmatmul.mubr.bf16.gmra.mrb[0].mxu0 %v1225
    %v1261 = vpop.f32.mrb[0].mxu0
    %v1262 = vadd.f32 0.0, %v1261
    %v1263 = vpop.f32.mrb[0].mxu0
    %v1264 = vpop.f32.mrb[0].mxu0
    %v1265 = vpop.f32.mrb[0].mxu0
    %1266 = vdwg.mxu0
    %v1268 = vsel %vm90, %v1217, 0
    %1270 = vmatprep.subr.bf16.mxu0 0
    %1271 = vmatpush1.bf16.msra.mxu0 %v1209
    %1272 = vmatprep.subr.bf16.mxu0 0
    %1273 = vmatpush1.bf16.msra.mxu0 0
    %1274 = vmatprep.subr.bf16.mxu0 0
    %1275 = vmatpush1.bf16.msra.mxu0 0
    %1276 = vmatprep.subr.bf16.mxu0 0
    %1277 = vmatpush1.bf16.msra.mxu0 0
    %1278 = vmatprep.subr.bf16.mxu0 0
    %1279 = vmatpush1.bf16.msra.mxu0 0
    %1280 = vmatprep.subr.bf16.mxu0 0
    %1281 = vmatpush1.bf16.msra.mxu0 0
    %1282 = vmatprep.subr.bf16.mxu0 0
    %1283 = vmatpush1.bf16.msra.mxu0 0
    %1284 = vmatprep.subr.bf16.mxu0 0
    %1285 = vmatpush1.bf16.msra.mxu0 0
    %1286 = vmatprep.subr.bf16.mxu0 0
    %1287 = vmatpush1.bf16.msra.mxu0 0
    %1288 = vmatprep.subr.bf16.mxu0 0
    %1289 = vmatpush1.bf16.msra.mxu0 0
    %1290 = vmatprep.subr.bf16.mxu0 0
    %1291 = vmatpush1.bf16.msra.mxu0 0
    %1292 = vmatprep.subr.bf16.mxu0 0
    %1293 = vmatpush1.bf16.msra.mxu0 0
    %1294 = vmatprep.subr.bf16.mxu0 0
    %1295 = vmatpush1.bf16.msra.mxu0 0
    %1296 = vmatprep.subr.bf16.mxu0 0
    %1297 = vmatpush1.bf16.msra.mxu0 0
    %1298 = vmatprep.subr.bf16.mxu0 0
    %1299 = vmatpush1.bf16.msra.mxu0 0
    %1300 = vmatprep.subr.bf16.mxu0 0
    %1301 = vmatpush1.bf16.msra.mxu0 0
    %1302 = vmatprep.mubr.bf16.mxu0 0
    %1303 = vmatmul.mubr.bf16.gmra.mrb[0].mxu0 %v1268
    %v1304 = vpop.f32.mrb[0].mxu0
    %v1305 = vadd.f32 0.0, %v1304
    %v1306 = vpop.f32.mrb[0].mxu0
    %v1307 = vpop.f32.mrb[0].mxu0
    %v1308 = vpop.f32.mrb[0].mxu0
    %1309 = vdwg.mxu0
    %v1311 = vsel %vm90, %v1218, 0
    %1313 = vmatprep.subr.bf16.mxu0 0
    %1314 = vmatpush1.bf16.msra.mxu0 %v1210
    %1315 = vmatprep.subr.bf16.mxu0 0
    %1316 = vmatpush1.bf16.msra.mxu0 0
    %1317 = vmatprep.subr.bf16.mxu0 0
    %1318 = vmatpush1.bf16.msra.mxu0 0
    %1319 = vmatprep.subr.bf16.mxu0 0
    %1320 = vmatpush1.bf16.msra.mxu0 0
    %1321 = vmatprep.subr.bf16.mxu0 0
    %1322 = vmatpush1.bf16.msra.mxu0 0
    %1323 = vmatprep.subr.bf16.mxu0 0
    %1324 = vmatpush1.bf16.msra.mxu0 0
    %1325 = vmatprep.subr.bf16.mxu0 0
    %1326 = vmatpush1.bf16.msra.mxu0 0
    %1327 = vmatprep.subr.bf16.mxu0 0
    %1328 = vmatpush1.bf16.msra.mxu0 0
    %1329 = vmatprep.subr.bf16.mxu0 0
    %1330 = vmatpush1.bf16.msra.mxu0 0
    %1331 = vmatprep.subr.bf16.mxu0 0
    %1332 = vmatpush1.bf16.msra.mxu0 0
    %1333 = vmatprep.subr.bf16.mxu0 0
    %1334 = vmatpush1.bf16.msra.mxu0 0
    %1335 = vmatprep.subr.bf16.mxu0 0
    %1336 = vmatpush1.bf16.msra.mxu0 0
    %1337 = vmatprep.subr.bf16.mxu0 0
    %1338 = vmatpush1.bf16.msra.mxu0 0
    %1339 = vmatprep.subr.bf16.mxu0 0
    %1340 = vmatpush1.bf16.msra.mxu0 0
    %1341 = vmatprep.subr.bf16.mxu0 0
    %1342 = vmatpush1.bf16.msra.mxu0 0
    %1343 = vmatprep.subr.bf16.mxu0 0
    %1344 = vmatpush1.bf16.msra.mxu0 0
    %1345 = vmatprep.mubr.bf16.mxu0 0
    %1346 = vmatmul.mubr.bf16.gmra.mrb[0].mxu0 %v1311
    %v1347 = vpop.f32.mrb[0].mxu0
    %v1348 = vadd.f32 0.0, %v1347
    %v1349 = vpop.f32.mrb[0].mxu0
    %v1350 = vpop.f32.mrb[0].mxu0
    %v1351 = vpop.f32.mrb[0].mxu0
    %1352 = vdwg.mxu0
    %v1354 = vsel %vm90, %v1219, 0
    %1356 = vmatprep.subr.bf16.mxu0 0
    %1357 = vmatpush1.bf16.msra.mxu0 %v1211
    %1358 = vmatprep.subr.bf16.mxu0 0
    %1359 = vmatpush1.bf16.msra.mxu0 0
    %1360 = vmatprep.subr.bf16.mxu0 0
    %1361 = vmatpush1.bf16.msra.mxu0 0
    %1362 = vmatprep.subr.bf16.mxu0 0
    %1363 = vmatpush1.bf16.msra.mxu0 0
    %1364 = vmatprep.subr.bf16.mxu0 0
    %1365 = vmatpush1.bf16.msra.mxu0 0
    %1366 = vmatprep.subr.bf16.mxu0 0
    %1367 = vmatpush1.bf16.msra.mxu0 0
    %1368 = vmatprep.subr.bf16.mxu0 0
    %1369 = vmatpush1.bf16.msra.mxu0 0
    %1370 = vmatprep.subr.bf16.mxu0 0
    %1371 = vmatpush1.bf16.msra.mxu0 0
    %1372 = vmatprep.subr.bf16.mxu0 0
    %1373 = vmatpush1.bf16.msra.mxu0 0
    %1374 = vmatprep.subr.bf16.mxu0 0
    %1375 = vmatpush1.bf16.msra.mxu0 0
    %1376 = vmatprep.subr.bf16.mxu0 0
    %1377 = vmatpush1.bf16.msra.mxu0 0
    %1378 = vmatprep.subr.bf16.mxu0 0
    %1379 = vmatpush1.bf16.msra.mxu0 0
    %1380 = vmatprep.subr.bf16.mxu0 0
    %1381 = vmatpush1.bf16.msra.mxu0 0
    %1382 = vmatprep.subr.bf16.mxu0 0
    %1383 = vmatpush1.bf16.msra.mxu0 0
    %1384 = vmatprep.subr.bf16.mxu0 0
    %1385 = vmatpush1.bf16.msra.mxu0 0
    %1386 = vmatprep.subr.bf16.mxu0 0
    %1387 = vmatpush1.bf16.msra.mxu0 0
    %1388 = vmatprep.mubr.bf16.mxu0 0
    %1389 = vmatmul.mubr.bf16.gmra.mrb[0].mxu0 %v1354
    %v1390 = vpop.f32.mrb[0].mxu0
    %v1391 = vadd.f32 0.0, %v1390
    %v1392 = vpop.f32.mrb[0].mxu0
    %v1393 = vpop.f32.mrb[0].mxu0
    %v1394 = vpop.f32.mrb[0].mxu0
    %1395 = vdwg.mxu0
    %v1397 = vsel %vm90, %v1220, 0
    %1399 = vmatprep.subr.bf16.mxu0 0
    %1400 = vmatpush1.bf16.msra.mxu0 %v1212
    %1401 = vmatprep.subr.bf16.mxu0 0
    %1402 = vmatpush1.bf16.msra.mxu0 0
    %1403 = vmatprep.subr.bf16.mxu0 0
    %1404 = vmatpush1.bf16.msra.mxu0 0
    %1405 = vmatprep.subr.bf16.mxu0 0
    %1406 = vmatpush1.bf16.msra.mxu0 0
    %1407 = vmatprep.subr.bf16.mxu0 0
    %1408 = vmatpush1.bf16.msra.mxu0 0
    %1409 = vmatprep.subr.bf16.mxu0 0
    %1410 = vmatpush1.bf16.msra.mxu0 0
    %1411 = vmatprep.subr.bf16.mxu0 0
    %1412 = vmatpush1.bf16.msra.mxu0 0
    %1413 = vmatprep.subr.bf16.mxu0 0
    %1414 = vmatpush1.bf16.msra.mxu0 0
    %1415 = vmatprep.subr.bf16.mxu0 0
    %1416 = vmatpush1.bf16.msra.mxu0 0
    %1417 = vmatprep.subr.bf16.mxu0 0
    %1418 = vmatpush1.bf16.msra.mxu0 0
    %1419 = vmatprep.subr.bf16.mxu0 0
    %1420 = vmatpush1.bf16.msra.mxu0 0
    %1421 = vmatprep.subr.bf16.mxu0 0
    %1422 = vmatpush1.bf16.msra.mxu0 0
    %1423 = vmatprep.subr.bf16.mxu0 0
    %1424 = vmatpush1.bf16.msra.mxu0 0
    %1425 = vmatprep.subr.bf16.mxu0 0
    %1426 = vmatpush1.bf16.msra.mxu0 0
    %1427 = vmatprep.subr.bf16.mxu0 0
    %1428 = vmatpush1.bf16.msra.mxu0 0
    %1429 = vmatprep.subr.bf16.mxu0 0
    %1430 = vmatpush1.bf16.msra.mxu0 0
    %1431 = vmatprep.mubr.bf16.mxu0 0
    %1432 = vmatmul.mubr.bf16.gmra.mrb[0].mxu0 %v1397
    %v1433 = vpop.f32.mrb[0].mxu0
    %v1434 = vadd.f32 0.0, %v1433
    %v1435 = vpop.f32.mrb[0].mxu0
    %v1436 = vpop.f32.mrb[0].mxu0
    %v1437 = vpop.f32.mrb[0].mxu0
    %1438 = vdwg.mxu0
    %v1440 = vsel %vm90, %v1221, 0
    %1442 = vmatprep.subr.bf16.mxu0 0
    %1443 = vmatpush1.bf16.msra.mxu0 %v1213
    %1444 = vmatprep.subr.bf16.mxu0 0
    %1445 = vmatpush1.bf16.msra.mxu0 0
    %1446 = vmatprep.subr.bf16.mxu0 0
    %1447 = vmatpush1.bf16.msra.mxu0 0
    %1448 = vmatprep.subr.bf16.mxu0 0
    %1449 = vmatpush1.bf16.msra.mxu0 0
    %1450 = vmatprep.subr.bf16.mxu0 0
    %1451 = vmatpush1.bf16.msra.mxu0 0
    %1452 = vmatprep.subr.bf16.mxu0 0
    %1453 = vmatpush1.bf16.msra.mxu0 0
    %1454 = vmatprep.subr.bf16.mxu0 0
    %1455 = vmatpush1.bf16.msra.mxu0 0
    %1456 = vmatprep.subr.bf16.mxu0 0
    %1457 = vmatpush1.bf16.msra.mxu0 0
    %1458 = vmatprep.subr.bf16.mxu0 0
    %1459 = vmatpush1.bf16.msra.mxu0 0
    %1460 = vmatprep.subr.bf16.mxu0 0
    %1461 = vmatpush1.bf16.msra.mxu0 0
    %1462 = vmatprep.subr.bf16.mxu0 0
    %1463 = vmatpush1.bf16.msra.mxu0 0
    %1464 = vmatprep.subr.bf16.mxu0 0
    %1465 = vmatpush1.bf16.msra.mxu0 0
    %1466 = vmatprep.subr.bf16.mxu0 0
    %1467 = vmatpush1.bf16.msra.mxu0 0
    %1468 = vmatprep.subr.bf16.mxu0 0
    %1469 = vmatpush1.bf16.msra.mxu0 0
    %1470 = vmatprep.subr.bf16.mxu0 0
    %1471 = vmatpush1.bf16.msra.mxu0 0
    %1472 = vmatprep.subr.bf16.mxu0 0
    %1473 = vmatpush1.bf16.msra.mxu0 0
    %1474 = vmatprep.mubr.bf16.mxu0 0
    %1475 = vmatmul.mubr.bf16.gmra.mrb[0].mxu0 %v1440
    %v1476 = vpop.f32.mrb[0].mxu0
    %v1477 = vadd.f32 0.0, %v1476
    %v1478 = vpop.f32.mrb[0].mxu0
    %v1479 = vpop.f32.mrb[0].mxu0
    %v1480 = vpop.f32.mrb[0].mxu0
    %1481 = vdwg.mxu0
    %v1483 = vsel %vm90, %v1222, 0
    %1485 = vmatprep.subr.bf16.mxu0 0
    %1486 = vmatpush1.bf16.msra.mxu0 %v1214
    %1487 = vmatprep.subr.bf16.mxu0 0
    %1488 = vmatpush1.bf16.msra.mxu0 0
    %1489 = vmatprep.subr.bf16.mxu0 0
    %1490 = vmatpush1.bf16.msra.mxu0 0
    %1491 = vmatprep.subr.bf16.mxu0 0
    %1492 = vmatpush1.bf16.msra.mxu0 0
    %1493 = vmatprep.subr.bf16.mxu0 0
    %1494 = vmatpush1.bf16.msra.mxu0 0
    %1495 = vmatprep.subr.bf16.mxu0 0
    %1496 = vmatpush1.bf16.msra.mxu0 0
    %1497 = vmatprep.subr.bf16.mxu0 0
    %1498 = vmatpush1.bf16.msra.mxu0 0
    %1499 = vmatprep.subr.bf16.mxu0 0
    %1500 = vmatpush1.bf16.msra.mxu0 0
    %1501 = vmatprep.subr.bf16.mxu0 0
    %1502 = vmatpush1.bf16.msra.mxu0 0
    %1503 = vmatprep.subr.bf16.mxu0 0
    %1504 = vmatpush1.bf16.msra.mxu0 0
    %1505 = vmatprep.subr.bf16.mxu0 0
    %1506 = vmatpush1.bf16.msra.mxu0 0
    %1507 = vmatprep.subr.bf16.mxu0 0
    %1508 = vmatpush1.bf16.msra.mxu0 0
    %1509 = vmatprep.subr.bf16.mxu0 0
    %1510 = vmatpush1.bf16.msra.mxu0 0
    %1511 = vmatprep.subr.bf16.mxu0 0
    %1512 = vmatpush1.bf16.msra.mxu0 0
    %1513 = vmatprep.subr.bf16.mxu0 0
    %1514 = vmatpush1.bf16.msra.mxu0 0
    %1515 = vmatprep.subr.bf16.mxu0 0
    %1516 = vmatpush1.bf16.msra.mxu0 0
    %1517 = vmatprep.mubr.bf16.mxu0 0
    %1518 = vmatmul.mubr.bf16.gmra.mrb[0].mxu0 %v1483
    %v1519 = vpop.f32.mrb[0].mxu0
    %v1520 = vadd.f32 0.0, %v1519
    %v1521 = vpop.f32.mrb[0].mxu0
    %v1522 = vpop.f32.mrb[0].mxu0
    %v1523 = vpop.f32.mrb[0].mxu0
    %1524 = vdwg.mxu0
    %v1526 = vsel %vm90, %v1223, 0
    %1528 = vmatprep.subr.bf16.mxu0 0
    %1529 = vmatpush1.bf16.msra.mxu0 %v1215
    %1530 = vmatprep.subr.bf16.mxu0 0
    %1531 = vmatpush1.bf16.msra.mxu0 0
    %1532 = vmatprep.subr.bf16.mxu0 0
    %1533 = vmatpush1.bf16.msra.mxu0 0
    %1534 = vmatprep.subr.bf16.mxu0 0
    %1535 = vmatpush1.bf16.msra.mxu0 0
    %1536 = vmatprep.subr.bf16.mxu0 0
    %1537 = vmatpush1.bf16.msra.mxu0 0
    %1538 = vmatprep.subr.bf16.mxu0 0
    %1539 = vmatpush1.bf16.msra.mxu0 0
    %1540 = vmatprep.subr.bf16.mxu0 0
    %1541 = vmatpush1.bf16.msra.mxu0 0
    %1542 = vmatprep.subr.bf16.mxu0 0
    %1543 = vmatpush1.bf16.msra.mxu0 0
    %1544 = vmatprep.subr.bf16.mxu0 0
    %1545 = vmatpush1.bf16.msra.mxu0 0
    %1546 = vmatprep.subr.bf16.mxu0 0
    %1547 = vmatpush1.bf16.msra.mxu0 0
    %1548 = vmatprep.subr.bf16.mxu0 0
    %1549 = vmatpush1.bf16.msra.mxu0 0
    %1550 = vmatprep.subr.bf16.mxu0 0
    %1551 = vmatpush1.bf16.msra.mxu0 0
    %1552 = vmatprep.subr.bf16.mxu0 0
    %1553 = vmatpush1.bf16.msra.mxu0 0
    %1554 = vmatprep.subr.bf16.mxu0 0
    %1555 = vmatpush1.bf16.msra.mxu0 0
    %1556 = vmatprep.subr.bf16.mxu0 0
    %1557 = vmatpush1.bf16.msra.mxu0 0
    %1558 = vmatprep.subr.bf16.mxu0 0
    %1559 = vmatpush1.bf16.msra.mxu0 0
    %1560 = vmatprep.mubr.bf16.mxu0 0
    %1561 = vmatmul.mubr.bf16.gmra.mrb[0].mxu0 %v1526
    %v1562 = vpop.f32.mrb[0].mxu0
    %v1563 = vadd.f32 0.0, %v1562
    %v1564 = vpop.f32.mrb[0].mxu0
    %v1565 = vpop.f32.mrb[0].mxu0
    %v1566 = vpop.f32.mrb[0].mxu0
    %1567 = vdwg.mxu0
    %v1568 = vpack.c.bf16 %v1065, %v1065
    %v1569 = vpack.c.bf16 %v1069, %v1069
    %v1570 = vpack.c.bf16 %v1073, %v1073
    %v1571 = vpack.c.bf16 %v1077, %v1077
    %v1572 = vpack.c.bf16 %v1081, %v1081
    %v1573 = vpack.c.bf16 %v1085, %v1085
    %v1574 = vpack.c.bf16 %v1089, %v1089
    %v1575 = vpack.c.bf16 %v1093, %v1093
    %1577 = vrot.lane.b32.xlu0 %v1208, 120
    %v1578 = vpop.permute.xlu0 %1577
    %v1581 = vsel %vm90, %v1568, 0
    %1583 = vmatprep.subr.bf16.mxu0 0
    %1584 = vmatpush1.bf16.msra.mxu0 %v1578
    %1585 = vmatprep.subr.bf16.mxu0 0
    %1586 = vmatpush1.bf16.msra.mxu0 0
    %1587 = vmatprep.subr.bf16.mxu0 0
    %1588 = vmatpush1.bf16.msra.mxu0 0
    %1589 = vmatprep.subr.bf16.mxu0 0
    %1590 = vmatpush1.bf16.msra.mxu0 0
    %1591 = vmatprep.subr.bf16.mxu0 0
    %1592 = vmatpush1.bf16.msra.mxu0 0
    %1593 = vmatprep.subr.bf16.mxu0 0
    %1594 = vmatpush1.bf16.msra.mxu0 0
    %1595 = vmatprep.subr.bf16.mxu0 0
    %1596 = vmatpush1.bf16.msra.mxu0 0
    %1597 = vmatprep.subr.bf16.mxu0 0
    %1598 = vmatpush1.bf16.msra.mxu0 0
    %1599 = vmatprep.subr.bf16.mxu0 0
    %1600 = vmatpush1.bf16.msra.mxu0 0
    %1601 = vmatprep.subr.bf16.mxu0 0
    %1602 = vmatpush1.bf16.msra.mxu0 0
    %1603 = vmatprep.subr.bf16.mxu0 0
    %1604 = vmatpush1.bf16.msra.mxu0 0
    %1605 = vmatprep.subr.bf16.mxu0 0
    %1606 = vmatpush1.bf16.msra.mxu0 0
    %1607 = vmatprep.subr.bf16.mxu0 0
    %1608 = vmatpush1.bf16.msra.mxu0 0
    %1609 = vmatprep.subr.bf16.mxu0 0
    %1610 = vmatpush1.bf16.msra.mxu0 0
    %1611 = vmatprep.subr.bf16.mxu0 0
    %1612 = vmatpush1.bf16.msra.mxu0 0
    %1613 = vmatprep.subr.bf16.mxu0 0
    %1614 = vmatpush1.bf16.msra.mxu0 0
    %1615 = vmatprep.mubr.bf16.mxu0 0
    %1616 = vmatmul.mubr.bf16.gmra.mrb[0].mxu0 %v1581
    %v1617 = vpop.f32.mrb[0].mxu0
    %v1618 = vadd.f32 0.0, %v1617
    %v1619 = vpop.f32.mrb[0].mxu0
    %v1620 = vpop.f32.mrb[0].mxu0
    %v1621 = vpop.f32.mrb[0].mxu0
    %1622 = vdwg.mxu0
    %1624 = vrot.lane.b32.xlu0 %v1209, 120
    %v1625 = vpop.permute.xlu0 %1624
    %v1628 = vsel %vm90, %v1569, 0
    %1630 = vmatprep.subr.bf16.mxu0 0
    %1631 = vmatpush1.bf16.msra.mxu0 %v1625
    %1632 = vmatprep.subr.bf16.mxu0 0
    %1633 = vmatpush1.bf16.msra.mxu0 0
    %1634 = vmatprep.subr.bf16.mxu0 0
    %1635 = vmatpush1.bf16.msra.mxu0 0
    %1636 = vmatprep.subr.bf16.mxu0 0
    %1637 = vmatpush1.bf16.msra.mxu0 0
    %1638 = vmatprep.subr.bf16.mxu0 0
    %1639 = vmatpush1.bf16.msra.mxu0 0
    %1640 = vmatprep.subr.bf16.mxu0 0
    %1641 = vmatpush1.bf16.msra.mxu0 0
    %1642 = vmatprep.subr.bf16.mxu0 0
    %1643 = vmatpush1.bf16.msra.mxu0 0
    %1644 = vmatprep.subr.bf16.mxu0 0
    %1645 = vmatpush1.bf16.msra.mxu0 0
    %1646 = vmatprep.subr.bf16.mxu0 0
    %1647 = vmatpush1.bf16.msra.mxu0 0
    %1648 = vmatprep.subr.bf16.mxu0 0
    %1649 = vmatpush1.bf16.msra.mxu0 0
    %1650 = vmatprep.subr.bf16.mxu0 0
    %1651 = vmatpush1.bf16.msra.mxu0 0
    %1652 = vmatprep.subr.bf16.mxu0 0
    %1653 = vmatpush1.bf16.msra.mxu0 0
    %1654 = vmatprep.subr.bf16.mxu0 0
    %1655 = vmatpush1.bf16.msra.mxu0 0
    %1656 = vmatprep.subr.bf16.mxu0 0
    %1657 = vmatpush1.bf16.msra.mxu0 0
    %1658 = vmatprep.subr.bf16.mxu0 0
    %1659 = vmatpush1.bf16.msra.mxu0 0
    %1660 = vmatprep.subr.bf16.mxu0 0
    %1661 = vmatpush1.bf16.msra.mxu0 0
    %1662 = vmatprep.mubr.bf16.mxu0 0
    %1663 = vmatmul.mubr.bf16.gmra.mrb[0].mxu0 %v1628
    %v1664 = vpop.f32.mrb[0].mxu0
    %v1665 = vadd.f32 0.0, %v1664
    %v1666 = vpop.f32.mrb[0].mxu0
    %v1667 = vpop.f32.mrb[0].mxu0
    %v1668 = vpop.f32.mrb[0].mxu0
    %1669 = vdwg.mxu0
    %1671 = vrot.lane.b32.xlu0 %v1210, 120
    %v1672 = vpop.permute.xlu0 %1671
    %v1675 = vsel %vm90, %v1570, 0
    %1677 = vmatprep.subr.bf16.mxu0 0
    %1678 = vmatpush1.bf16.msra.mxu0 %v1672
    %1679 = vmatprep.subr.bf16.mxu0 0
    %1680 = vmatpush1.bf16.msra.mxu0 0
    %1681 = vmatprep.subr.bf16.mxu0 0
    %1682 = vmatpush1.bf16.msra.mxu0 0
    %1683 = vmatprep.subr.bf16.mxu0 0
    %1684 = vmatpush1.bf16.msra.mxu0 0
    %1685 = vmatprep.subr.bf16.mxu0 0
    %1686 = vmatpush1.bf16.msra.mxu0 0
    %1687 = vmatprep.subr.bf16.mxu0 0
    %1688 = vmatpush1.bf16.msra.mxu0 0
    %1689 = vmatprep.subr.bf16.mxu0 0
    %1690 = vmatpush1.bf16.msra.mxu0 0
    %1691 = vmatprep.subr.bf16.mxu0 0
    %1692 = vmatpush1.bf16.msra.mxu0 0
    %1693 = vmatprep.subr.bf16.mxu0 0
    %1694 = vmatpush1.bf16.msra.mxu0 0
    %1695 = vmatprep.subr.bf16.mxu0 0
    %1696 = vmatpush1.bf16.msra.mxu0 0
    %1697 = vmatprep.subr.bf16.mxu0 0
    %1698 = vmatpush1.bf16.msra.mxu0 0
    %1699 = vmatprep.subr.bf16.mxu0 0
    %1700 = vmatpush1.bf16.msra.mxu0 0
    %1701 = vmatprep.subr.bf16.mxu0 0
    %1702 = vmatpush1.bf16.msra.mxu0 0
    %1703 = vmatprep.subr.bf16.mxu0 0
    %1704 = vmatpush1.bf16.msra.mxu0 0
    %1705 = vmatprep.subr.bf16.mxu0 0
    %1706 = vmatpush1.bf16.msra.mxu0 0
    %1707 = vmatprep.subr.bf16.mxu0 0
    %1708 = vmatpush1.bf16.msra.mxu0 0
    %1709 = vmatprep.mubr.bf16.mxu0 0
    %1710 = vmatmul.mubr.bf16.gmra.mrb[0].mxu0 %v1675
    %v1711 = vpop.f32.mrb[0].mxu0
    %v1712 = vadd.f32 0.0, %v1711
    %v1713 = vpop.f32.mrb[0].mxu0
    %v1714 = vpop.f32.mrb[0].mxu0
    %v1715 = vpop.f32.mrb[0].mxu0
    %1716 = vdwg.mxu0
    %1718 = vrot.lane.b32.xlu0 %v1211, 120
    %v1719 = vpop.permute.xlu0 %1718
    %v1722 = vsel %vm90, %v1571, 0
    %1724 = vmatprep.subr.bf16.mxu0 0
    %1725 = vmatpush1.bf16.msra.mxu0 %v1719
    %1726 = vmatprep.subr.bf16.mxu0 0
    %1727 = vmatpush1.bf16.msra.mxu0 0
    %1728 = vmatprep.subr.bf16.mxu0 0
    %1729 = vmatpush1.bf16.msra.mxu0 0
    %1730 = vmatprep.subr.bf16.mxu0 0
    %1731 = vmatpush1.bf16.msra.mxu0 0
    %1732 = vmatprep.subr.bf16.mxu0 0
    %1733 = vmatpush1.bf16.msra.mxu0 0
    %1734 = vmatprep.subr.bf16.mxu0 0
    %1735 = vmatpush1.bf16.msra.mxu0 0
    %1736 = vmatprep.subr.bf16.mxu0 0
    %1737 = vmatpush1.bf16.msra.mxu0 0
    %1738 = vmatprep.subr.bf16.mxu0 0
    %1739 = vmatpush1.bf16.msra.mxu0 0
    %1740 = vmatprep.subr.bf16.mxu0 0
    %1741 = vmatpush1.bf16.msra.mxu0 0
    %1742 = vmatprep.subr.bf16.mxu0 0
    %1743 = vmatpush1.bf16.msra.mxu0 0
    %1744 = vmatprep.subr.bf16.mxu0 0
    %1745 = vmatpush1.bf16.msra.mxu0 0
    %1746 = vmatprep.subr.bf16.mxu0 0
    %1747 = vmatpush1.bf16.msra.mxu0 0
    %1748 = vmatprep.subr.bf16.mxu0 0
    %1749 = vmatpush1.bf16.msra.mxu0 0
    %1750 = vmatprep.subr.bf16.mxu0 0
    %1751 = vmatpush1.bf16.msra.mxu0 0
    %1752 = vmatprep.subr.bf16.mxu0 0
    %1753 = vmatpush1.bf16.msra.mxu0 0
    %1754 = vmatprep.subr.bf16.mxu0 0
    %1755 = vmatpush1.bf16.msra.mxu0 0
    %1756 = vmatprep.mubr.bf16.mxu0 0
    %1757 = vmatmul.mubr.bf16.gmra.mrb[0].mxu0 %v1722
    %v1758 = vpop.f32.mrb[0].mxu0
    %v1759 = vadd.f32 0.0, %v1758
    %v1760 = vpop.f32.mrb[0].mxu0
    %v1761 = vpop.f32.mrb[0].mxu0
    %v1762 = vpop.f32.mrb[0].mxu0
    %1763 = vdwg.mxu0
    %1765 = vrot.lane.b32.xlu0 %v1212, 120
    %v1766 = vpop.permute.xlu0 %1765
    %v1769 = vsel %vm90, %v1572, 0
    %1771 = vmatprep.subr.bf16.mxu0 0
    %1772 = vmatpush1.bf16.msra.mxu0 %v1766
    %1773 = vmatprep.subr.bf16.mxu0 0
    %1774 = vmatpush1.bf16.msra.mxu0 0
    %1775 = vmatprep.subr.bf16.mxu0 0
    %1776 = vmatpush1.bf16.msra.mxu0 0
    %1777 = vmatprep.subr.bf16.mxu0 0
    %1778 = vmatpush1.bf16.msra.mxu0 0
    %1779 = vmatprep.subr.bf16.mxu0 0
    %1780 = vmatpush1.bf16.msra.mxu0 0
    %1781 = vmatprep.subr.bf16.mxu0 0
    %1782 = vmatpush1.bf16.msra.mxu0 0
    %1783 = vmatprep.subr.bf16.mxu0 0
    %1784 = vmatpush1.bf16.msra.mxu0 0
    %1785 = vmatprep.subr.bf16.mxu0 0
    %1786 = vmatpush1.bf16.msra.mxu0 0
    %1787 = vmatprep.subr.bf16.mxu0 0
    %1788 = vmatpush1.bf16.msra.mxu0 0
    %1789 = vmatprep.subr.bf16.mxu0 0
    %1790 = vmatpush1.bf16.msra.mxu0 0
    %1791 = vmatprep.subr.bf16.mxu0 0
    %1792 = vmatpush1.bf16.msra.mxu0 0
    %1793 = vmatprep.subr.bf16.mxu0 0
    %1794 = vmatpush1.bf16.msra.mxu0 0
    %1795 = vmatprep.subr.bf16.mxu0 0
    %1796 = vmatpush1.bf16.msra.mxu0 0
    %1797 = vmatprep.subr.bf16.mxu0 0
    %1798 = vmatpush1.bf16.msra.mxu0 0
    %1799 = vmatprep.subr.bf16.mxu0 0
    %1800 = vmatpush1.bf16.msra.mxu0 0
    %1801 = vmatprep.subr.bf16.mxu0 0
    %1802 = vmatpush1.bf16.msra.mxu0 0
    %1803 = vmatprep.mubr.bf16.mxu0 0
    %1804 = vmatmul.mubr.bf16.gmra.mrb[0].mxu0 %v1769
    %v1805 = vpop.f32.mrb[0].mxu0
    %v1806 = vadd.f32 0.0, %v1805
    %v1807 = vpop.f32.mrb[0].mxu0
    %v1808 = vpop.f32.mrb[0].mxu0
    %v1809 = vpop.f32.mrb[0].mxu0
    %1810 = vdwg.mxu0
    %1812 = vrot.lane.b32.xlu0 %v1213, 120
    %v1813 = vpop.permute.xlu0 %1812
    %v1816 = vsel %vm90, %v1573, 0
    %1818 = vmatprep.subr.bf16.mxu0 0
    %1819 = vmatpush1.bf16.msra.mxu0 %v1813
    %1820 = vmatprep.subr.bf16.mxu0 0
    %1821 = vmatpush1.bf16.msra.mxu0 0
    %1822 = vmatprep.subr.bf16.mxu0 0
    %1823 = vmatpush1.bf16.msra.mxu0 0
    %1824 = vmatprep.subr.bf16.mxu0 0
    %1825 = vmatpush1.bf16.msra.mxu0 0
    %1826 = vmatprep.subr.bf16.mxu0 0
    %1827 = vmatpush1.bf16.msra.mxu0 0
    %1828 = vmatprep.subr.bf16.mxu0 0
    %1829 = vmatpush1.bf16.msra.mxu0 0
    %1830 = vmatprep.subr.bf16.mxu0 0
    %1831 = vmatpush1.bf16.msra.mxu0 0
    %1832 = vmatprep.subr.bf16.mxu0 0
    %1833 = vmatpush1.bf16.msra.mxu0 0
    %1834 = vmatprep.subr.bf16.mxu0 0
    %1835 = vmatpush1.bf16.msra.mxu0 0
    %1836 = vmatprep.subr.bf16.mxu0 0
    %1837 = vmatpush1.bf16.msra.mxu0 0
    %1838 = vmatprep.subr.bf16.mxu0 0
    %1839 = vmatpush1.bf16.msra.mxu0 0
    %1840 = vmatprep.subr.bf16.mxu0 0
    %1841 = vmatpush1.bf16.msra.mxu0 0
    %1842 = vmatprep.subr.bf16.mxu0 0
    %1843 = vmatpush1.bf16.msra.mxu0 0
    %1844 = vmatprep.subr.bf16.mxu0 0
    %1845 = vmatpush1.bf16.msra.mxu0 0
    %1846 = vmatprep.subr.bf16.mxu0 0
    %1847 = vmatpush1.bf16.msra.mxu0 0
    %1848 = vmatprep.subr.bf16.mxu0 0
    %1849 = vmatpush1.bf16.msra.mxu0 0
    %1850 = vmatprep.mubr.bf16.mxu0 0
    %1851 = vmatmul.mubr.bf16.gmra.mrb[0].mxu0 %v1816
    %v1852 = vpop.f32.mrb[0].mxu0
    %v1853 = vadd.f32 0.0, %v1852
    %v1854 = vpop.f32.mrb[0].mxu0
    %v1855 = vpop.f32.mrb[0].mxu0
    %v1856 = vpop.f32.mrb[0].mxu0
    %1857 = vdwg.mxu0
    %1859 = vrot.lane.b32.xlu0 %v1214, 120
    %v1860 = vpop.permute.xlu0 %1859
    %v1863 = vsel %vm90, %v1574, 0
    %1865 = vmatprep.subr.bf16.mxu0 0
    %1866 = vmatpush1.bf16.msra.mxu0 %v1860
    %1867 = vmatprep.subr.bf16.mxu0 0
    %1868 = vmatpush1.bf16.msra.mxu0 0
    %1869 = vmatprep.subr.bf16.mxu0 0
    %1870 = vmatpush1.bf16.msra.mxu0 0
    %1871 = vmatprep.subr.bf16.mxu0 0
    %1872 = vmatpush1.bf16.msra.mxu0 0
    %1873 = vmatprep.subr.bf16.mxu0 0
    %1874 = vmatpush1.bf16.msra.mxu0 0
    %1875 = vmatprep.subr.bf16.mxu0 0
    %1876 = vmatpush1.bf16.msra.mxu0 0
    %1877 = vmatprep.subr.bf16.mxu0 0
    %1878 = vmatpush1.bf16.msra.mxu0 0
    %1879 = vmatprep.subr.bf16.mxu0 0
    %1880 = vmatpush1.bf16.msra.mxu0 0
    %1881 = vmatprep.subr.bf16.mxu0 0
    %1882 = vmatpush1.bf16.msra.mxu0 0
    %1883 = vmatprep.subr.bf16.mxu0 0
    %1884 = vmatpush1.bf16.msra.mxu0 0
    %1885 = vmatprep.subr.bf16.mxu0 0
    %1886 = vmatpush1.bf16.msra.mxu0 0
    %1887 = vmatprep.subr.bf16.mxu0 0
    %1888 = vmatpush1.bf16.msra.mxu0 0
    %1889 = vmatprep.subr.bf16.mxu0 0
    %1890 = vmatpush1.bf16.msra.mxu0 0
    %1891 = vmatprep.subr.bf16.mxu0 0
    %1892 = vmatpush1.bf16.msra.mxu0 0
    %1893 = vmatprep.subr.bf16.mxu0 0
    %1894 = vmatpush1.bf16.msra.mxu0 0
    %1895 = vmatprep.subr.bf16.mxu0 0
    %1896 = vmatpush1.bf16.msra.mxu0 0
    %1897 = vmatprep.mubr.bf16.mxu0 0
    %1898 = vmatmul.mubr.bf16.gmra.mrb[0].mxu0 %v1863
    %v1899 = vpop.f32.mrb[0].mxu0
    %v1900 = vadd.f32 0.0, %v1899
    %v1901 = vpop.f32.mrb[0].mxu0
    %v1902 = vpop.f32.mrb[0].mxu0
    %v1903 = vpop.f32.mrb[0].mxu0
    %1904 = vdwg.mxu0
    %1906 = vrot.lane.b32.xlu0 %v1215, 120
    %v1907 = vpop.permute.xlu0 %1906
    %v1910 = vsel %vm90, %v1575, 0
    %1912 = vmatprep.subr.bf16.mxu0 0
    %1913 = vmatpush1.bf16.msra.mxu0 %v1907
    %1914 = vmatprep.subr.bf16.mxu0 0
    %1915 = vmatpush1.bf16.msra.mxu0 0
    %1916 = vmatprep.subr.bf16.mxu0 0
    %1917 = vmatpush1.bf16.msra.mxu0 0
    %1918 = vmatprep.subr.bf16.mxu0 0
    %1919 = vmatpush1.bf16.msra.mxu0 0
    %1920 = vmatprep.subr.bf16.mxu0 0
    %1921 = vmatpush1.bf16.msra.mxu0 0
    %1922 = vmatprep.subr.bf16.mxu0 0
    %1923 = vmatpush1.bf16.msra.mxu0 0
    %1924 = vmatprep.subr.bf16.mxu0 0
    %1925 = vmatpush1.bf16.msra.mxu0 0
    %1926 = vmatprep.subr.bf16.mxu0 0
    %1927 = vmatpush1.bf16.msra.mxu0 0
    %1928 = vmatprep.subr.bf16.mxu0 0
    %1929 = vmatpush1.bf16.msra.mxu0 0
    %1930 = vmatprep.subr.bf16.mxu0 0
    %1931 = vmatpush1.bf16.msra.mxu0 0
    %1932 = vmatprep.subr.bf16.mxu0 0
    %1933 = vmatpush1.bf16.msra.mxu0 0
    %1934 = vmatprep.subr.bf16.mxu0 0
    %1935 = vmatpush1.bf16.msra.mxu0 0
    %1936 = vmatprep.subr.bf16.mxu0 0
    %1937 = vmatpush1.bf16.msra.mxu0 0
    %1938 = vmatprep.subr.bf16.mxu0 0
    %1939 = vmatpush1.bf16.msra.mxu0 0
    %1940 = vmatprep.subr.bf16.mxu0 0
    %1941 = vmatpush1.bf16.msra.mxu0 0
    %1942 = vmatprep.subr.bf16.mxu0 0
    %1943 = vmatpush1.bf16.msra.mxu0 0
    %1944 = vmatprep.mubr.bf16.mxu0 0
    %1945 = vmatmul.mubr.bf16.gmra.mrb[0].mxu0 %v1910
    %v1946 = vpop.f32.mrb[0].mxu0
    %v1947 = vadd.f32 0.0, %v1946
    %v1948 = vpop.f32.mrb[0].mxu0
    %v1949 = vpop.f32.mrb[0].mxu0
    %v1950 = vpop.f32.mrb[0].mxu0
    %1951 = vdwg.mxu0
    %v1952 = vpack.c.bf16 %v1066, %v1066
    %v1953 = vpack.c.bf16 %v1070, %v1070
    %v1954 = vpack.c.bf16 %v1074, %v1074
    %v1955 = vpack.c.bf16 %v1078, %v1078
    %v1956 = vpack.c.bf16 %v1082, %v1082
    %v1957 = vpack.c.bf16 %v1086, %v1086
    %v1958 = vpack.c.bf16 %v1090, %v1090
    %v1959 = vpack.c.bf16 %v1094, %v1094
    %1960 = vrot.lane.b32.xlu0 %v1208, 112
    %v1961 = vpop.permute.xlu0 %1960
    %v1964 = vsel %vm90, %v1952, 0
    %1966 = vmatprep.subr.bf16.mxu0 0
    %1967 = vmatpush1.bf16.msra.mxu0 %v1961
    %1968 = vmatprep.subr.bf16.mxu0 0
    %1969 = vmatpush1.bf16.msra.mxu0 0
    %1970 = vmatprep.subr.bf16.mxu0 0
    %1971 = vmatpush1.bf16.msra.mxu0 0
    %1972 = vmatprep.subr.bf16.mxu0 0
    %1973 = vmatpush1.bf16.msra.mxu0 0
    %1974 = vmatprep.subr.bf16.mxu0 0
    %1975 = vmatpush1.bf16.msra.mxu0 0
    %1976 = vmatprep.subr.bf16.mxu0 0
    %1977 = vmatpush1.bf16.msra.mxu0 0
    %1978 = vmatprep.subr.bf16.mxu0 0
    %1979 = vmatpush1.bf16.msra.mxu0 0
    %1980 = vmatprep.subr.bf16.mxu0 0
    %1981 = vmatpush1.bf16.msra.mxu0 0
    %1982 = vmatprep.subr.bf16.mxu0 0
    %1983 = vmatpush1.bf16.msra.mxu0 0
    %1984 = vmatprep.subr.bf16.mxu0 0
    %1985 = vmatpush1.bf16.msra.mxu0 0
    %1986 = vmatprep.subr.bf16.mxu0 0
    %1987 = vmatpush1.bf16.msra.mxu0 0
    %1988 = vmatprep.subr.bf16.mxu0 0
    %1989 = vmatpush1.bf16.msra.mxu0 0
    %1990 = vmatprep.subr.bf16.mxu0 0
    %1991 = vmatpush1.bf16.msra.mxu0 0
    %1992 = vmatprep.subr.bf16.mxu0 0
    %1993 = vmatpush1.bf16.msra.mxu0 0
    %1994 = vmatprep.subr.bf16.mxu0 0
    %1995 = vmatpush1.bf16.msra.mxu0 0
    %1996 = vmatprep.subr.bf16.mxu0 0
    %1997 = vmatpush1.bf16.msra.mxu0 0
    %1998 = vmatprep.mubr.bf16.mxu0 0
    %1999 = vmatmul.mubr.bf16.gmra.mrb[0].mxu0 %v1964
    %v2000 = vpop.f32.mrb[0].mxu0
    %v2001 = vadd.f32 0.0, %v2000
    %v2002 = vpop.f32.mrb[0].mxu0
    %v2003 = vpop.f32.mrb[0].mxu0
    %v2004 = vpop.f32.mrb[0].mxu0
    %2005 = vdwg.mxu0
    %2006 = vrot.lane.b32.xlu0 %v1209, 112
    %v2007 = vpop.permute.xlu0 %2006
    %v2010 = vsel %vm90, %v1953, 0
    %2012 = vmatprep.subr.bf16.mxu0 0
    %2013 = vmatpush1.bf16.msra.mxu0 %v2007
    %2014 = vmatprep.subr.bf16.mxu0 0
    %2015 = vmatpush1.bf16.msra.mxu0 0
    %2016 = vmatprep.subr.bf16.mxu0 0
    %2017 = vmatpush1.bf16.msra.mxu0 0
    %2018 = vmatprep.subr.bf16.mxu0 0
    %2019 = vmatpush1.bf16.msra.mxu0 0
    %2020 = vmatprep.subr.bf16.mxu0 0
    %2021 = vmatpush1.bf16.msra.mxu0 0
    %2022 = vmatprep.subr.bf16.mxu0 0
    %2023 = vmatpush1.bf16.msra.mxu0 0
    %2024 = vmatprep.subr.bf16.mxu0 0
    %2025 = vmatpush1.bf16.msra.mxu0 0
    %2026 = vmatprep.subr.bf16.mxu0 0
    %2027 = vmatpush1.bf16.msra.mxu0 0
    %2028 = vmatprep.subr.bf16.mxu0 0
    %2029 = vmatpush1.bf16.msra.mxu0 0
    %2030 = vmatprep.subr.bf16.mxu0 0
    %2031 = vmatpush1.bf16.msra.mxu0 0
    %2032 = vmatprep.subr.bf16.mxu0 0
    %2033 = vmatpush1.bf16.msra.mxu0 0
    %2034 = vmatprep.subr.bf16.mxu0 0
    %2035 = vmatpush1.bf16.msra.mxu0 0
    %2036 = vmatprep.subr.bf16.mxu0 0
    %2037 = vmatpush1.bf16.msra.mxu0 0
    %2038 = vmatprep.subr.bf16.mxu0 0
    %2039 = vmatpush1.bf16.msra.mxu0 0
    %2040 = vmatprep.subr.bf16.mxu0 0
    %2041 = vmatpush1.bf16.msra.mxu0 0
    %2042 = vmatprep.subr.bf16.mxu0 0
    %2043 = vmatpush1.bf16.msra.mxu0 0
    %2044 = vmatprep.mubr.bf16.mxu0 0
    %2045 = vmatmul.mubr.bf16.gmra.mrb[0].mxu0 %v2010
    %v2046 = vpop.f32.mrb[0].mxu0
    %v2047 = vadd.f32 0.0, %v2046
    %v2048 = vpop.f32.mrb[0].mxu0
    %v2049 = vpop.f32.mrb[0].mxu0
    %v2050 = vpop.f32.mrb[0].mxu0
    %2051 = vdwg.mxu0
    %2052 = vrot.lane.b32.xlu0 %v1210, 112
    %v2053 = vpop.permute.xlu0 %2052
    %v2056 = vsel %vm90, %v1954, 0
    %2058 = vmatprep.subr.bf16.mxu0 0
    %2059 = vmatpush1.bf16.msra.mxu0 %v2053
    %2060 = vmatprep.subr.bf16.mxu0 0
    %2061 = vmatpush1.bf16.msra.mxu0 0
    %2062 = vmatprep.subr.bf16.mxu0 0
    %2063 = vmatpush1.bf16.msra.mxu0 0
    %2064 = vmatprep.subr.bf16.mxu0 0
    %2065 = vmatpush1.bf16.msra.mxu0 0
    %2066 = vmatprep.subr.bf16.mxu0 0
    %2067 = vmatpush1.bf16.msra.mxu0 0
    %2068 = vmatprep.subr.bf16.mxu0 0
    %2069 = vmatpush1.bf16.msra.mxu0 0
    %2070 = vmatprep.subr.bf16.mxu0 0
    %2071 = vmatpush1.bf16.msra.mxu0 0
    %2072 = vmatprep.subr.bf16.mxu0 0
    %2073 = vmatpush1.bf16.msra.mxu0 0
    %2074 = vmatprep.subr.bf16.mxu0 0
    %2075 = vmatpush1.bf16.msra.mxu0 0
    %2076 = vmatprep.subr.bf16.mxu0 0
    %2077 = vmatpush1.bf16.msra.mxu0 0
    %2078 = vmatprep.subr.bf16.mxu0 0
    %2079 = vmatpush1.bf16.msra.mxu0 0
    %2080 = vmatprep.subr.bf16.mxu0 0
    %2081 = vmatpush1.bf16.msra.mxu0 0
    %2082 = vmatprep.subr.bf16.mxu0 0
    %2083 = vmatpush1.bf16.msra.mxu0 0
    %2084 = vmatprep.subr.bf16.mxu0 0
    %2085 = vmatpush1.bf16.msra.mxu0 0
    %2086 = vmatprep.subr.bf16.mxu0 0
    %2087 = vmatpush1.bf16.msra.mxu0 0
    %2088 = vmatprep.subr.bf16.mxu0 0
    %2089 = vmatpush1.bf16.msra.mxu0 0
    %2090 = vmatprep.mubr.bf16.mxu0 0
    %2091 = vmatmul.mubr.bf16.gmra.mrb[0].mxu0 %v2056
    %v2092 = vpop.f32.mrb[0].mxu0
    %v2093 = vadd.f32 0.0, %v2092
    %v2094 = vpop.f32.mrb[0].mxu0
    %v2095 = vpop.f32.mrb[0].mxu0
    %v2096 = vpop.f32.mrb[0].mxu0
    %2097 = vdwg.mxu0
    %2098 = vrot.lane.b32.xlu0 %v1211, 112
    %v2099 = vpop.permute.xlu0 %2098
    %v2102 = vsel %vm90, %v1955, 0
    %2104 = vmatprep.subr.bf16.mxu0 0
    %2105 = vmatpush1.bf16.msra.mxu0 %v2099
    %2106 = vmatprep.subr.bf16.mxu0 0
    %2107 = vmatpush1.bf16.msra.mxu0 0
    %2108 = vmatprep.subr.bf16.mxu0 0
    %2109 = vmatpush1.bf16.msra.mxu0 0
    %2110 = vmatprep.subr.bf16.mxu0 0
    %2111 = vmatpush1.bf16.msra.mxu0 0
    %2112 = vmatprep.subr.bf16.mxu0 0
    %2113 = vmatpush1.bf16.msra.mxu0 0
    %2114 = vmatprep.subr.bf16.mxu0 0
    %2115 = vmatpush1.bf16.msra.mxu0 0
    %2116 = vmatprep.subr.bf16.mxu0 0
    %2117 = vmatpush1.bf16.msra.mxu0 0
    %2118 = vmatprep.subr.bf16.mxu0 0
    %2119 = vmatpush1.bf16.msra.mxu0 0
    %2120 = vmatprep.subr.bf16.mxu0 0
    %2121 = vmatpush1.bf16.msra.mxu0 0
    %2122 = vmatprep.subr.bf16.mxu0 0
    %2123 = vmatpush1.bf16.msra.mxu0 0
    %2124 = vmatprep.subr.bf16.mxu0 0
    %2125 = vmatpush1.bf16.msra.mxu0 0
    %2126 = vmatprep.subr.bf16.mxu0 0
    %2127 = vmatpush1.bf16.msra.mxu0 0
    %2128 = vmatprep.subr.bf16.mxu0 0
    %2129 = vmatpush1.bf16.msra.mxu0 0
    %2130 = vmatprep.subr.bf16.mxu0 0
    %2131 = vmatpush1.bf16.msra.mxu0 0
    %2132 = vmatprep.subr.bf16.mxu0 0
    %2133 = vmatpush1.bf16.msra.mxu0 0
    %2134 = vmatprep.subr.bf16.mxu0 0
    %2135 = vmatpush1.bf16.msra.mxu0 0
    %2136 = vmatprep.mubr.bf16.mxu0 0
    %2137 = vmatmul.mubr.bf16.gmra.mrb[0].mxu0 %v2102
    %v2138 = vpop.f32.mrb[0].mxu0
    %v2139 = vadd.f32 0.0, %v2138
    %v2140 = vpop.f32.mrb[0].mxu0
    %v2141 = vpop.f32.mrb[0].mxu0
    %v2142 = vpop.f32.mrb[0].mxu0
    %2143 = vdwg.mxu0
    %2144 = vrot.lane.b32.xlu0 %v1212, 112
    %v2145 = vpop.permute.xlu0 %2144
    %v2148 = vsel %vm90, %v1956, 0
    %2150 = vmatprep.subr.bf16.mxu0 0
    %2151 = vmatpush1.bf16.msra.mxu0 %v2145
    %2152 = vmatprep.subr.bf16.mxu0 0
    %2153 = vmatpush1.bf16.msra.mxu0 0
    %2154 = vmatprep.subr.bf16.mxu0 0
    %2155 = vmatpush1.bf16.msra.mxu0 0
    %2156 = vmatprep.subr.bf16.mxu0 0
    %2157 = vmatpush1.bf16.msra.mxu0 0
    %2158 = vmatprep.subr.bf16.mxu0 0
    %2159 = vmatpush1.bf16.msra.mxu0 0
    %2160 = vmatprep.subr.bf16.mxu0 0
    %2161 = vmatpush1.bf16.msra.mxu0 0
    %2162 = vmatprep.subr.bf16.mxu0 0
    %2163 = vmatpush1.bf16.msra.mxu0 0
    %2164 = vmatprep.subr.bf16.mxu0 0
    %2165 = vmatpush1.bf16.msra.mxu0 0
    %2166 = vmatprep.subr.bf16.mxu0 0
    %2167 = vmatpush1.bf16.msra.mxu0 0
    %2168 = vmatprep.subr.bf16.mxu0 0
    %2169 = vmatpush1.bf16.msra.mxu0 0
    %2170 = vmatprep.subr.bf16.mxu0 0
    %2171 = vmatpush1.bf16.msra.mxu0 0
    %2172 = vmatprep.subr.bf16.mxu0 0
    %2173 = vmatpush1.bf16.msra.mxu0 0
    %2174 = vmatprep.subr.bf16.mxu0 0
    %2175 = vmatpush1.bf16.msra.mxu0 0
    %2176 = vmatprep.subr.bf16.mxu0 0
    %2177 = vmatpush1.bf16.msra.mxu0 0
    %2178 = vmatprep.subr.bf16.mxu0 0
    %2179 = vmatpush1.bf16.msra.mxu0 0
    %2180 = vmatprep.subr.bf16.mxu0 0
    %2181 = vmatpush1.bf16.msra.mxu0 0
    %2182 = vmatprep.mubr.bf16.mxu0 0
    %2183 = vmatmul.mubr.bf16.gmra.mrb[0].mxu0 %v2148
    %v2184 = vpop.f32.mrb[0].mxu0
    %v2185 = vadd.f32 0.0, %v2184
    %v2186 = vpop.f32.mrb[0].mxu0
    %v2187 = vpop.f32.mrb[0].mxu0
    %v2188 = vpop.f32.mrb[0].mxu0
    %2189 = vdwg.mxu0
    %2190 = vrot.lane.b32.xlu0 %v1213, 112
    %v2191 = vpop.permute.xlu0 %2190
    %v2194 = vsel %vm90, %v1957, 0
    %2196 = vmatprep.subr.bf16.mxu0 0
    %2197 = vmatpush1.bf16.msra.mxu0 %v2191
    %2198 = vmatprep.subr.bf16.mxu0 0
    %2199 = vmatpush1.bf16.msra.mxu0 0
    %2200 = vmatprep.subr.bf16.mxu0 0
    %2201 = vmatpush1.bf16.msra.mxu0 0
    %2202 = vmatprep.subr.bf16.mxu0 0
    %2203 = vmatpush1.bf16.msra.mxu0 0
    %2204 = vmatprep.subr.bf16.mxu0 0
    %2205 = vmatpush1.bf16.msra.mxu0 0
    %2206 = vmatprep.subr.bf16.mxu0 0
    %2207 = vmatpush1.bf16.msra.mxu0 0
    %2208 = vmatprep.subr.bf16.mxu0 0
    %2209 = vmatpush1.bf16.msra.mxu0 0
    %2210 = vmatprep.subr.bf16.mxu0 0
    %2211 = vmatpush1.bf16.msra.mxu0 0
    %2212 = vmatprep.subr.bf16.mxu0 0
    %2213 = vmatpush1.bf16.msra.mxu0 0
    %2214 = vmatprep.subr.bf16.mxu0 0
    %2215 = vmatpush1.bf16.msra.mxu0 0
    %2216 = vmatprep.subr.bf16.mxu0 0
    %2217 = vmatpush1.bf16.msra.mxu0 0
    %2218 = vmatprep.subr.bf16.mxu0 0
    %2219 = vmatpush1.bf16.msra.mxu0 0
    %2220 = vmatprep.subr.bf16.mxu0 0
    %2221 = vmatpush1.bf16.msra.mxu0 0
    %2222 = vmatprep.subr.bf16.mxu0 0
    %2223 = vmatpush1.bf16.msra.mxu0 0
    %2224 = vmatprep.subr.bf16.mxu0 0
    %2225 = vmatpush1.bf16.msra.mxu0 0
    %2226 = vmatprep.subr.bf16.mxu0 0
    %2227 = vmatpush1.bf16.msra.mxu0 0
    %2228 = vmatprep.mubr.bf16.mxu0 0
    %2229 = vmatmul.mubr.bf16.gmra.mrb[0].mxu0 %v2194
    %v2230 = vpop.f32.mrb[0].mxu0
    %v2231 = vadd.f32 0.0, %v2230
    %v2232 = vpop.f32.mrb[0].mxu0
    %v2233 = vpop.f32.mrb[0].mxu0
    %v2234 = vpop.f32.mrb[0].mxu0
    %2235 = vdwg.mxu0
    %2236 = vrot.lane.b32.xlu0 %v1214, 112
    %v2237 = vpop.permute.xlu0 %2236
    %v2240 = vsel %vm90, %v1958, 0
    %2242 = vmatprep.subr.bf16.mxu0 0
    %2243 = vmatpush1.bf16.msra.mxu0 %v2237
    %2244 = vmatprep.subr.bf16.mxu0 0
    %2245 = vmatpush1.bf16.msra.mxu0 0
    %2246 = vmatprep.subr.bf16.mxu0 0
    %2247 = vmatpush1.bf16.msra.mxu0 0
    %2248 = vmatprep.subr.bf16.mxu0 0
    %2249 = vmatpush1.bf16.msra.mxu0 0
    %2250 = vmatprep.subr.bf16.mxu0 0
    %2251 = vmatpush1.bf16.msra.mxu0 0
    %2252 = vmatprep.subr.bf16.mxu0 0
    %2253 = vmatpush1.bf16.msra.mxu0 0
    %2254 = vmatprep.subr.bf16.mxu0 0
    %2255 = vmatpush1.bf16.msra.mxu0 0
    %2256 = vmatprep.subr.bf16.mxu0 0
    %2257 = vmatpush1.bf16.msra.mxu0 0
    %2258 = vmatprep.subr.bf16.mxu0 0
    %2259 = vmatpush1.bf16.msra.mxu0 0
    %2260 = vmatprep.subr.bf16.mxu0 0
    %2261 = vmatpush1.bf16.msra.mxu0 0
    %2262 = vmatprep.subr.bf16.mxu0 0
    %2263 = vmatpush1.bf16.msra.mxu0 0
    %2264 = vmatprep.subr.bf16.mxu0 0
    %2265 = vmatpush1.bf16.msra.mxu0 0
    %2266 = vmatprep.subr.bf16.mxu0 0
    %2267 = vmatpush1.bf16.msra.mxu0 0
    %2268 = vmatprep.subr.bf16.mxu0 0
    %2269 = vmatpush1.bf16.msra.mxu0 0
    %2270 = vmatprep.subr.bf16.mxu0 0
    %2271 = vmatpush1.bf16.msra.mxu0 0
    %2272 = vmatprep.subr.bf16.mxu0 0
    %2273 = vmatpush1.bf16.msra.mxu0 0
    %2274 = vmatprep.mubr.bf16.mxu0 0
    %2275 = vmatmul.mubr.bf16.gmra.mrb[0].mxu0 %v2240
    %v2276 = vpop.f32.mrb[0].mxu0
    %v2277 = vadd.f32 0.0, %v2276
    %v2278 = vpop.f32.mrb[0].mxu0
    %v2279 = vpop.f32.mrb[0].mxu0
    %v2280 = vpop.f32.mrb[0].mxu0
    %2281 = vdwg.mxu0
    %2282 = vrot.lane.b32.xlu0 %v1215, 112
    %v2283 = vpop.permute.xlu0 %2282
    %v2286 = vsel %vm90, %v1959, 0
    %2288 = vmatprep.subr.bf16.mxu0 0
    %2289 = vmatpush1.bf16.msra.mxu0 %v2283
    %2290 = vmatprep.subr.bf16.mxu0 0
    %2291 = vmatpush1.bf16.msra.mxu0 0
    %2292 = vmatprep.subr.bf16.mxu0 0
    %2293 = vmatpush1.bf16.msra.mxu0 0
    %2294 = vmatprep.subr.bf16.mxu0 0
    %2295 = vmatpush1.bf16.msra.mxu0 0
    %2296 = vmatprep.subr.bf16.mxu0 0
    %2297 = vmatpush1.bf16.msra.mxu0 0
    %2298 = vmatprep.subr.bf16.mxu0 0
    %2299 = vmatpush1.bf16.msra.mxu0 0
    %2300 = vmatprep.subr.bf16.mxu0 0
    %2301 = vmatpush1.bf16.msra.mxu0 0
    %2302 = vmatprep.subr.bf16.mxu0 0
    %2303 = vmatpush1.bf16.msra.mxu0 0
    %2304 = vmatprep.subr.bf16.mxu0 0
    %2305 = vmatpush1.bf16.msra.mxu0 0
    %2306 = vmatprep.subr.bf16.mxu0 0
    %2307 = vmatpush1.bf16.msra.mxu0 0
    %2308 = vmatprep.subr.bf16.mxu0 0
    %2309 = vmatpush1.bf16.msra.mxu0 0
    %2310 = vmatprep.subr.bf16.mxu0 0
    %2311 = vmatpush1.bf16.msra.mxu0 0
    %2312 = vmatprep.subr.bf16.mxu0 0
    %2313 = vmatpush1.bf16.msra.mxu0 0
    %2314 = vmatprep.subr.bf16.mxu0 0
    %2315 = vmatpush1.bf16.msra.mxu0 0
    %2316 = vmatprep.subr.bf16.mxu0 0
    %2317 = vmatpush1.bf16.msra.mxu0 0
    %2318 = vmatprep.subr.bf16.mxu0 0
    %2319 = vmatpush1.bf16.msra.mxu0 0
    %2320 = vmatprep.mubr.bf16.mxu0 0
    %2321 = vmatmul.mubr.bf16.gmra.mrb[0].mxu0 %v2286
    %v2322 = vpop.f32.mrb[0].mxu0
    %v2323 = vadd.f32 0.0, %v2322
    %v2324 = vpop.f32.mrb[0].mxu0
    %v2325 = vpop.f32.mrb[0].mxu0
    %v2326 = vpop.f32.mrb[0].mxu0
    %2327 = vdwg.mxu0
    %v2328 = vpack.c.bf16 %v1067, %v1067
    %v2329 = vpack.c.bf16 %v1071, %v1071
    %v2330 = vpack.c.bf16 %v1075, %v1075
    %v2331 = vpack.c.bf16 %v1079, %v1079
    %v2332 = vpack.c.bf16 %v1083, %v1083
    %v2333 = vpack.c.bf16 %v1087, %v1087
    %v2334 = vpack.c.bf16 %v1091, %v1091
    %v2335 = vpack.c.bf16 %v1095, %v1095
    %2336 = vrot.lane.b32.xlu0 %v1208, 104
    %v2337 = vpop.permute.xlu0 %2336
    %v2340 = vsel %vm90, %v2328, 0
    %2342 = vmatprep.subr.bf16.mxu0 0
    %2343 = vmatpush1.bf16.msra.mxu0 %v2337
    %2344 = vmatprep.subr.bf16.mxu0 0
    %2345 = vmatpush1.bf16.msra.mxu0 0
    %2346 = vmatprep.subr.bf16.mxu0 0
    %2347 = vmatpush1.bf16.msra.mxu0 0
    %2348 = vmatprep.subr.bf16.mxu0 0
    %2349 = vmatpush1.bf16.msra.mxu0 0
    %2350 = vmatprep.subr.bf16.mxu0 0
    %2351 = vmatpush1.bf16.msra.mxu0 0
    %2352 = vmatprep.subr.bf16.mxu0 0
    %2353 = vmatpush1.bf16.msra.mxu0 0
    %2354 = vmatprep.subr.bf16.mxu0 0
    %2355 = vmatpush1.bf16.msra.mxu0 0
    %2356 = vmatprep.subr.bf16.mxu0 0
    %2357 = vmatpush1.bf16.msra.mxu0 0
    %2358 = vmatprep.subr.bf16.mxu0 0
    %2359 = vmatpush1.bf16.msra.mxu0 0
    %2360 = vmatprep.subr.bf16.mxu0 0
    %2361 = vmatpush1.bf16.msra.mxu0 0
    %2362 = vmatprep.subr.bf16.mxu0 0
    %2363 = vmatpush1.bf16.msra.mxu0 0
    %2364 = vmatprep.subr.bf16.mxu0 0
    %2365 = vmatpush1.bf16.msra.mxu0 0
    %2366 = vmatprep.subr.bf16.mxu0 0
    %2367 = vmatpush1.bf16.msra.mxu0 0
    %2368 = vmatprep.subr.bf16.mxu0 0
    %2369 = vmatpush1.bf16.msra.mxu0 0
    %2370 = vmatprep.subr.bf16.mxu0 0
    %2371 = vmatpush1.bf16.msra.mxu0 0
    %2372 = vmatprep.subr.bf16.mxu0 0
    %2373 = vmatpush1.bf16.msra.mxu0 0
    %2374 = vmatprep.mubr.bf16.mxu0 0
    %2375 = vmatmul.mubr.bf16.gmra.mrb[0].mxu0 %v2340
    %v2376 = vpop.f32.mrb[0].mxu0
    %v2377 = vadd.f32 0.0, %v2376
    %v2378 = vpop.f32.mrb[0].mxu0
    %v2379 = vpop.f32.mrb[0].mxu0
    %v2380 = vpop.f32.mrb[0].mxu0
    %2381 = vdwg.mxu0
    %2382 = vrot.lane.b32.xlu0 %v1209, 104
    %v2383 = vpop.permute.xlu0 %2382
    %v2386 = vsel %vm90, %v2329, 0
    %2388 = vmatprep.subr.bf16.mxu0 0
    %2389 = vmatpush1.bf16.msra.mxu0 %v2383
    %2390 = vmatprep.subr.bf16.mxu0 0
    %2391 = vmatpush1.bf16.msra.mxu0 0
    %2392 = vmatprep.subr.bf16.mxu0 0
    %2393 = vmatpush1.bf16.msra.mxu0 0
    %2394 = vmatprep.subr.bf16.mxu0 0
    %2395 = vmatpush1.bf16.msra.mxu0 0
    %2396 = vmatprep.subr.bf16.mxu0 0
    %2397 = vmatpush1.bf16.msra.mxu0 0
    %2398 = vmatprep.subr.bf16.mxu0 0
    %2399 = vmatpush1.bf16.msra.mxu0 0
    %2400 = vmatprep.subr.bf16.mxu0 0
    %2401 = vmatpush1.bf16.msra.mxu0 0
    %2402 = vmatprep.subr.bf16.mxu0 0
    %2403 = vmatpush1.bf16.msra.mxu0 0
    %2404 = vmatprep.subr.bf16.mxu0 0
    %2405 = vmatpush1.bf16.msra.mxu0 0
    %2406 = vmatprep.subr.bf16.mxu0 0
    %2407 = vmatpush1.bf16.msra.mxu0 0
    %2408 = vmatprep.subr.bf16.mxu0 0
    %2409 = vmatpush1.bf16.msra.mxu0 0
    %2410 = vmatprep.subr.bf16.mxu0 0
    %2411 = vmatpush1.bf16.msra.mxu0 0
    %2412 = vmatprep.subr.bf16.mxu0 0
    %2413 = vmatpush1.bf16.msra.mxu0 0
    %2414 = vmatprep.subr.bf16.mxu0 0
    %2415 = vmatpush1.bf16.msra.mxu0 0
    %2416 = vmatprep.subr.bf16.mxu0 0
    %2417 = vmatpush1.bf16.msra.mxu0 0
    %2418 = vmatprep.subr.bf16.mxu0 0
    %2419 = vmatpush1.bf16.msra.mxu0 0
    %2420 = vmatprep.mubr.bf16.mxu0 0
    %2421 = vmatmul.mubr.bf16.gmra.mrb[0].mxu0 %v2386
    %v2422 = vpop.f32.mrb[0].mxu0
    %v2423 = vadd.f32 0.0, %v2422
    %v2424 = vpop.f32.mrb[0].mxu0
    %v2425 = vpop.f32.mrb[0].mxu0
    %v2426 = vpop.f32.mrb[0].mxu0
    %2427 = vdwg.mxu0
    %2428 = vrot.lane.b32.xlu0 %v1210, 104
    %v2429 = vpop.permute.xlu0 %2428
    %v2432 = vsel %vm90, %v2330, 0
    %2434 = vmatprep.subr.bf16.mxu0 0
    %2435 = vmatpush1.bf16.msra.mxu0 %v2429
    %2436 = vmatprep.subr.bf16.mxu0 0
    %2437 = vmatpush1.bf16.msra.mxu0 0
    %2438 = vmatprep.subr.bf16.mxu0 0
    %2439 = vmatpush1.bf16.msra.mxu0 0
    %2440 = vmatprep.subr.bf16.mxu0 0
    %2441 = vmatpush1.bf16.msra.mxu0 0
    %2442 = vmatprep.subr.bf16.mxu0 0
    %2443 = vmatpush1.bf16.msra.mxu0 0
    %2444 = vmatprep.subr.bf16.mxu0 0
    %2445 = vmatpush1.bf16.msra.mxu0 0
    %2446 = vmatprep.subr.bf16.mxu0 0
    %2447 = vmatpush1.bf16.msra.mxu0 0
    %2448 = vmatprep.subr.bf16.mxu0 0
    %2449 = vmatpush1.bf16.msra.mxu0 0
    %2450 = vmatprep.subr.bf16.mxu0 0
    %2451 = vmatpush1.bf16.msra.mxu0 0
    %2452 = vmatprep.subr.bf16.mxu0 0
    %2453 = vmatpush1.bf16.msra.mxu0 0
    %2454 = vmatprep.subr.bf16.mxu0 0
    %2455 = vmatpush1.bf16.msra.mxu0 0
    %2456 = vmatprep.subr.bf16.mxu0 0
    %2457 = vmatpush1.bf16.msra.mxu0 0
    %2458 = vmatprep.subr.bf16.mxu0 0
    %2459 = vmatpush1.bf16.msra.mxu0 0
    %2460 = vmatprep.subr.bf16.mxu0 0
    %2461 = vmatpush1.bf16.msra.mxu0 0
    %2462 = vmatprep.subr.bf16.mxu0 0
    %2463 = vmatpush1.bf16.msra.mxu0 0
    %2464 = vmatprep.subr.bf16.mxu0 0
    %2465 = vmatpush1.bf16.msra.mxu0 0
    %2466 = vmatprep.mubr.bf16.mxu0 0
    %2467 = vmatmul.mubr.bf16.gmra.mrb[0].mxu0 %v2432
    %v2468 = vpop.f32.mrb[0].mxu0
    %v2469 = vadd.f32 0.0, %v2468
    %v2470 = vpop.f32.mrb[0].mxu0
    %v2471 = vpop.f32.mrb[0].mxu0
    %v2472 = vpop.f32.mrb[0].mxu0
    %2473 = vdwg.mxu0
    %2474 = vrot.lane.b32.xlu0 %v1211, 104
    %v2475 = vpop.permute.xlu0 %2474
    %v2478 = vsel %vm90, %v2331, 0
    %2480 = vmatprep.subr.bf16.mxu0 0
    %2481 = vmatpush1.bf16.msra.mxu0 %v2475
    %2482 = vmatprep.subr.bf16.mxu0 0
    %2483 = vmatpush1.bf16.msra.mxu0 0
    %2484 = vmatprep.subr.bf16.mxu0 0
    %2485 = vmatpush1.bf16.msra.mxu0 0
    %2486 = vmatprep.subr.bf16.mxu0 0
    %2487 = vmatpush1.bf16.msra.mxu0 0
    %2488 = vmatprep.subr.bf16.mxu0 0
    %2489 = vmatpush1.bf16.msra.mxu0 0
    %2490 = vmatprep.subr.bf16.mxu0 0
    %2491 = vmatpush1.bf16.msra.mxu0 0
    %2492 = vmatprep.subr.bf16.mxu0 0
    %2493 = vmatpush1.bf16.msra.mxu0 0
    %2494 = vmatprep.subr.bf16.mxu0 0
    %2495 = vmatpush1.bf16.msra.mxu0 0
    %2496 = vmatprep.subr.bf16.mxu0 0
    %2497 = vmatpush1.bf16.msra.mxu0 0
    %2498 = vmatprep.subr.bf16.mxu0 0
    %2499 = vmatpush1.bf16.msra.mxu0 0
    %2500 = vmatprep.subr.bf16.mxu0 0
    %2501 = vmatpush1.bf16.msra.mxu0 0
    %2502 = vmatprep.subr.bf16.mxu0 0
    %2503 = vmatpush1.bf16.msra.mxu0 0
    %2504 = vmatprep.subr.bf16.mxu0 0
    %2505 = vmatpush1.bf16.msra.mxu0 0
    %2506 = vmatprep.subr.bf16.mxu0 0
    %2507 = vmatpush1.bf16.msra.mxu0 0
    %2508 = vmatprep.subr.bf16.mxu0 0
    %2509 = vmatpush1.bf16.msra.mxu0 0
    %2510 = vmatprep.subr.bf16.mxu0 0
    %2511 = vmatpush1.bf16.msra.mxu0 0
    %2512 = vmatprep.mubr.bf16.mxu0 0
    %2513 = vmatmul.mubr.bf16.gmra.mrb[0].mxu0 %v2478
    %v2514 = vpop.f32.mrb[0].mxu0
    %v2515 = vadd.f32 0.0, %v2514
    %v2516 = vpop.f32.mrb[0].mxu0
    %v2517 = vpop.f32.mrb[0].mxu0
    %v2518 = vpop.f32.mrb[0].mxu0
    %2519 = vdwg.mxu0
    %2520 = vrot.lane.b32.xlu0 %v1212, 104
    %v2521 = vpop.permute.xlu0 %2520
    %v2524 = vsel %vm90, %v2332, 0
    %2526 = vmatprep.subr.bf16.mxu0 0
    %2527 = vmatpush1.bf16.msra.mxu0 %v2521
    %2528 = vmatprep.subr.bf16.mxu0 0
    %2529 = vmatpush1.bf16.msra.mxu0 0
    %2530 = vmatprep.subr.bf16.mxu0 0
    %2531 = vmatpush1.bf16.msra.mxu0 0
    %2532 = vmatprep.subr.bf16.mxu0 0
    %2533 = vmatpush1.bf16.msra.mxu0 0
    %2534 = vmatprep.subr.bf16.mxu0 0
    %2535 = vmatpush1.bf16.msra.mxu0 0
    %2536 = vmatprep.subr.bf16.mxu0 0
    %2537 = vmatpush1.bf16.msra.mxu0 0
    %2538 = vmatprep.subr.bf16.mxu0 0
    %2539 = vmatpush1.bf16.msra.mxu0 0
    %2540 = vmatprep.subr.bf16.mxu0 0
    %2541 = vmatpush1.bf16.msra.mxu0 0
    %2542 = vmatprep.subr.bf16.mxu0 0
    %2543 = vmatpush1.bf16.msra.mxu0 0
    %2544 = vmatprep.subr.bf16.mxu0 0
    %2545 = vmatpush1.bf16.msra.mxu0 0
    %2546 = vmatprep.subr.bf16.mxu0 0
    %2547 = vmatpush1.bf16.msra.mxu0 0
    %2548 = vmatprep.subr.bf16.mxu0 0
    %2549 = vmatpush1.bf16.msra.mxu0 0
    %2550 = vmatprep.subr.bf16.mxu0 0
    %2551 = vmatpush1.bf16.msra.mxu0 0
    %2552 = vmatprep.subr.bf16.mxu0 0
    %2553 = vmatpush1.bf16.msra.mxu0 0
    %2554 = vmatprep.subr.bf16.mxu0 0
    %2555 = vmatpush1.bf16.msra.mxu0 0
    %2556 = vmatprep.subr.bf16.mxu0 0
    %2557 = vmatpush1.bf16.msra.mxu0 0
    %2558 = vmatprep.mubr.bf16.mxu0 0
    %2559 = vmatmul.mubr.bf16.gmra.mrb[0].mxu0 %v2524
    %v2560 = vpop.f32.mrb[0].mxu0
    %v2561 = vadd.f32 0.0, %v2560
    %v2562 = vpop.f32.mrb[0].mxu0
    %v2563 = vpop.f32.mrb[0].mxu0
    %v2564 = vpop.f32.mrb[0].mxu0
    %2565 = vdwg.mxu0
    %2566 = vrot.lane.b32.xlu0 %v1213, 104
    %v2567 = vpop.permute.xlu0 %2566
    %v2570 = vsel %vm90, %v2333, 0
    %2572 = vmatprep.subr.bf16.mxu0 0
    %2573 = vmatpush1.bf16.msra.mxu0 %v2567
    %2574 = vmatprep.subr.bf16.mxu0 0
    %2575 = vmatpush1.bf16.msra.mxu0 0
    %2576 = vmatprep.subr.bf16.mxu0 0
    %2577 = vmatpush1.bf16.msra.mxu0 0
    %2578 = vmatprep.subr.bf16.mxu0 0
    %2579 = vmatpush1.bf16.msra.mxu0 0
    %2580 = vmatprep.subr.bf16.mxu0 0
    %2581 = vmatpush1.bf16.msra.mxu0 0
    %2582 = vmatprep.subr.bf16.mxu0 0
    %2583 = vmatpush1.bf16.msra.mxu0 0
    %2584 = vmatprep.subr.bf16.mxu0 0
    %2585 = vmatpush1.bf16.msra.mxu0 0
    %2586 = vmatprep.subr.bf16.mxu0 0
    %2587 = vmatpush1.bf16.msra.mxu0 0
    %2588 = vmatprep.subr.bf16.mxu0 0
    %2589 = vmatpush1.bf16.msra.mxu0 0
    %2590 = vmatprep.subr.bf16.mxu0 0
    %2591 = vmatpush1.bf16.msra.mxu0 0
    %2592 = vmatprep.subr.bf16.mxu0 0
    %2593 = vmatpush1.bf16.msra.mxu0 0
    %2594 = vmatprep.subr.bf16.mxu0 0
    %2595 = vmatpush1.bf16.msra.mxu0 0
    %2596 = vmatprep.subr.bf16.mxu0 0
    %2597 = vmatpush1.bf16.msra.mxu0 0
    %2598 = vmatprep.subr.bf16.mxu0 0
    %2599 = vmatpush1.bf16.msra.mxu0 0
    %2600 = vmatprep.subr.bf16.mxu0 0
    %2601 = vmatpush1.bf16.msra.mxu0 0
    %2602 = vmatprep.subr.bf16.mxu0 0
    %2603 = vmatpush1.bf16.msra.mxu0 0
    %2604 = vmatprep.mubr.bf16.mxu0 0
    %2605 = vmatmul.mubr.bf16.gmra.mrb[0].mxu0 %v2570
    %v2606 = vpop.f32.mrb[0].mxu0
    %v2607 = vadd.f32 0.0, %v2606
    %v2608 = vpop.f32.mrb[0].mxu0
    %v2609 = vpop.f32.mrb[0].mxu0
    %v2610 = vpop.f32.mrb[0].mxu0
    %2611 = vdwg.mxu0
    %2612 = vrot.lane.b32.xlu0 %v1214, 104
    %v2613 = vpop.permute.xlu0 %2612
    %v2616 = vsel %vm90, %v2334, 0
    %2618 = vmatprep.subr.bf16.mxu0 0
    %2619 = vmatpush1.bf16.msra.mxu0 %v2613
    %2620 = vmatprep.subr.bf16.mxu0 0
    %2621 = vmatpush1.bf16.msra.mxu0 0
    %2622 = vmatprep.subr.bf16.mxu0 0
    %2623 = vmatpush1.bf16.msra.mxu0 0
    %2624 = vmatprep.subr.bf16.mxu0 0
    %2625 = vmatpush1.bf16.msra.mxu0 0
    %2626 = vmatprep.subr.bf16.mxu0 0
    %2627 = vmatpush1.bf16.msra.mxu0 0
    %2628 = vmatprep.subr.bf16.mxu0 0
    %2629 = vmatpush1.bf16.msra.mxu0 0
    %2630 = vmatprep.subr.bf16.mxu0 0
    %2631 = vmatpush1.bf16.msra.mxu0 0
    %2632 = vmatprep.subr.bf16.mxu0 0
    %2633 = vmatpush1.bf16.msra.mxu0 0
    %2634 = vmatprep.subr.bf16.mxu0 0
    %2635 = vmatpush1.bf16.msra.mxu0 0
    %2636 = vmatprep.subr.bf16.mxu0 0
    %2637 = vmatpush1.bf16.msra.mxu0 0
    %2638 = vmatprep.subr.bf16.mxu0 0
    %2639 = vmatpush1.bf16.msra.mxu0 0
    %2640 = vmatprep.subr.bf16.mxu0 0
    %2641 = vmatpush1.bf16.msra.mxu0 0
    %2642 = vmatprep.subr.bf16.mxu0 0
    %2643 = vmatpush1.bf16.msra.mxu0 0
    %2644 = vmatprep.subr.bf16.mxu0 0
    %2645 = vmatpush1.bf16.msra.mxu0 0
    %2646 = vmatprep.subr.bf16.mxu0 0
    %2647 = vmatpush1.bf16.msra.mxu0 0
    %2648 = vmatprep.subr.bf16.mxu0 0
    %2649 = vmatpush1.bf16.msra.mxu0 0
    %2650 = vmatprep.mubr.bf16.mxu0 0
    %2651 = vmatmul.mubr.bf16.gmra.mrb[0].mxu0 %v2616
    %v2652 = vpop.f32.mrb[0].mxu0
    %v2653 = vadd.f32 0.0, %v2652
    %v2654 = vpop.f32.mrb[0].mxu0
    %v2655 = vpop.f32.mrb[0].mxu0
    %v2656 = vpop.f32.mrb[0].mxu0
    %2657 = vdwg.mxu0
    %2658 = vrot.lane.b32.xlu0 %v1215, 104
    %v2659 = vpop.permute.xlu0 %2658
    %v2662 = vsel %vm90, %v2335, 0
    %2664 = vmatprep.subr.bf16.mxu0 0
    %2665 = vmatpush1.bf16.msra.mxu0 %v2659
    %2666 = vmatprep.subr.bf16.mxu0 0
    %2667 = vmatpush1.bf16.msra.mxu0 0
    %2668 = vmatprep.subr.bf16.mxu0 0
    %2669 = vmatpush1.bf16.msra.mxu0 0
    %2670 = vmatprep.subr.bf16.mxu0 0
    %2671 = vmatpush1.bf16.msra.mxu0 0
    %2672 = vmatprep.subr.bf16.mxu0 0
    %2673 = vmatpush1.bf16.msra.mxu0 0
    %2674 = vmatprep.subr.bf16.mxu0 0
    %2675 = vmatpush1.bf16.msra.mxu0 0
    %2676 = vmatprep.subr.bf16.mxu0 0
    %2677 = vmatpush1.bf16.msra.mxu0 0
    %2678 = vmatprep.subr.bf16.mxu0 0
    %2679 = vmatpush1.bf16.msra.mxu0 0
    %2680 = vmatprep.subr.bf16.mxu0 0
    %2681 = vmatpush1.bf16.msra.mxu0 0
    %2682 = vmatprep.subr.bf16.mxu0 0
    %2683 = vmatpush1.bf16.msra.mxu0 0
    %2684 = vmatprep.subr.bf16.mxu0 0
    %2685 = vmatpush1.bf16.msra.mxu0 0
    %2686 = vmatprep.subr.bf16.mxu0 0
    %2687 = vmatpush1.bf16.msra.mxu0 0
    %2688 = vmatprep.subr.bf16.mxu0 0
    %2689 = vmatpush1.bf16.msra.mxu0 0
    %2690 = vmatprep.subr.bf16.mxu0 0
    %2691 = vmatpush1.bf16.msra.mxu0 0
    %2692 = vmatprep.subr.bf16.mxu0 0
    %2693 = vmatpush1.bf16.msra.mxu0 0
    %2694 = vmatprep.subr.bf16.mxu0 0
    %2695 = vmatpush1.bf16.msra.mxu0 0
    %2696 = vmatprep.mubr.bf16.mxu0 0
    %2697 = vmatmul.mubr.bf16.gmra.mrb[0].mxu0 %v2662
    %v2698 = vpop.f32.mrb[0].mxu0
    %v2699 = vadd.f32 0.0, %v2698
    %v2700 = vpop.f32.mrb[0].mxu0
    %v2701 = vpop.f32.mrb[0].mxu0
    %v2702 = vpop.f32.mrb[0].mxu0
    %2703 = vdwg.mxu0
    %2712 = vrot.lane.b32.xlu0 %v1618, 8
    %v2713 = vpop.permute.xlu0 %2712
    %2714 = vrot.lane.b32.xlu0 %v1665, 8
    %v2715 = vpop.permute.xlu0 %2714
    %2716 = vrot.lane.b32.xlu0 %v1712, 8
    %v2717 = vpop.permute.xlu0 %2716
    %2718 = vrot.lane.b32.xlu0 %v1759, 8
    %v2719 = vpop.permute.xlu0 %2718
    %2720 = vrot.lane.b32.xlu0 %v1806, 8
    %v2721 = vpop.permute.xlu0 %2720
    %2722 = vrot.lane.b32.xlu0 %v1853, 8
    %v2723 = vpop.permute.xlu0 %2722
    %2724 = vrot.lane.b32.xlu0 %v1900, 8
    %v2725 = vpop.permute.xlu0 %2724
    %2726 = vrot.lane.b32.xlu0 %v1947, 8
    %v2727 = vpop.permute.xlu0 %2726
    %2744 = vrot.lane.b32.xlu0 %v2001, 16
    %v2745 = vpop.permute.xlu0 %2744
    %2746 = vrot.lane.b32.xlu0 %v2047, 16
    %v2747 = vpop.permute.xlu0 %2746
    %2748 = vrot.lane.b32.xlu0 %v2093, 16
    %v2749 = vpop.permute.xlu0 %2748
    %2750 = vrot.lane.b32.xlu0 %v2139, 16
    %v2751 = vpop.permute.xlu0 %2750
    %2752 = vrot.lane.b32.xlu0 %v2185, 16
    %v2753 = vpop.permute.xlu0 %2752
    %2754 = vrot.lane.b32.xlu0 %v2231, 16
    %v2755 = vpop.permute.xlu0 %2754
    %2756 = vrot.lane.b32.xlu0 %v2277, 16
    %v2757 = vpop.permute.xlu0 %2756
    %2758 = vrot.lane.b32.xlu0 %v2323, 16
    %v2759 = vpop.permute.xlu0 %2758
    %2776 = vrot.lane.b32.xlu0 %v2377, 24
    %v2777 = vpop.permute.xlu0 %2776
    %2778 = vrot.lane.b32.xlu0 %v2423, 24
    %v2779 = vpop.permute.xlu0 %2778
    %2780 = vrot.lane.b32.xlu0 %v2469, 24
    %v2781 = vpop.permute.xlu0 %2780
    %2782 = vrot.lane.b32.xlu0 %v2515, 24
    %v2783 = vpop.permute.xlu0 %2782
    %2784 = vrot.lane.b32.xlu0 %v2561, 24
    %v2785 = vpop.permute.xlu0 %2784
    %2786 = vrot.lane.b32.xlu0 %v2607, 24
    %v2787 = vpop.permute.xlu0 %2786
    %2788 = vrot.lane.b32.xlu0 %v2653, 24
    %v2789 = vpop.permute.xlu0 %2788
    %2790 = vrot.lane.b32.xlu0 %v2699, 24
    %v2791 = vpop.permute.xlu0 %2790
    %vm2800 = vcmask 64512
    %v2801 = vsel %vm2800, %v1262, %v2713
    %v2802 = vsel %vm2800, %v1305, %v2715
    %v2803 = vsel %vm2800, %v1348, %v2717
    %v2804 = vsel %vm2800, %v1391, %v2719
    %v2805 = vsel %vm2800, %v1434, %v2721
    %v2806 = vsel %vm2800, %v1477, %v2723
    %v2807 = vsel %vm2800, %v1520, %v2725
    %v2808 = vsel %vm2800, %v1563, %v2727
    %v2809 = vsel %vm90, %v2801, %v2745
    %v2810 = vsel %vm90, %v2802, %v2747
    %v2811 = vsel %vm90, %v2803, %v2749
    %v2812 = vsel %vm90, %v2804, %v2751
    %v2813 = vsel %vm90, %v2805, %v2753
    %v2814 = vsel %vm90, %v2806, %v2755
    %v2815 = vsel %vm90, %v2807, %v2757
    %v2816 = vsel %vm90, %v2808, %v2759
    %vm2817 = vcmask 195584
    %v2818 = vsel %vm2817, %v2809, %v2777
    %v2819 = vsel %vm2817, %v2810, %v2779
    %v2820 = vsel %vm2817, %v2811, %v2781
    %v2821 = vsel %vm2817, %v2812, %v2783
    %v2822 = vsel %vm2817, %v2813, %v2785
    %v2823 = vsel %vm2817, %v2814, %v2787
    %v2824 = vsel %vm2817, %v2815, %v2789
    %v2825 = vsel %vm2817, %v2816, %v2791
    %v2826 = vpack.c.bf16 %v2819, %v2818
    %v2827 = vpack.c.bf16 %v2821, %v2820
    %v2828 = vpack.c.bf16 %v2823, %v2822
    %v2829 = vpack.c.bf16 %v2825, %v2824
    %v2830 = vld [vmem:[%s7] sm:$0xf]
    %v2831 = vld [vmem:[%s7 + $0x4] sm:$0xf]
    %v2832 = vld [vmem:[%s7 + $0x8] sm:$0xf]
    %v2833 = vld [vmem:[%s7 + $0xc] sm:$0xf]
    %v2834 = vld [vmem:[%s8] sm:$0x1]
    %v2836 = vlaneseq
    %v2837 = vshrl.u32 %v2836, 7
    %v2838 = vsub.s32 0, %v2837
    %v2839 = vrot.slane %v2834, %v2838
    %v2845 = vunpack.c.l.b16 %v2830
    %v2846 = vunpack.c.l.b16 %v2831
    %v2847 = vunpack.c.l.b16 %v2832
    %v2848 = vunpack.c.l.b16 %v2833
    %v2849 = vpack.c.b16 %v2846, %v2845
    %v2850 = vpack.c.b16 %v2848, %v2847
    %vm2853 = vcmask 261120
    %v2855 = vsel %vm2853, %v2826, 0
    %v2858 = vsel %vm2853, %v2827, 0
    %v2861 = vsel %vm2853, %v2828, 0
    %v2864 = vsel %vm2853, %v2829, 0
    %2866 = vmatprep.subr.bf16.mxu0 0
    %2867 = vmatpush1.bf16.msra.mxu0 %v2849
    %2868 = vmatprep.subr.bf16.mxu0 0
    %2869 = vmatpush1.bf16.msra.mxu0 %v2850
    %2870 = vmatprep.subr.bf16.mxu0 0
    %2871 = vmatpush1.bf16.msra.mxu0 0
    %2872 = vmatprep.subr.bf16.mxu0 0
    %2873 = vmatpush1.bf16.msra.mxu0 0
    %2874 = vmatprep.subr.bf16.mxu0 0
    %2875 = vmatpush1.bf16.msra.mxu0 0
    %2876 = vmatprep.subr.bf16.mxu0 0
    %2877 = vmatpush1.bf16.msra.mxu0 0
    %2878 = vmatprep.subr.bf16.mxu0 0
    %2879 = vmatpush1.bf16.msra.mxu0 0
    %2880 = vmatprep.subr.bf16.mxu0 0
    %2881 = vmatpush1.bf16.msra.mxu0 0
    %2882 = vmatprep.subr.bf16.mxu0 0
    %2883 = vmatpush1.bf16.msra.mxu0 0
    %2884 = vmatprep.subr.bf16.mxu0 0
    %2885 = vmatpush1.bf16.msra.mxu0 0
    %2886 = vmatprep.subr.bf16.mxu0 0
    %2887 = vmatpush1.bf16.msra.mxu0 0
    %2888 = vmatprep.subr.bf16.mxu0 0
    %2889 = vmatpush1.bf16.msra.mxu0 0
    %2890 = vmatprep.subr.bf16.mxu0 0
    %2891 = vmatpush1.bf16.msra.mxu0 0
    %2892 = vmatprep.subr.bf16.mxu0 0
    %2893 = vmatpush1.bf16.msra.mxu0 0
    %2894 = vmatprep.subr.bf16.mxu0 0
    %2895 = vmatpush1.bf16.msra.mxu0 0
    %2896 = vmatprep.subr.bf16.mxu0 0
    %2897 = vmatpush1.bf16.msra.mxu0 0
    %2898 = vmatprep.mubr.bf16.mxu0 0
    %2899 = vmatmul.mubr.bf16.gmra.mrb[0].mxu0 %v2855
    %v2900 = vpop.f32.mrb[0].mxu0
    %v2901 = vadd.f32 %v2839, %v2900
    %v2902 = vpop.f32.mrb[0].mxu0
    %v2903 = vpop.f32.mrb[0].mxu0
    %v2904 = vadd.f32 %v2839, %v2903
    %v2905 = vpop.f32.mrb[0].mxu0
    %2906 = vmatprep.mubr.bf16.mxu0 0
    %2907 = vmatmul.mubr.bf16.gmra.mrb[0].mxu0 %v2858
    %v2908 = vpop.f32.mrb[0].mxu0
    %v2909 = vadd.f32 %v2839, %v2908
    %v2910 = vpop.f32.mrb[0].mxu0
    %v2911 = vpop.f32.mrb[0].mxu0
    %v2912 = vadd.f32 %v2839, %v2911
    %v2913 = vpop.f32.mrb[0].mxu0
    %2914 = vmatprep.mubr.bf16.mxu0 0
    %2915 = vmatmul.mubr.bf16.gmra.mrb[0].mxu0 %v2861
    %v2916 = vpop.f32.mrb[0].mxu0
    %v2917 = vadd.f32 %v2839, %v2916
    %v2918 = vpop.f32.mrb[0].mxu0
    %v2919 = vpop.f32.mrb[0].mxu0
    %v2920 = vadd.f32 %v2839, %v2919
    %v2921 = vpop.f32.mrb[0].mxu0
    %2922 = vmatprep.mubr.bf16.mxu0 0
    %2923 = vmatmul.mubr.bf16.gmra.mrb[0].mxu0 %v2864
    %v2924 = vpop.f32.mrb[0].mxu0
    %v2925 = vadd.f32 %v2839, %v2924
    %v2926 = vpop.f32.mrb[0].mxu0
    %v2927 = vpop.f32.mrb[0].mxu0
    %v2928 = vadd.f32 %v2839, %v2927
    %v2929 = vpop.f32.mrb[0].mxu0
    %2930 = vdwg.mxu0
    %v2931 = vld [vmem:[%s9] sm:$0x1]
    %v2932 = vld [vmem:[%s10] sm:$0x1]
    %v2933 = vsel %vm2853, %v2901, 0.0
    %2934 = vadd.xlane.f32.xlu0 %v2933
    %v2935 = vpop.xlane.xlu0 %2934
    %v2936 = vsel %vm2853, %v2904, 0.0
    %2937 = vadd.xlane.f32.xlu0 %v2936
    %v2938 = vpop.xlane.xlu0 %2937
    %v2939 = vsel %vm2853, %v2909, 0.0
    %2940 = vadd.xlane.f32.xlu0 %v2939
    %v2941 = vpop.xlane.xlu0 %2940
    %v2942 = vsel %vm2853, %v2912, 0.0
    %2943 = vadd.xlane.f32.xlu0 %v2942
    %v2944 = vpop.xlane.xlu0 %2943
    %v2945 = vsel %vm2853, %v2917, 0.0
    %2946 = vadd.xlane.f32.xlu0 %v2945
    %v2947 = vpop.xlane.xlu0 %2946
    %v2948 = vsel %vm2853, %v2920, 0.0
    %2949 = vadd.xlane.f32.xlu0 %v2948
    %v2950 = vpop.xlane.xlu0 %2949
    %v2951 = vsel %vm2853, %v2925, 0.0
    %2952 = vadd.xlane.f32.xlu0 %v2951
    %v2953 = vpop.xlane.xlu0 %2952
    %v2954 = vsel %vm2853, %v2928, 0.0
    %2955 = vadd.xlane.f32.xlu0 %v2954
    %v2956 = vpop.xlane.xlu0 %2955
    %v2957 = vrcp.pop 32.0
    %v2958 = vmul.f32 %v2935, %v2957
    %v2959 = vmul.f32 %v2938, %v2957
    %v2960 = vmul.f32 %v2941, %v2957
    %v2961 = vmul.f32 %v2944, %v2957
    %v2962 = vmul.f32 %v2947, %v2957
    %v2963 = vmul.f32 %v2950, %v2957
    %v2964 = vmul.f32 %v2953, %v2957
    %v2965 = vmul.f32 %v2956, %v2957
    %v2966 = vsub.f32 %v2901, %v2958
    %v2967 = vsub.f32 %v2904, %v2959
    %v2968 = vsub.f32 %v2909, %v2960
    %v2969 = vsub.f32 %v2912, %v2961
    %v2970 = vsub.f32 %v2917, %v2962
    %v2971 = vsub.f32 %v2920, %v2963
    %v2972 = vsub.f32 %v2925, %v2964
    %v2973 = vsub.f32 %v2928, %v2965
    %v2974 = vmul.f32 %v2966, %v2966
    %v2975 = vmul.f32 %v2967, %v2967
    %v2976 = vmul.f32 %v2968, %v2968
    %v2977 = vmul.f32 %v2969, %v2969
    %v2978 = vmul.f32 %v2970, %v2970
    %v2979 = vmul.f32 %v2971, %v2971
    %v2980 = vmul.f32 %v2972, %v2972
    %v2981 = vmul.f32 %v2973, %v2973
    %v2982 = vsel %vm2853, %v2974, 0.0
    %2983 = vadd.xlane.f32.xlu0 %v2982
    %v2984 = vpop.xlane.xlu0 %2983
    %v2985 = vsel %vm2853, %v2975, 0.0
    %2986 = vadd.xlane.f32.xlu0 %v2985
    %v2987 = vpop.xlane.xlu0 %2986
    %v2988 = vsel %vm2853, %v2976, 0.0
    %2989 = vadd.xlane.f32.xlu0 %v2988
    %v2990 = vpop.xlane.xlu0 %2989
    %v2991 = vsel %vm2853, %v2977, 0.0
    %2992 = vadd.xlane.f32.xlu0 %v2991
    %v2993 = vpop.xlane.xlu0 %2992
    %v2994 = vsel %vm2853, %v2978, 0.0
    %2995 = vadd.xlane.f32.xlu0 %v2994
    %v2996 = vpop.xlane.xlu0 %2995
    %v2997 = vsel %vm2853, %v2979, 0.0
    %2998 = vadd.xlane.f32.xlu0 %v2997
    %v2999 = vpop.xlane.xlu0 %2998
    %v3000 = vsel %vm2853, %v2980, 0.0
    %3001 = vadd.xlane.f32.xlu0 %v3000
    %v3002 = vpop.xlane.xlu0 %3001
    %v3003 = vsel %vm2853, %v2981, 0.0
    %3004 = vadd.xlane.f32.xlu0 %v3003
    %v3005 = vpop.xlane.xlu0 %3004
    %v3006 = vmul.f32 %v2984, %v2957
    %v3007 = vmul.f32 %v2987, %v2957
    %v3008 = vmul.f32 %v2990, %v2957
    %v3009 = vmul.f32 %v2993, %v2957
    %v3010 = vmul.f32 %v2996, %v2957
    %v3011 = vmul.f32 %v2999, %v2957
    %v3012 = vmul.f32 %v3002, %v2957
    %v3013 = vmul.f32 %v3005, %v2957
    %v3014 = vadd.f32 %v3006, 1e-05
    %v3015 = vadd.f32 %v3007, 1e-05
    %v3016 = vadd.f32 %v3008, 1e-05
    %v3017 = vadd.f32 %v3009, 1e-05
    %v3018 = vadd.f32 %v3010, 1e-05
    %v3019 = vadd.f32 %v3011, 1e-05
    %v3020 = vadd.f32 %v3012, 1e-05
    %v3021 = vadd.f32 %v3013, 1e-05
    %v3022 = vrsqrt.pop %v3014
    %v3023 = vrsqrt.pop %v3015
    %v3024 = vrsqrt.pop %v3016
    %v3025 = vrsqrt.pop %v3017
    %v3026 = vrsqrt.pop %v3018
    %v3027 = vrsqrt.pop %v3019
    %v3028 = vrsqrt.pop %v3020
    %v3029 = vrsqrt.pop %v3021
    %v3030 = vmul.f32 %v2966, %v3022
    %v3031 = vmul.f32 %v2967, %v3023
    %v3032 = vmul.f32 %v2968, %v3024
    %v3033 = vmul.f32 %v2969, %v3025
    %v3034 = vmul.f32 %v2970, %v3026
    %v3035 = vmul.f32 %v2971, %v3027
    %v3036 = vmul.f32 %v2972, %v3028
    %v3037 = vmul.f32 %v2973, %v3029
    %v3039 = vlaneseq
    %v3040 = vshrl.u32 %v3039, 7
    %v3041 = vsub.s32 0, %v3040
    %v3042 = vrot.slane %v2931, %v3041
    %v3044 = vmul.f32 %v3030, %v3042
    %v3045 = vmul.f32 %v3031, %v3042
    %v3046 = vmul.f32 %v3032, %v3042
    %v3047 = vmul.f32 %v3033, %v3042
    %v3048 = vmul.f32 %v3034, %v3042
    %v3049 = vmul.f32 %v3035, %v3042
    %v3050 = vmul.f32 %v3036, %v3042
    %v3051 = vmul.f32 %v3037, %v3042
    %v3053 = vlaneseq
    %v3054 = vshrl.u32 %v3053, 7
    %v3055 = vsub.s32 0, %v3054
    %v3056 = vrot.slane %v2932, %v3055
    %v3058 = vadd.f32 %v3044, %v3056
    %v3059 = vadd.f32 %v3045, %v3056
    %v3060 = vadd.f32 %v3046, %v3056
    %v3061 = vadd.f32 %v3047, %v3056
    %v3062 = vadd.f32 %v3048, %v3056
    %v3063 = vadd.f32 %v3049, %v3056
    %v3064 = vadd.f32 %v3050, %v3056
    %v3065 = vadd.f32 %v3051, %v3056
    %v3066 = vpack.c.bf16 %v3059, %v3058
    %v3067 = vpack.c.bf16 %v3061, %v3060
    %v3068 = vpack.c.bf16 %v3063, %v3062
    %v3069 = vpack.c.bf16 %v3065, %v3064
    %v3070 = vld [vmem:[%s11] sm:$0xf]
    %v3071 = vld [vmem:[%s11 + $0x4] sm:$0xf]
    %v3072 = vld [vmem:[%s11 + $0x8] sm:$0xf]
    %v3073 = vld [vmem:[%s11 + $0xc] sm:$0xf]
    %v3074 = vld [vmem:[%s12] sm:$0x1]
    %v3076 = vlaneseq
    %v3077 = vshrl.u32 %v3076, 7
    %v3078 = vsub.s32 0, %v3077
    %v3079 = vrot.slane %v3074, %v3078
    %v3085 = vunpack.c.l.b16 %v3070
    %v3086 = vunpack.c.l.b16 %v3071
    %v3087 = vunpack.c.l.b16 %v3072
    %v3088 = vunpack.c.l.b16 %v3073
    %v3089 = vpack.c.b16 %v3086, %v3085
    %v3090 = vpack.c.b16 %v3088, %v3087
    %v3094 = vsel %vm2853, %v3066, 0
    %v3097 = vsel %vm2853, %v3067, 0
    %v3100 = vsel %vm2853, %v3068, 0
    %v3103 = vsel %vm2853, %v3069, 0
    %3105 = vmatprep.subr.bf16.mxu0 0
    %3106 = vmatpush1.bf16.msra.mxu0 %v3089
    %3107 = vmatprep.subr.bf16.mxu0 0
    %3108 = vmatpush1.bf16.msra.mxu0 %v3090
    %3109 = vmatprep.subr.bf16.mxu0 0
    %3110 = vmatpush1.bf16.msra.mxu0 0
    %3111 = vmatprep.subr.bf16.mxu0 0
    %3112 = vmatpush1.bf16.msra.mxu0 0
    %3113 = vmatprep.subr.bf16.mxu0 0
    %3114 = vmatpush1.bf16.msra.mxu0 0
    %3115 = vmatprep.subr.bf16.mxu0 0
    %3116 = vmatpush1.bf16.msra.mxu0 0
    %3117 = vmatprep.subr.bf16.mxu0 0
    %3118 = vmatpush1.bf16.msra.mxu0 0
    %3119 = vmatprep.subr.bf16.mxu0 0
    %3120 = vmatpush1.bf16.msra.mxu0 0
    %3121 = vmatprep.subr.bf16.mxu0 0
    %3122 = vmatpush1.bf16.msra.mxu0 0
    %3123 = vmatprep.subr.bf16.mxu0 0
    %3124 = vmatpush1.bf16.msra.mxu0 0
    %3125 = vmatprep.subr.bf16.mxu0 0
    %3126 = vmatpush1.bf16.msra.mxu0 0
    %3127 = vmatprep.subr.bf16.mxu0 0
    %3128 = vmatpush1.bf16.msra.mxu0 0
    %3129 = vmatprep.subr.bf16.mxu0 0
    %3130 = vmatpush1.bf16.msra.mxu0 0
    %3131 = vmatprep.subr.bf16.mxu0 0
    %3132 = vmatpush1.bf16.msra.mxu0 0
    %3133 = vmatprep.subr.bf16.mxu0 0
    %3134 = vmatpush1.bf16.msra.mxu0 0
    %3135 = vmatprep.subr.bf16.mxu0 0
    %3136 = vmatpush1.bf16.msra.mxu0 0
    %3137 = vmatprep.mubr.bf16.mxu0 0
    %3138 = vmatmul.mubr.bf16.gmra.mrb[0].mxu0 %v3094
    %v3139 = vpop.f32.mrb[0].mxu0
    %v3140 = vadd.f32 %v3079, %v3139
    %v3141 = vpop.f32.mrb[0].mxu0
    %v3142 = vpop.f32.mrb[0].mxu0
    %v3143 = vadd.f32 %v3079, %v3142
    %v3144 = vpop.f32.mrb[0].mxu0
    %3145 = vmatprep.mubr.bf16.mxu0 0
    %3146 = vmatmul.mubr.bf16.gmra.mrb[0].mxu0 %v3097
    %v3147 = vpop.f32.mrb[0].mxu0
    %v3148 = vadd.f32 %v3079, %v3147
    %v3149 = vpop.f32.mrb[0].mxu0
    %v3150 = vpop.f32.mrb[0].mxu0
    %v3151 = vadd.f32 %v3079, %v3150
    %v3152 = vpop.f32.mrb[0].mxu0
    %3153 = vmatprep.mubr.bf16.mxu0 0
    %3154 = vmatmul.mubr.bf16.gmra.mrb[0].mxu0 %v3100
    %v3155 = vpop.f32.mrb[0].mxu0
    %v3156 = vadd.f32 %v3079, %v3155
    %v3157 = vpop.f32.mrb[0].mxu0
    %v3158 = vpop.f32.mrb[0].mxu0
    %v3159 = vadd.f32 %v3079, %v3158
    %v3160 = vpop.f32.mrb[0].mxu0
    %3161 = vmatprep.mubr.bf16.mxu0 0
    %3162 = vmatmul.mubr.bf16.gmra.mrb[0].mxu0 %v3103
    %v3163 = vpop.f32.mrb[0].mxu0
    %v3164 = vadd.f32 %v3079, %v3163
    %v3165 = vpop.f32.mrb[0].mxu0
    %v3166 = vpop.f32.mrb[0].mxu0
    %v3167 = vadd.f32 %v3079, %v3166
    %v3168 = vpop.f32.mrb[0].mxu0
    %3169 = vdwg.mxu0
    %v3170 = vld [vmem:[%s13] sm:$0xf]
    %v3171 = vld [vmem:[%s13 + $0x4] sm:$0xf]
    %v3172 = vld [vmem:[%s13 + $0x8] sm:$0xf]
    %v3173 = vld [vmem:[%s13 + $0xc] sm:$0xf]
    %v3174 = vld [vmem:[%s14] sm:$0x1]
    %v3176 = vlaneseq
    %v3177 = vshrl.u32 %v3176, 7
    %v3178 = vsub.s32 0, %v3177
    %v3179 = vrot.slane %v3174, %v3178
    %v3185 = vunpack.c.l.b16 %v3170
    %v3186 = vunpack.c.l.b16 %v3171
    %v3187 = vunpack.c.l.b16 %v3172
    %v3188 = vunpack.c.l.b16 %v3173
    %v3189 = vpack.c.b16 %v3186, %v3185
    %v3190 = vpack.c.b16 %v3188, %v3187
    %3193 = vmatprep.subr.bf16.mxu0 0
    %3194 = vmatpush1.bf16.msra.mxu0 %v3189
    %3195 = vmatprep.subr.bf16.mxu0 0
    %3196 = vmatpush1.bf16.msra.mxu0 %v3190
    %3197 = vmatprep.subr.bf16.mxu0 0
    %3198 = vmatpush1.bf16.msra.mxu0 0
    %3199 = vmatprep.subr.bf16.mxu0 0
    %3200 = vmatpush1.bf16.msra.mxu0 0
    %3201 = vmatprep.subr.bf16.mxu0 0
    %3202 = vmatpush1.bf16.msra.mxu0 0
    %3203 = vmatprep.subr.bf16.mxu0 0
    %3204 = vmatpush1.bf16.msra.mxu0 0
    %3205 = vmatprep.subr.bf16.mxu0 0
    %3206 = vmatpush1.bf16.msra.mxu0 0
    %3207 = vmatprep.subr.bf16.mxu0 0
    %3208 = vmatpush1.bf16.msra.mxu0 0
    %3209 = vmatprep.subr.bf16.mxu0 0
    %3210 = vmatpush1.bf16.msra.mxu0 0
    %3211 = vmatprep.subr.bf16.mxu0 0
    %3212 = vmatpush1.bf16.msra.mxu0 0
    %3213 = vmatprep.subr.bf16.mxu0 0
    %3214 = vmatpush1.bf16.msra.mxu0 0
    %3215 = vmatprep.subr.bf16.mxu0 0
    %3216 = vmatpush1.bf16.msra.mxu0 0
    %3217 = vmatprep.subr.bf16.mxu0 0
    %3218 = vmatpush1.bf16.msra.mxu0 0
    %3219 = vmatprep.subr.bf16.mxu0 0
    %3220 = vmatpush1.bf16.msra.mxu0 0
    %3221 = vmatprep.subr.bf16.mxu0 0
    %3222 = vmatpush1.bf16.msra.mxu0 0
    %3223 = vmatprep.subr.bf16.mxu0 0
    %3224 = vmatpush1.bf16.msra.mxu0 0
    %3225 = vmatprep.mubr.bf16.mxu0 0
    %3226 = vmatmul.mubr.bf16.gmra.mrb[0].mxu0 %v3094
    %v3227 = vpop.f32.mrb[0].mxu0
    %v3228 = vadd.f32 %v3179, %v3227
    %v3229 = vpop.f32.mrb[0].mxu0
    %v3230 = vpop.f32.mrb[0].mxu0
    %v3231 = vadd.f32 %v3179, %v3230
    %v3232 = vpop.f32.mrb[0].mxu0
    %3233 = vmatprep.mubr.bf16.mxu0 0
    %3234 = vmatmul.mubr.bf16.gmra.mrb[0].mxu0 %v3097
    %v3235 = vpop.f32.mrb[0].mxu0
    %v3236 = vadd.f32 %v3179, %v3235
    %v3237 = vpop.f32.mrb[0].mxu0
    %v3238 = vpop.f32.mrb[0].mxu0
    %v3239 = vadd.f32 %v3179, %v3238
    %v3240 = vpop.f32.mrb[0].mxu0
    %3241 = vmatprep.mubr.bf16.mxu0 0
    %3242 = vmatmul.mubr.bf16.gmra.mrb[0].mxu0 %v3100
    %v3243 = vpop.f32.mrb[0].mxu0
    %v3244 = vadd.f32 %v3179, %v3243
    %v3245 = vpop.f32.mrb[0].mxu0
    %v3246 = vpop.f32.mrb[0].mxu0
    %v3247 = vadd.f32 %v3179, %v3246
    %v3248 = vpop.f32.mrb[0].mxu0
    %3249 = vmatprep.mubr.bf16.mxu0 0
    %3250 = vmatmul.mubr.bf16.gmra.mrb[0].mxu0 %v3103
    %v3251 = vpop.f32.mrb[0].mxu0
    %v3252 = vadd.f32 %v3179, %v3251
    %v3253 = vpop.f32.mrb[0].mxu0
    %v3254 = vpop.f32.mrb[0].mxu0
    %v3255 = vadd.f32 %v3179, %v3254
    %v3256 = vpop.f32.mrb[0].mxu0
    %3257 = vdwg.mxu0
    %v3258 = vmul.f32 %v3228, 0.5
    %v3259 = vmul.f32 %v3231, 0.5
    %v3260 = vmul.f32 %v3236, 0.5
    %v3261 = vmul.f32 %v3239, 0.5
    %v3262 = vmul.f32 %v3244, 0.5
    %v3263 = vmul.f32 %v3247, 0.5
    %v3264 = vmul.f32 %v3252, 0.5
    %v3265 = vmul.f32 %v3255, 0.5
    %v3266 = vmul.f32 %v3228, 0.70710677
    %v3267 = vmul.f32 %v3231, 0.70710677
    %v3268 = vmul.f32 %v3236, 0.70710677
    %v3269 = vmul.f32 %v3239, 0.70710677
    %v3270 = vmul.f32 %v3244, 0.70710677
    %v3271 = vmul.f32 %v3247, 0.70710677
    %v3272 = vmul.f32 %v3252, 0.70710677
    %v3273 = vmul.f32 %v3255, 0.70710677
    %v3274 = verf.f32.pop %v3266
    %v3275 = verf.f32.pop %v3267
    %v3276 = verf.f32.pop %v3268
    %v3277 = verf.f32.pop %v3269
    %v3278 = verf.f32.pop %v3270
    %v3279 = verf.f32.pop %v3271
    %v3280 = verf.f32.pop %v3272
    %v3281 = verf.f32.pop %v3273
    %v3282 = vadd.f32 %v3274, 1.0
    %v3283 = vadd.f32 %v3275, 1.0
    %v3284 = vadd.f32 %v3276, 1.0
    %v3285 = vadd.f32 %v3277, 1.0
    %v3286 = vadd.f32 %v3278, 1.0
    %v3287 = vadd.f32 %v3279, 1.0
    %v3288 = vadd.f32 %v3280, 1.0
    %v3289 = vadd.f32 %v3281, 1.0
    %v3290 = vmul.f32 %v3258, %v3282
    %v3291 = vmul.f32 %v3259, %v3283
    %v3292 = vmul.f32 %v3260, %v3284
    %v3293 = vmul.f32 %v3261, %v3285
    %v3294 = vmul.f32 %v3262, %v3286
    %v3295 = vmul.f32 %v3263, %v3287
    %v3296 = vmul.f32 %v3264, %v3288
    %v3297 = vmul.f32 %v3265, %v3289
    %v3298 = vmul.f32 %v3140, %v3290
    %v3299 = vmul.f32 %v3143, %v3291
    %v3300 = vmul.f32 %v3148, %v3292
    %v3301 = vmul.f32 %v3151, %v3293
    %v3302 = vmul.f32 %v3156, %v3294
    %v3303 = vmul.f32 %v3159, %v3295
    %v3304 = vmul.f32 %v3164, %v3296
    %v3305 = vmul.f32 %v3167, %v3297
    %v3306 = vpack.c.bf16 %v3299, %v3298
    %v3307 = vpack.c.bf16 %v3301, %v3300
    %v3308 = vpack.c.bf16 %v3303, %v3302
    %v3309 = vpack.c.bf16 %v3305, %v3304
    %v3310 = vld [vmem:[%s15] sm:$0xf]
    %v3311 = vld [vmem:[%s15 + $0x4] sm:$0xf]
    %v3312 = vld [vmem:[%s15 + $0x8] sm:$0xf]
    %v3313 = vld [vmem:[%s15 + $0xc] sm:$0xf]
    %v3314 = vld [vmem:[%s15 + $0x10] sm:$0xf]
    %v3315 = vld [vmem:[%s15 + $0x14] sm:$0xf]
    %v3316 = vld [vmem:[%s15 + $0x18] sm:$0xf]
    %v3317 = vld [vmem:[%s15 + $0x1c] sm:$0xf]
    %v3318 = vld [vmem:[%s15 + $0x20] sm:$0xf]
    %v3319 = vld [vmem:[%s15 + $0x24] sm:$0xf]
    %v3320 = vld [vmem:[%s15 + $0x28] sm:$0xf]
    %v3321 = vld [vmem:[%s15 + $0x2c] sm:$0xf]
    %v3322 = vld [vmem:[%s15 + $0x30] sm:$0xf]
    %v3323 = vld [vmem:[%s15 + $0x34] sm:$0xf]
    %v3324 = vld [vmem:[%s15 + $0x38] sm:$0xf]
    %v3325 = vld [vmem:[%s15 + $0x3c] sm:$0xf]
    %v3326 = vld [vmem:[%s16] sm:$0x1]
    %v3328 = vlaneseq
    %v3329 = vshrl.u32 %v3328, 7
    %v3330 = vsub.s32 0, %v3329
    %v3331 = vrot.slane %v3326, %v3330
    %v3349 = vunpack.c.l.b16 %v3310
    %v3350 = vunpack.c.l.b16 %v3311
    %v3351 = vunpack.c.l.b16 %v3312
    %v3352 = vunpack.c.l.b16 %v3313
    %v3353 = vunpack.c.l.b16 %v3314
    %v3354 = vunpack.c.l.b16 %v3315
    %v3355 = vunpack.c.l.b16 %v3316
    %v3356 = vunpack.c.l.b16 %v3317
    %v3357 = vunpack.c.l.b16 %v3318
    %v3358 = vunpack.c.l.b16 %v3319
    %v3359 = vunpack.c.l.b16 %v3320
    %v3360 = vunpack.c.l.b16 %v3321
    %v3361 = vunpack.c.l.b16 %v3322
    %v3362 = vunpack.c.l.b16 %v3323
    %v3363 = vunpack.c.l.b16 %v3324
    %v3364 = vunpack.c.l.b16 %v3325
    %v3365 = vpack.c.b16 %v3350, %v3349
    %v3366 = vpack.c.b16 %v3352, %v3351
    %v3367 = vpack.c.b16 %v3354, %v3353
    %v3368 = vpack.c.b16 %v3356, %v3355
    %v3369 = vpack.c.b16 %v3358, %v3357
    %v3370 = vpack.c.b16 %v3360, %v3359
    %v3371 = vpack.c.b16 %v3362, %v3361
    %v3372 = vpack.c.b16 %v3364, %v3363
    %3381 = vmatprep.subr.bf16.mxu0 0
    %3382 = vmatpush1.bf16.msra.mxu0 %v3365
    %3383 = vmatprep.subr.bf16.mxu0 0
    %3384 = vmatpush1.bf16.msra.mxu0 %v3366
    %3385 = vmatprep.subr.bf16.mxu0 0
    %3386 = vmatpush1.bf16.msra.mxu0 %v3367
    %3387 = vmatprep.subr.bf16.mxu0 0
    %3388 = vmatpush1.bf16.msra.mxu0 %v3368
    %3389 = vmatprep.subr.bf16.mxu0 0
    %3390 = vmatpush1.bf16.msra.mxu0 %v3369
    %3391 = vmatprep.subr.bf16.mxu0 0
    %3392 = vmatpush1.bf16.msra.mxu0 %v3370
    %3393 = vmatprep.subr.bf16.mxu0 0
    %3394 = vmatpush1.bf16.msra.mxu0 %v3371
    %3395 = vmatprep.subr.bf16.mxu0 0
    %3396 = vmatpush1.bf16.msra.mxu0 %v3372
    %3397 = vmatprep.subr.bf16.mxu0 0
    %3398 = vmatpush1.bf16.msra.mxu0 0
    %3399 = vmatprep.subr.bf16.mxu0 0
    %3400 = vmatpush1.bf16.msra.mxu0 0
    %3401 = vmatprep.subr.bf16.mxu0 0
    %3402 = vmatpush1.bf16.msra.mxu0 0
    %3403 = vmatprep.subr.bf16.mxu0 0
    %3404 = vmatpush1.bf16.msra.mxu0 0
    %3405 = vmatprep.subr.bf16.mxu0 0
    %3406 = vmatpush1.bf16.msra.mxu0 0
    %3407 = vmatprep.subr.bf16.mxu0 0
    %3408 = vmatpush1.bf16.msra.mxu0 0
    %3409 = vmatprep.subr.bf16.mxu0 0
    %3410 = vmatpush1.bf16.msra.mxu0 0
    %3411 = vmatprep.subr.bf16.mxu0 0
    %3412 = vmatpush1.bf16.msra.mxu0 0
    %3413 = vmatprep.mubr.bf16.mxu0 0
    %3414 = vmatmul.mubr.bf16.gmra.mrb[0].mxu0 %v3306
    %v3415 = vpop.f32.mrb[0].mxu0
    %v3416 = vadd.f32 %v3331, %v3415
    %v3417 = vpop.f32.mrb[0].mxu0
    %v3418 = vpop.f32.mrb[0].mxu0
    %v3419 = vadd.f32 %v3331, %v3418
    %v3420 = vpop.f32.mrb[0].mxu0
    %3421 = vmatprep.mubr.bf16.mxu0 0
    %3422 = vmatmul.mubr.bf16.gmra.mrb[0].mxu0 %v3307
    %v3423 = vpop.f32.mrb[0].mxu0
    %v3424 = vadd.f32 %v3331, %v3423
    %v3425 = vpop.f32.mrb[0].mxu0
    %v3426 = vpop.f32.mrb[0].mxu0
    %v3427 = vadd.f32 %v3331, %v3426
    %v3428 = vpop.f32.mrb[0].mxu0
    %3429 = vmatprep.mubr.bf16.mxu0 0
    %3430 = vmatmul.mubr.bf16.gmra.mrb[0].mxu0 %v3308
    %v3431 = vpop.f32.mrb[0].mxu0
    %v3432 = vadd.f32 %v3331, %v3431
    %v3433 = vpop.f32.mrb[0].mxu0
    %v3434 = vpop.f32.mrb[0].mxu0
    %v3435 = vadd.f32 %v3331, %v3434
    %v3436 = vpop.f32.mrb[0].mxu0
    %3437 = vmatprep.mubr.bf16.mxu0 0
    %3438 = vmatmul.mubr.bf16.gmra.mrb[0].mxu0 %v3309
    %v3439 = vpop.f32.mrb[0].mxu0
    %v3440 = vadd.f32 %v3331, %v3439
    %v3441 = vpop.f32.mrb[0].mxu0
    %v3442 = vpop.f32.mrb[0].mxu0
    %v3443 = vadd.f32 %v3331, %v3442
    %v3444 = vpop.f32.mrb[0].mxu0
    %3445 = vdwg.mxu0
    %v3446 = vadd.f32 %v3416, %v2901
    %v3447 = vadd.f32 %v3419, %v2904
    %v3448 = vadd.f32 %v3424, %v2909
    %v3449 = vadd.f32 %v3427, %v2912
    %v3450 = vadd.f32 %v3432, %v2917
    %v3451 = vadd.f32 %v3435, %v2920
    %v3452 = vadd.f32 %v3440, %v2925
    %v3453 = vadd.f32 %v3443, %v2928
    %3454 = vst.msk [vmem:[#allocation5] sm:$0xff] %vm2853, %v3446
    %3455 = vst.msk [vmem:[#allocation5 + $0x8] sm:$0xff] %vm2853, %v3447
    %3456 = vst.msk [vmem:[#allocation5 + $0x10] sm:$0xff] %vm2853, %v3448
    %3457 = vst.msk [vmem:[#allocation5 + $0x18] sm:$0xff] %vm2853, %v3449
    %3458 = vst.msk [vmem:[#allocation5 + $0x20] sm:$0xff] %vm2853, %v3450
    %3459 = vst.msk [vmem:[#allocation5 + $0x28] sm:$0xff] %vm2853, %v3451
    %3460 = vst.msk [vmem:[#allocation5 + $0x30] sm:$0xff] %vm2853, %v3452
    %3461 = vst.msk [vmem:[#allocation5 + $0x38] sm:$0xff] %vm2853, %v3453
    // Predicated region
    $region74: #{tpu_custom_call.1} parent=1 // pred_check
      _
    $region75: #{tpu_custom_call.1} parent=1 // pred_check_branch
      %3463 = sbr.rel (0) target = $region77
    $region76: #{tpu_custom_call.1} parent=1 // pred_region
      %s3465 = ssub.s32 1024, 1024
      %3466 = vsyncadd [#allocation4], %s3465
      %s3467 = sshll.u32 [#allocation5], 4
      %s3468 = int_to_ptr.vmem [resolvable:$true] %s3467
      %3473 = dma.vmem_to_hbm [thread:$0]  %s3468, 1024, %s17, [#allocation4], 128, 128, 8
    $region77: #{tpu_custom_call.1} parent=1 // pred_fallthru
      _
    // Predicated region
    $region78: #{tpu_custom_call.1} parent=1 // pred_check
      _
    $region79: #{tpu_custom_call.1} parent=1 // pred_check_branch
      %3475 = sbr.rel (0) target = $region81
    $region80: #{tpu_custom_call.1} parent=1 // pred_region
      %3476 = dma.done [#allocation4], 1024
    $region81: #{tpu_custom_call.1} parent=1 // pred_fallthru
      _
    %3477 = vsyncpa [#allocation3], 1
    %3478 = vsyncpa [#allocation4], 1

</llo_original>
